<compile_context>
chip_gen: v6e
topology: v6e:2x2x1
jax: 0.10.0
libtpu: 0.0.40
codegen_flags: <defaults>
</compile_context>

<pallas_src>
import math
from functools import partial

import jax
import jax.numpy as jnp
from jax.experimental import pallas as pl
from jax.experimental.pallas import tpu as pltpu

# ----- hyperparameters (mirror TransformerModel(input_dim, output_dim, num_heads, num_layers)) -----
INPUT_DIM = 32      # d_model
OUTPUT_DIM = 8
NUM_HEADS = 4
NUM_LAYERS = 2
DIM_FF = 2048       # nn.TransformerEncoderLayer default dim_feedforward
EPS = 1e-5          # LayerNorm eps (PyTorch default)

BATCH = 2
SEQ = 8


def _layer_norm(y, gamma, beta):
    mu = jnp.mean(y, axis=-1, keepdims=True)
    var = jnp.mean((y - mu) ** 2, axis=-1, keepdims=True)
    return (y - mu) * jax.lax.rsqrt(var + EPS) * gamma + beta


# ------------------------------ kernel (one encoder layer per grid step) ------------------------------

def encoder_layer_kernel(x_ref,
                         wq_ref, wk_ref, wv_ref, bq_ref, bk_ref, bv_ref,
                         wo_ref, bo_ref,
                         g1_ref, be1_ref, g2_ref, be2_ref,
                         w1_ref, b1_ref, w2_ref, b2_ref,
                         wl_ref, bl_ref,
                         o_ref,
                         act_ref,
                         *, seq_len, batch, num_heads):
    layer = pl.program_id(0)
    D = act_ref.shape[-1]
    hd = D // num_heads
    scale = 1.0 / math.sqrt(hd)

    # Layer 0: load the input activation into the persistent VMEM carry.
    @pl.when(layer == 0)
    def _():
        act_ref[...] = x_ref[...]

    x = act_ref[...]                                   # (B*S, D) f32, batch-major rows
    xb = x.astype(jnp.bfloat16)

    # --- self-attention: Q/K/V projections (bf16 MXU, f32 accumulate) ---
    def proj(w_ref, b_ref):
        z = jnp.dot(xb, w_ref[0], preferred_element_type=jnp.float32) + b_ref[0]
        return z.reshape(batch, seq_len, D).astype(jnp.bfloat16)   # major-dim split only

    q = proj(wq_ref, bq_ref)
    k = proj(wk_ref, bk_ref)
    v = proj(wv_ref, bv_ref)

    # Heads via lane masks (no lane slices / concat -> no XLU shuffle work).
    lane = jax.lax.broadcasted_iota(jnp.int32, (1, 1, D), 2)
    ctx = None
    for h in range(num_heads):                         # static unroll (H=4)
        in_head = (lane >= h * hd) & (lane < (h + 1) * hd)
        mask = jnp.where(in_head, 1.0, 0.0).astype(jnp.bfloat16)   # (1,1,D) 0/1
        # masked K zeroes cross-head contributions; contraction is over full D
        s = jnp.einsum('bqd,bkd->bqk', q, k * mask,
                       preferred_element_type=jnp.float32) * scale  # (B,S,S)
        s = s - jnp.max(s, axis=-1, keepdims=True)
        p = jnp.exp(s)
        p = (p * pl.reciprocal(jnp.sum(p, axis=-1, keepdims=True), approx=True)
             ).astype(jnp.bfloat16)
        ctx_h = jnp.einsum('bqk,bkd->bqd', p, v * mask,
                           preferred_element_type=jnp.float32)      # head-h cols, 0 elsewhere
        ctx = ctx_h if ctx is None else ctx + ctx_h

    attn = (jnp.dot(ctx.reshape(batch * seq_len, D).astype(jnp.bfloat16), wo_ref[0],
                    preferred_element_type=jnp.float32) + bo_ref[0])

    # --- residual + LayerNorm 1 (post-norm) ---
    y = _layer_norm(x + attn, g1_ref[0], be1_ref[0])

    # --- feed-forward: linear1 -> ReLU (f32) -> bf16 -> linear2 ---
    h1 = jnp.maximum(
        jnp.dot(y.astype(jnp.bfloat16), w1_ref[0],
                preferred_element_type=jnp.float32) + b1_ref[0], 0.0
    ).astype(jnp.bfloat16)                                          # (B*S, FF) bf16
    h2 = jnp.dot(h1, w2_ref[0], preferred_element_type=jnp.float32) + b2_ref[0]

    # --- residual + LayerNorm 2; write back the carry ---
    out = _layer_norm(y + h2, g2_ref[0], be2_ref[0])
    act_ref[...] = out

    # --- last layer: mean over seq (per batch) + final Linear ---
    @pl.when(layer == pl.num_programs(0) - 1)
    def _():
        pooled = jnp.mean(out.reshape(batch, seq_len, D), axis=1)   # (B, D)
        o_ref[...] = (jnp.dot(pooled.astype(jnp.bfloat16), wl_ref[...],
                              preferred_element_type=jnp.float32) + bl_ref[...])


# ------------------------------ wrapper ------------------------------

def transformer_forward(x, params):
    """x: (batch, seq, d_model) -> (batch, output_dim). Matches TransformerModel.forward (eval)."""
    B, S, D = x.shape
    L = params["w_q"].shape[0]
    ff = params["b1"].shape[-1]
    out_dim = params["b_lin"].shape[-1]
    xf = x.reshape(B * S, D).astype(jnp.float32)       # batch-major (b*S + s) flat layout

    layer_blk = lambda shp: pl.BlockSpec((1,) + shp, lambda l: (l, 0, 0))
    fixed_blk = lambda shp: pl.BlockSpec(shp, lambda l, _n=len(shp): (0,) * _n)

    kernel = partial(encoder_layer_kernel, seq_len=S, batch=B, num_heads=NUM_HEADS)

    grid_spec = pltpu.PrefetchScalarGridSpec(
        num_scalar_prefetch=0,
        grid=(L,),
        in_specs=[
            fixed_blk((B * S, D)),                                    # x
            layer_blk((D, D)), layer_blk((D, D)), layer_blk((D, D)),  # wq wk wv
            layer_blk((1, D)), layer_blk((1, D)), layer_blk((1, D)),  # bq bk bv
            layer_blk((D, D)), layer_blk((1, D)),                     # w_out b_out
            layer_blk((1, D)), layer_blk((1, D)),                     # g1 be1
            layer_blk((1, D)), layer_blk((1, D)),                     # g2 be2
            layer_blk((D, ff)), layer_blk((1, ff)),                   # w1 b1
            layer_blk((ff, D)), layer_blk((1, D)),                    # w2 b2
            fixed_blk((D, out_dim)), fixed_blk((1, out_dim)),         # w_lin b_lin
        ],
        out_specs=fixed_blk((B, out_dim)),
        scratch_shapes=[pltpu.VMEM((B * S, D), jnp.float32)],         # activation carry
    )

    return pl.pallas_call(
        kernel,
        out_shape=jax.ShapeDtypeStruct((B, out_dim), jnp.float32),
        grid_spec=grid_spec,
        compiler_params=pltpu.CompilerParams(dimension_semantics=("arbitrary",)),
        cost_estimate=pl.CostEstimate(flops=9_000_000, transcendentals=2_048,
                                      bytes_accessed=600_000),
    )(xf,
      params["w_q"], params["w_k"], params["w_v"],
      params["b_q"], params["b_k"], params["b_v"],
      params["w_out"], params["b_out"],
      params["g1"], params["be1"], params["g2"], params["be2"],
      params["w1"], params["b1"], params["w2"], params["b2"],
      params["w_lin"], params["b_lin"])


# ------------------------------ deterministic parameter init ------------------------------

def init_params(key, d_model, d_ff, out_dim, num_layers):
    def dense(k, shape, dtype=jnp.float32, scale=0.05):
        return (scale * jax.random.normal(k, shape, dtype=jnp.float32)).astype(dtype)

    names = ["w_q", "w_k", "w_v", "b_q", "b_k", "b_v", "w_out", "b_out",
             "g1", "be1", "g2", "be2", "w1", "b1", "w2", "b2"]
    stacks = {n: [] for n in names}
    for l in range(num_layers):
        ks = jax.random.split(jax.random.fold_in(key, l), 12)
        # pre-transposed weights so the kernel does plain x @ W; matmul weights in bf16
        stacks["w_q"].append(dense(ks[0], (d_model, d_model), jnp.bfloat16))
        stacks["w_k"].append(dense(ks[1], (d_model, d_model), jnp.bfloat16))
        stacks["w_v"].append(dense(ks[2], (d_model, d_model), jnp.bfloat16))
        stacks["b_q"].append(dense(ks[3], (1, d_model)))
        stacks["b_k"].append(dense(ks[4], (1, d_model)))
        stacks["b_v"].append(dense(ks[5], (1, d_model)))
        stacks["w_out"].append(dense(ks[6], (d_model, d_model), jnp.bfloat16))
        stacks["b_out"].append(dense(ks[7], (1, d_model)))
        stacks["w1"].append(dense(ks[8], (d_model, d_ff), jnp.bfloat16))
        stacks["b1"].append(dense(ks[9], (1, d_ff)))
        stacks["w2"].append(dense(ks[10], (d_ff, d_model), jnp.bfloat16))
        stacks["b2"].append(dense(ks[11], (1, d_model)))
        stacks["g1"].append(jnp.ones((1, d_model), jnp.float32))
        stacks["be1"].append(jnp.zeros((1, d_model), jnp.float32))
        stacks["g2"].append(jnp.ones((1, d_model), jnp.float32))
        stacks["be2"].append(jnp.zeros((1, d_model), jnp.float32))

    params = {n: jnp.stack(v, axis=0) for n, v in stacks.items()}   # leading num_layers dim
    kw, kb = jax.random.split(jax.random.fold_in(key, 1000))
    params["w_lin"] = dense(kw, (d_model, out_dim), jnp.bfloat16)
    params["b_lin"] = dense(kb, (1, out_dim))
    return params


# ------------------------------ main ------------------------------

if __name__ == "__main__":
    key = jax.random.PRNGKey(0)
    kx, kp = jax.random.split(key)

    x = jax.random.normal(kx, (BATCH, SEQ, INPUT_DIM), dtype=jnp.float32)
    params = init_params(kp, INPUT_DIM, DIM_FF, OUTPUT_DIM, NUM_LAYERS)

    out = jax.jit(transformer_forward)(x, params)
    out = jax.block_until_ready(out)

    assert out.shape == (BATCH, OUTPUT_DIM), out.shape
    assert bool(jnp.all(jnp.isfinite(out)))
    print("KERNEL_OK")
</pallas_src>

<mosaic_0001>
module attributes {stable_mosaic.version = 11 : i64} {
  func.func @encoder_layer_kernel(%arg0: i32, %arg1: memref<16x32xf32, #tpu.memory_space<vmem>>, %arg2: memref<1x32x32xbf16, #tpu.memory_space<vmem>>, %arg3: memref<1x32x32xbf16, #tpu.memory_space<vmem>>, %arg4: memref<1x32x32xbf16, #tpu.memory_space<vmem>>, %arg5: memref<1x1x32xf32, #tpu.memory_space<vmem>>, %arg6: memref<1x1x32xf32, #tpu.memory_space<vmem>>, %arg7: memref<1x1x32xf32, #tpu.memory_space<vmem>>, %arg8: memref<1x32x32xbf16, #tpu.memory_space<vmem>>, %arg9: memref<1x1x32xf32, #tpu.memory_space<vmem>>, %arg10: memref<1x1x32xf32, #tpu.memory_space<vmem>>, %arg11: memref<1x1x32xf32, #tpu.memory_space<vmem>>, %arg12: memref<1x1x32xf32, #tpu.memory_space<vmem>>, %arg13: memref<1x1x32xf32, #tpu.memory_space<vmem>>, %arg14: memref<1x32x2048xbf16, #tpu.memory_space<vmem>>, %arg15: memref<1x1x2048xf32, #tpu.memory_space<vmem>>, %arg16: memref<1x2048x32xbf16, #tpu.memory_space<vmem>>, %arg17: memref<1x1x32xf32, #tpu.memory_space<vmem>>, %arg18: memref<32x8xbf16, #tpu.memory_space<vmem>>, %arg19: memref<1x8xf32, #tpu.memory_space<vmem>>, %arg20: memref<2x8xf32, #tpu.memory_space<vmem>>, %arg21: memref<16x32xf32, #tpu.memory_space<vmem>>) attributes {dimension_semantics = [#tpu.dimension_semantics<arbitrary>], iteration_bounds = array<i64: 2>, scalar_prefetch = 0 : i64, scratch_operands = 1 : i64, tpu.core_type = #tpu.core_type<tc>, window_params = [{pipeline_mode = #tpu.pipeline_mode<synchronous>, transform_indices = @transform_0, window_bounds = array<i64: 16, 32>}, {transform_indices = @transform_1, window_bounds = array<i64: 1, 32, 32>}, {transform_indices = @transform_2, window_bounds = array<i64: 1, 32, 32>}, {transform_indices = @transform_3, window_bounds = array<i64: 1, 32, 32>}, {transform_indices = @transform_4, window_bounds = array<i64: 1, 1, 32>}, {transform_indices = @transform_5, window_bounds = array<i64: 1, 1, 32>}, {transform_indices = @transform_6, window_bounds = array<i64: 1, 1, 32>}, {transform_indices = @transform_7, window_bounds = array<i64: 1, 32, 32>}, {transform_indices = @transform_8, window_bounds = array<i64: 1, 1, 32>}, {transform_indices = @transform_9, window_bounds = array<i64: 1, 1, 32>}, {transform_indices = @transform_10, window_bounds = array<i64: 1, 1, 32>}, {transform_indices = @transform_11, window_bounds = array<i64: 1, 1, 32>}, {transform_indices = @transform_12, window_bounds = array<i64: 1, 1, 32>}, {transform_indices = @transform_13, window_bounds = array<i64: 1, 32, 2048>}, {transform_indices = @transform_14, window_bounds = array<i64: 1, 1, 2048>}, {transform_indices = @transform_15, window_bounds = array<i64: 1, 2048, 32>}, {transform_indices = @transform_16, window_bounds = array<i64: 1, 1, 32>}, {pipeline_mode = #tpu.pipeline_mode<synchronous>, transform_indices = @transform_17, window_bounds = array<i64: 32, 8>}, {pipeline_mode = #tpu.pipeline_mode<synchronous>, transform_indices = @transform_18, window_bounds = array<i64: 1, 8>}, {pipeline_mode = #tpu.pipeline_mode<synchronous>, transform_indices = @transform_19, window_bounds = array<i64: 2, 8>}]} {
    %c0_i32 = arith.constant 0 : i32
    %0 = arith.cmpi eq, %arg0, %c0_i32 : i32
    %1 = arith.extui %0 : i1 to i32
    %c0_i32_0 = arith.constant 0 : i32
    %2 = arith.cmpi ne, %1, %c0_i32_0 : i32
    scf.if %2 {
      %c0_101 = arith.constant 0 : index
      %c0_102 = arith.constant 0 : index
      %233 = vector.load %arg1[%c0_101, %c0_102] : memref<16x32xf32, #tpu.memory_space<vmem>>, vector<16x32xf32>
      %c0_103 = arith.constant 0 : index
      %c0_104 = arith.constant 0 : index
      %234 = vector.load %arg21[%c0_103, %c0_104] : memref<16x32xf32, #tpu.memory_space<vmem>>, vector<16x32xf32>
      tpu.vector_store %arg21[%c0_103, %c0_104], %233 {strides = array<i32>} : memref<16x32xf32, #tpu.memory_space<vmem>>, vector<16x32xf32>,
    } else {
    }
    %c0 = arith.constant 0 : index
    %c0_1 = arith.constant 0 : index
    %3 = vector.load %arg21[%c0, %c0_1] : memref<16x32xf32, #tpu.memory_space<vmem>>, vector<16x32xf32>
    %4 = arith.truncf %3 : vector<16x32xf32> to vector<16x32xbf16>
    %c0_2 = arith.constant 0 : index
    %c0_3 = arith.constant 0 : index
    %c0_4 = arith.constant 0 : index
    %5 = vector.load %arg2[%c0_2, %c0_3, %c0_4] : memref<1x32x32xbf16, #tpu.memory_space<vmem>>, vector<1x32x32xbf16>
    %6 = vector.shape_cast %5 : vector<1x32x32xbf16> to vector<32x32xbf16>
    %cst = arith.constant dense<0.000000e+00> : vector<16x32xf32>
    %7 = tpu.matmul %4, %6, %cst {dimension_numbers = #tpu.dot_dimension_numbers<[1], [0], [0], [1], [0, 0, 1, 1], [], []>} : vector<16x32xbf16>, vector<32x32xbf16>, vector<16x32xf32> -> vector<16x32xf32>
    %c0_5 = arith.constant 0 : index
    %c0_6 = arith.constant 0 : index
    %c0_7 = arith.constant 0 : index
    %8 = vector.load %arg5[%c0_5, %c0_6, %c0_7] : memref<1x1x32xf32, #tpu.memory_space<vmem>>, vector<1x1x32xf32>
    %9 = vector.shape_cast %8 : vector<1x1x32xf32> to vector<1x32xf32>
    %10 = vector.broadcast %9 : vector<1x32xf32> to vector<16x32xf32>
    %11 = arith.addf %7, %10 : vector<16x32xf32>
    %12 = vector.shape_cast %11 : vector<16x32xf32> to vector<2x8x32xf32>
    %13 = arith.truncf %12 : vector<2x8x32xf32> to vector<2x8x32xbf16>
    %c0_8 = arith.constant 0 : index
    %c0_9 = arith.constant 0 : index
    %c0_10 = arith.constant 0 : index
    %14 = vector.load %arg3[%c0_8, %c0_9, %c0_10] : memref<1x32x32xbf16, #tpu.memory_space<vmem>>, vector<1x32x32xbf16>
    %15 = vector.shape_cast %14 : vector<1x32x32xbf16> to vector<32x32xbf16>
    %cst_11 = arith.constant dense<0.000000e+00> : vector<16x32xf32>
    %16 = tpu.matmul %4, %15, %cst_11 {dimension_numbers = #tpu.dot_dimension_numbers<[1], [0], [0], [1], [0, 0, 1, 1], [], []>} : vector<16x32xbf16>, vector<32x32xbf16>, vector<16x32xf32> -> vector<16x32xf32>
    %c0_12 = arith.constant 0 : index
    %c0_13 = arith.constant 0 : index
    %c0_14 = arith.constant 0 : index
    %17 = vector.load %arg6[%c0_12, %c0_13, %c0_14] : memref<1x1x32xf32, #tpu.memory_space<vmem>>, vector<1x1x32xf32>
    %18 = vector.shape_cast %17 : vector<1x1x32xf32> to vector<1x32xf32>
    %19 = vector.broadcast %18 : vector<1x32xf32> to vector<16x32xf32>
    %20 = arith.addf %16, %19 : vector<16x32xf32>
    %21 = vector.shape_cast %20 : vector<16x32xf32> to vector<2x8x32xf32>
    %22 = arith.truncf %21 : vector<2x8x32xf32> to vector<2x8x32xbf16>
    %c0_15 = arith.constant 0 : index
    %c0_16 = arith.constant 0 : index
    %c0_17 = arith.constant 0 : index
    %23 = vector.load %arg4[%c0_15, %c0_16, %c0_17] : memref<1x32x32xbf16, #tpu.memory_space<vmem>>, vector<1x32x32xbf16>
    %24 = vector.shape_cast %23 : vector<1x32x32xbf16> to vector<32x32xbf16>
    %cst_18 = arith.constant dense<0.000000e+00> : vector<16x32xf32>
    %25 = tpu.matmul %4, %24, %cst_18 {dimension_numbers = #tpu.dot_dimension_numbers<[1], [0], [0], [1], [0, 0, 1, 1], [], []>} : vector<16x32xbf16>, vector<32x32xbf16>, vector<16x32xf32> -> vector<16x32xf32>
    %c0_19 = arith.constant 0 : index
    %c0_20 = arith.constant 0 : index
    %c0_21 = arith.constant 0 : index
    %26 = vector.load %arg7[%c0_19, %c0_20, %c0_21] : memref<1x1x32xf32, #tpu.memory_space<vmem>>, vector<1x1x32xf32>
    %27 = vector.shape_cast %26 : vector<1x1x32xf32> to vector<1x32xf32>
    %28 = vector.broadcast %27 : vector<1x32xf32> to vector<16x32xf32>
    %29 = arith.addf %25, %28 : vector<16x32xf32>
    %30 = vector.shape_cast %29 : vector<16x32xf32> to vector<2x8x32xf32>
    %31 = arith.truncf %30 : vector<2x8x32xf32> to vector<2x8x32xbf16>
    %32 = tpu.iota {dimensions = array<i32: 2>} : vector<1x1x32xi32>
    %c0_i32_22 = arith.constant 0 : i32
    %33 = vector.broadcast %c0_i32_22 : i32 to vector<1x1x32xi32>
    %34 = arith.cmpi sge, %32, %33 : vector<1x1x32xi32>
    %c8_i32 = arith.constant 8 : i32
    %35 = vector.broadcast %c8_i32 : i32 to vector<1x1x32xi32>
    %36 = arith.cmpi slt, %32, %35 : vector<1x1x32xi32>
    %37 = arith.andi %34, %36 : vector<1x1x32xi1>
    %cst_23 = arith.constant 1.000000e+00 : f32
    %cst_24 = arith.constant 0.000000e+00 : f32
    %38 = vector.broadcast %cst_23 : f32 to vector<1x1x32xf32>
    %39 = vector.broadcast %cst_24 : f32 to vector<1x1x32xf32>
    %40 = arith.select %37, %38, %39 : vector<1x1x32xi1>, vector<1x1x32xf32>
    %41 = arith.truncf %40 : vector<1x1x32xf32> to vector<1x1x32xbf16>
    %42 = vector.broadcast %41 : vector<1x1x32xbf16> to vector<2x8x32xbf16>
    %43 = arith.mulf %22, %42 : vector<2x8x32xbf16>
    "tpu.trace_start"() <{level = 10 : i32, message = "bqd,bkd->bqk"}> : () -> ()
    %cst_25 = arith.constant dense<0.000000e+00> : vector<2x8x8xf32>
    %44 = tpu.matmul %13, %43, %cst_25 {dimension_numbers = #tpu.dot_dimension_numbers<[2], [2], [1], [1], [0, 0, 0, 1, 1, 1], [0], [0]>} : vector<2x8x32xbf16>, vector<2x8x32xbf16>, vector<2x8x8xf32> -> vector<2x8x8xf32>
    "tpu.trace_stop"() : () -> ()
    %cst_26 = arith.constant 0.353553385 : f32
    %45 = vector.broadcast %cst_26 : f32 to vector<2x8x8xf32>
    %46 = arith.mulf %44, %45 : vector<2x8x8xf32>
    %cst_27 = arith.constant dense<0xFF800000> : vector<2x8xf32>
    %47 = vector.multi_reduction <maximumf>, %46, %cst_27 [2] : vector<2x8x8xf32> to vector<2x8xf32>
    %48 = vector.shape_cast %47 : vector<2x8xf32> to vector<2x8x1xf32>
    %49 = vector.broadcast %48 : vector<2x8x1xf32> to vector<2x8x8xf32>
    %50 = arith.subf %46, %49 : vector<2x8x8xf32>
    %51 = math.exp %50 : vector<2x8x8xf32>
    %cst_28 = arith.constant dense<0.000000e+00> : vector<2x8xf32>
    %52 = vector.multi_reduction <add>, %51, %cst_28 [2] : vector<2x8x8xf32> to vector<2x8xf32>
    %53 = vector.shape_cast %52 : vector<2x8xf32> to vector<2x8x1xf32>
    %54 = tpu.reciprocal %53 {approx = true} : vector<2x8x1xf32> -> vector<2x8x1xf32>
    %55 = vector.broadcast %54 : vector<2x8x1xf32> to vector<2x8x8xf32>
    %56 = arith.mulf %51, %55 : vector<2x8x8xf32>
    %57 = arith.truncf %56 : vector<2x8x8xf32> to vector<2x8x8xbf16>
    %58 = vector.broadcast %41 : vector<1x1x32xbf16> to vector<2x8x32xbf16>
    %59 = arith.mulf %31, %58 : vector<2x8x32xbf16>
    "tpu.trace_start"() <{level = 10 : i32, message = "bqk,bkd->bqd"}> : () -> ()
    %cst_29 = arith.constant dense<0.000000e+00> : vector<2x8x32xf32>
    %60 = tpu.matmul %57, %59, %cst_29 {dimension_numbers = #tpu.dot_dimension_numbers<[2], [1], [1], [2], [0, 0, 0, 1, 1, 2], [0], [0]>} : vector<2x8x8xbf16>, vector<2x8x32xbf16>, vector<2x8x32xf32> -> vector<2x8x32xf32>
    %c8_i32_30 = arith.constant 8 : i32
    "tpu.trace_stop"() : () -> ()
    %61 = vector.broadcast %c8_i32_30 : i32 to vector<1x1x32xi32>
    %62 = arith.cmpi sge, %32, %61 : vector<1x1x32xi32>
    %c16_i32 = arith.constant 16 : i32
    %63 = vector.broadcast %c16_i32 : i32 to vector<1x1x32xi32>
    %64 = arith.cmpi slt, %32, %63 : vector<1x1x32xi32>
    %65 = arith.andi %62, %64 : vector<1x1x32xi1>
    %cst_31 = arith.constant 1.000000e+00 : f32
    %cst_32 = arith.constant 0.000000e+00 : f32
    %66 = vector.broadcast %cst_31 : f32 to vector<1x1x32xf32>
    %67 = vector.broadcast %cst_32 : f32 to vector<1x1x32xf32>
    %68 = arith.select %65, %66, %67 : vector<1x1x32xi1>, vector<1x1x32xf32>
    %69 = arith.truncf %68 : vector<1x1x32xf32> to vector<1x1x32xbf16>
    %70 = vector.broadcast %69 : vector<1x1x32xbf16> to vector<2x8x32xbf16>
    %71 = arith.mulf %22, %70 : vector<2x8x32xbf16>
    "tpu.trace_start"() <{level = 10 : i32, message = "bqd,bkd->bqk"}> : () -> ()
    %cst_33 = arith.constant dense<0.000000e+00> : vector<2x8x8xf32>
    %72 = tpu.matmul %13, %71, %cst_33 {dimension_numbers = #tpu.dot_dimension_numbers<[2], [2], [1], [1], [0, 0, 0, 1, 1, 1], [0], [0]>} : vector<2x8x32xbf16>, vector<2x8x32xbf16>, vector<2x8x8xf32> -> vector<2x8x8xf32>
    "tpu.trace_stop"() : () -> ()
    %cst_34 = arith.constant 0.353553385 : f32
    %73 = vector.broadcast %cst_34 : f32 to vector<2x8x8xf32>
    %74 = arith.mulf %72, %73 : vector<2x8x8xf32>
    %cst_35 = arith.constant dense<0xFF800000> : vector<2x8xf32>
    %75 = vector.multi_reduction <maximumf>, %74, %cst_35 [2] : vector<2x8x8xf32> to vector<2x8xf32>
    %76 = vector.shape_cast %75 : vector<2x8xf32> to vector<2x8x1xf32>
    %77 = vector.broadcast %76 : vector<2x8x1xf32> to vector<2x8x8xf32>
    %78 = arith.subf %74, %77 : vector<2x8x8xf32>
    %79 = math.exp %78 : vector<2x8x8xf32>
    %cst_36 = arith.constant dense<0.000000e+00> : vector<2x8xf32>
    %80 = vector.multi_reduction <add>, %79, %cst_36 [2] : vector<2x8x8xf32> to vector<2x8xf32>
    %81 = vector.shape_cast %80 : vector<2x8xf32> to vector<2x8x1xf32>
    %82 = tpu.reciprocal %81 {approx = true} : vector<2x8x1xf32> -> vector<2x8x1xf32>
    %83 = vector.broadcast %82 : vector<2x8x1xf32> to vector<2x8x8xf32>
    %84 = arith.mulf %79, %83 : vector<2x8x8xf32>
    %85 = arith.truncf %84 : vector<2x8x8xf32> to vector<2x8x8xbf16>
    %86 = vector.broadcast %69 : vector<1x1x32xbf16> to vector<2x8x32xbf16>
    %87 = arith.mulf %31, %86 : vector<2x8x32xbf16>
    "tpu.trace_start"() <{level = 10 : i32, message = "bqk,bkd->bqd"}> : () -> ()
    %cst_37 = arith.constant dense<0.000000e+00> : vector<2x8x32xf32>
    %88 = tpu.matmul %85, %87, %cst_37 {dimension_numbers = #tpu.dot_dimension_numbers<[2], [1], [1], [2], [0, 0, 0, 1, 1, 2], [0], [0]>} : vector<2x8x8xbf16>, vector<2x8x32xbf16>, vector<2x8x32xf32> -> vector<2x8x32xf32>
    "tpu.trace_stop"() : () -> ()
    %89 = arith.addf %60, %88 : vector<2x8x32xf32>
    %c16_i32_38 = arith.constant 16 : i32
    %90 = vector.broadcast %c16_i32_38 : i32 to vector<1x1x32xi32>
    %91 = arith.cmpi sge, %32, %90 : vector<1x1x32xi32>
    %c24_i32 = arith.constant 24 : i32
    %92 = vector.broadcast %c24_i32 : i32 to vector<1x1x32xi32>
    %93 = arith.cmpi slt, %32, %92 : vector<1x1x32xi32>
    %94 = arith.andi %91, %93 : vector<1x1x32xi1>
    %cst_39 = arith.constant 1.000000e+00 : f32
    %cst_40 = arith.constant 0.000000e+00 : f32
    %95 = vector.broadcast %cst_39 : f32 to vector<1x1x32xf32>
    %96 = vector.broadcast %cst_40 : f32 to vector<1x1x32xf32>
    %97 = arith.select %94, %95, %96 : vector<1x1x32xi1>, vector<1x1x32xf32>
    %98 = arith.truncf %97 : vector<1x1x32xf32> to vector<1x1x32xbf16>
    %99 = vector.broadcast %98 : vector<1x1x32xbf16> to vector<2x8x32xbf16>
    %100 = arith.mulf %22, %99 : vector<2x8x32xbf16>
    "tpu.trace_start"() <{level = 10 : i32, message = "bqd,bkd->bqk"}> : () -> ()
    %cst_41 = arith.constant dense<0.000000e+00> : vector<2x8x8xf32>
    %101 = tpu.matmul %13, %100, %cst_41 {dimension_numbers = #tpu.dot_dimension_numbers<[2], [2], [1], [1], [0, 0, 0, 1, 1, 1], [0], [0]>} : vector<2x8x32xbf16>, vector<2x8x32xbf16>, vector<2x8x8xf32> -> vector<2x8x8xf32>
    "tpu.trace_stop"() : () -> ()
    %cst_42 = arith.constant 0.353553385 : f32
    %102 = vector.broadcast %cst_42 : f32 to vector<2x8x8xf32>
    %103 = arith.mulf %101, %102 : vector<2x8x8xf32>
    %cst_43 = arith.constant dense<0xFF800000> : vector<2x8xf32>
    %104 = vector.multi_reduction <maximumf>, %103, %cst_43 [2] : vector<2x8x8xf32> to vector<2x8xf32>
    %105 = vector.shape_cast %104 : vector<2x8xf32> to vector<2x8x1xf32>
    %106 = vector.broadcast %105 : vector<2x8x1xf32> to vector<2x8x8xf32>
    %107 = arith.subf %103, %106 : vector<2x8x8xf32>
    %108 = math.exp %107 : vector<2x8x8xf32>
    %cst_44 = arith.constant dense<0.000000e+00> : vector<2x8xf32>
    %109 = vector.multi_reduction <add>, %108, %cst_44 [2] : vector<2x8x8xf32> to vector<2x8xf32>
    %110 = vector.shape_cast %109 : vector<2x8xf32> to vector<2x8x1xf32>
    %111 = tpu.reciprocal %110 {approx = true} : vector<2x8x1xf32> -> vector<2x8x1xf32>
    %112 = vector.broadcast %111 : vector<2x8x1xf32> to vector<2x8x8xf32>
    %113 = arith.mulf %108, %112 : vector<2x8x8xf32>
    %114 = arith.truncf %113 : vector<2x8x8xf32> to vector<2x8x8xbf16>
    %115 = vector.broadcast %98 : vector<1x1x32xbf16> to vector<2x8x32xbf16>
    %116 = arith.mulf %31, %115 : vector<2x8x32xbf16>
    "tpu.trace_start"() <{level = 10 : i32, message = "bqk,bkd->bqd"}> : () -> ()
    %cst_45 = arith.constant dense<0.000000e+00> : vector<2x8x32xf32>
    %117 = tpu.matmul %114, %116, %cst_45 {dimension_numbers = #tpu.dot_dimension_numbers<[2], [1], [1], [2], [0, 0, 0, 1, 1, 2], [0], [0]>} : vector<2x8x8xbf16>, vector<2x8x32xbf16>, vector<2x8x32xf32> -> vector<2x8x32xf32>
    "tpu.trace_stop"() : () -> ()
    %118 = arith.addf %89, %117 : vector<2x8x32xf32>
    %c24_i32_46 = arith.constant 24 : i32
    %119 = vector.broadcast %c24_i32_46 : i32 to vector<1x1x32xi32>
    %120 = arith.cmpi sge, %32, %119 : vector<1x1x32xi32>
    %c32_i32 = arith.constant 32 : i32
    %121 = vector.broadcast %c32_i32 : i32 to vector<1x1x32xi32>
    %122 = arith.cmpi slt, %32, %121 : vector<1x1x32xi32>
    %123 = arith.andi %120, %122 : vector<1x1x32xi1>
    %cst_47 = arith.constant 1.000000e+00 : f32
    %cst_48 = arith.constant 0.000000e+00 : f32
    %124 = vector.broadcast %cst_47 : f32 to vector<1x1x32xf32>
    %125 = vector.broadcast %cst_48 : f32 to vector<1x1x32xf32>
    %126 = arith.select %123, %124, %125 : vector<1x1x32xi1>, vector<1x1x32xf32>
    %127 = arith.truncf %126 : vector<1x1x32xf32> to vector<1x1x32xbf16>
    %128 = vector.broadcast %127 : vector<1x1x32xbf16> to vector<2x8x32xbf16>
    %129 = arith.mulf %22, %128 : vector<2x8x32xbf16>
    "tpu.trace_start"() <{level = 10 : i32, message = "bqd,bkd->bqk"}> : () -> ()
    %cst_49 = arith.constant dense<0.000000e+00> : vector<2x8x8xf32>
    %130 = tpu.matmul %13, %129, %cst_49 {dimension_numbers = #tpu.dot_dimension_numbers<[2], [2], [1], [1], [0, 0, 0, 1, 1, 1], [0], [0]>} : vector<2x8x32xbf16>, vector<2x8x32xbf16>, vector<2x8x8xf32> -> vector<2x8x8xf32>
    "tpu.trace_stop"() : () -> ()
    %cst_50 = arith.constant 0.353553385 : f32
    %131 = vector.broadcast %cst_50 : f32 to vector<2x8x8xf32>
    %132 = arith.mulf %130, %131 : vector<2x8x8xf32>
    %cst_51 = arith.constant dense<0xFF800000> : vector<2x8xf32>
    %133 = vector.multi_reduction <maximumf>, %132, %cst_51 [2] : vector<2x8x8xf32> to vector<2x8xf32>
    %134 = vector.shape_cast %133 : vector<2x8xf32> to vector<2x8x1xf32>
    %135 = vector.broadcast %134 : vector<2x8x1xf32> to vector<2x8x8xf32>
    %136 = arith.subf %132, %135 : vector<2x8x8xf32>
    %137 = math.exp %136 : vector<2x8x8xf32>
    %cst_52 = arith.constant dense<0.000000e+00> : vector<2x8xf32>
    %138 = vector.multi_reduction <add>, %137, %cst_52 [2] : vector<2x8x8xf32> to vector<2x8xf32>
    %139 = vector.shape_cast %138 : vector<2x8xf32> to vector<2x8x1xf32>
    %140 = tpu.reciprocal %139 {approx = true} : vector<2x8x1xf32> -> vector<2x8x1xf32>
    %141 = vector.broadcast %140 : vector<2x8x1xf32> to vector<2x8x8xf32>
    %142 = arith.mulf %137, %141 : vector<2x8x8xf32>
    %143 = arith.truncf %142 : vector<2x8x8xf32> to vector<2x8x8xbf16>
    %144 = vector.broadcast %127 : vector<1x1x32xbf16> to vector<2x8x32xbf16>
    %145 = arith.mulf %31, %144 : vector<2x8x32xbf16>
    "tpu.trace_start"() <{level = 10 : i32, message = "bqk,bkd->bqd"}> : () -> ()
    %cst_53 = arith.constant dense<0.000000e+00> : vector<2x8x32xf32>
    %146 = tpu.matmul %143, %145, %cst_53 {dimension_numbers = #tpu.dot_dimension_numbers<[2], [1], [1], [2], [0, 0, 0, 1, 1, 2], [0], [0]>} : vector<2x8x8xbf16>, vector<2x8x32xbf16>, vector<2x8x32xf32> -> vector<2x8x32xf32>
    "tpu.trace_stop"() : () -> ()
    %147 = arith.addf %118, %146 : vector<2x8x32xf32>
    %148 = vector.shape_cast %147 : vector<2x8x32xf32> to vector<16x32xf32>
    %149 = arith.truncf %148 : vector<16x32xf32> to vector<16x32xbf16>
    %c0_54 = arith.constant 0 : index
    %c0_55 = arith.constant 0 : index
    %c0_56 = arith.constant 0 : index
    %150 = vector.load %arg8[%c0_54, %c0_55, %c0_56] : memref<1x32x32xbf16, #tpu.memory_space<vmem>>, vector<1x32x32xbf16>
    %151 = vector.shape_cast %150 : vector<1x32x32xbf16> to vector<32x32xbf16>
    %cst_57 = arith.constant dense<0.000000e+00> : vector<16x32xf32>
    %152 = tpu.matmul %149, %151, %cst_57 {dimension_numbers = #tpu.dot_dimension_numbers<[1], [0], [0], [1], [0, 0, 1, 1], [], []>} : vector<16x32xbf16>, vector<32x32xbf16>, vector<16x32xf32> -> vector<16x32xf32>
    %c0_58 = arith.constant 0 : index
    %c0_59 = arith.constant 0 : index
    %c0_60 = arith.constant 0 : index
    %153 = vector.load %arg9[%c0_58, %c0_59, %c0_60] : memref<1x1x32xf32, #tpu.memory_space<vmem>>, vector<1x1x32xf32>
    %154 = vector.shape_cast %153 : vector<1x1x32xf32> to vector<1x32xf32>
    %155 = vector.broadcast %154 : vector<1x32xf32> to vector<16x32xf32>
    %156 = arith.addf %152, %155 : vector<16x32xf32>
    %157 = arith.addf %3, %156 : vector<16x32xf32>
    %c0_61 = arith.constant 0 : index
    %c0_62 = arith.constant 0 : index
    %c0_63 = arith.constant 0 : index
    %158 = vector.load %arg10[%c0_61, %c0_62, %c0_63] : memref<1x1x32xf32, #tpu.memory_space<vmem>>, vector<1x1x32xf32>
    %159 = vector.shape_cast %158 : vector<1x1x32xf32> to vector<1x32xf32>
    %c0_64 = arith.constant 0 : index
    %c0_65 = arith.constant 0 : index
    %c0_66 = arith.constant 0 : index
    %160 = vector.load %arg11[%c0_64, %c0_65, %c0_66] : memref<1x1x32xf32, #tpu.memory_space<vmem>>, vector<1x1x32xf32>
    %161 = vector.shape_cast %160 : vector<1x1x32xf32> to vector<1x32xf32>
    %cst_67 = arith.constant dense<0.000000e+00> : vector<16xf32>
    %162 = vector.multi_reduction <add>, %157, %cst_67 [1] : vector<16x32xf32> to vector<16xf32>
    %163 = vector.shape_cast %162 : vector<16xf32> to vector<16x1xf32>
    %cst_68 = arith.constant 3.200000e+01 : f32
    %164 = vector.broadcast %cst_68 : f32 to vector<16x1xf32>
    %165 = arith.divf %163, %164 : vector<16x1xf32>
    %166 = vector.broadcast %165 : vector<16x1xf32> to vector<16x32xf32>
    %167 = arith.subf %157, %166 : vector<16x32xf32>
    %168 = arith.mulf %167, %167 : vector<16x32xf32>
    %cst_69 = arith.constant dense<0.000000e+00> : vector<16xf32>
    %169 = vector.multi_reduction <add>, %168, %cst_69 [1] : vector<16x32xf32> to vector<16xf32>
    %170 = vector.shape_cast %169 : vector<16xf32> to vector<16x1xf32>
    %cst_70 = arith.constant 3.200000e+01 : f32
    %171 = vector.broadcast %cst_70 : f32 to vector<16x1xf32>
    %172 = arith.divf %170, %171 : vector<16x1xf32>
    %173 = vector.broadcast %165 : vector<16x1xf32> to vector<16x32xf32>
    %174 = arith.subf %157, %173 : vector<16x32xf32>
    %cst_71 = arith.constant 9.99999974E-6 : f32
    %175 = vector.broadcast %cst_71 : f32 to vector<16x1xf32>
    %176 = arith.addf %172, %175 : vector<16x1xf32>
    %177 = math.rsqrt %176 : vector<16x1xf32>
    %178 = vector.broadcast %177 : vector<16x1xf32> to vector<16x32xf32>
    %179 = arith.mulf %174, %178 : vector<16x32xf32>
    %180 = vector.broadcast %159 : vector<1x32xf32> to vector<16x32xf32>
    %181 = arith.mulf %179, %180 : vector<16x32xf32>
    %182 = vector.broadcast %161 : vector<1x32xf32> to vector<16x32xf32>
    %183 = arith.addf %181, %182 : vector<16x32xf32>
    %184 = arith.truncf %183 : vector<16x32xf32> to vector<16x32xbf16>
    %c0_72 = arith.constant 0 : index
    %c0_73 = arith.constant 0 : index
    %c0_74 = arith.constant 0 : index
    %185 = vector.load %arg14[%c0_72, %c0_73, %c0_74] : memref<1x32x2048xbf16, #tpu.memory_space<vmem>>, vector<1x32x2048xbf16>
    %186 = vector.shape_cast %185 : vector<1x32x2048xbf16> to vector<32x2048xbf16>
    %cst_75 = arith.constant dense<0.000000e+00> : vector<16x2048xf32>
    %187 = tpu.matmul %184, %186, %cst_75 {dimension_numbers = #tpu.dot_dimension_numbers<[1], [0], [0], [1], [0, 0, 1, 1], [], []>} : vector<16x32xbf16>, vector<32x2048xbf16>, vector<16x2048xf32> -> vector<16x2048xf32>
    %c0_76 = arith.constant 0 : index
    %c0_77 = arith.constant 0 : index
    %c0_78 = arith.constant 0 : index
    %188 = vector.load %arg15[%c0_76, %c0_77, %c0_78] : memref<1x1x2048xf32, #tpu.memory_space<vmem>>, vector<1x1x2048xf32>
    %189 = vector.shape_cast %188 : vector<1x1x2048xf32> to vector<1x2048xf32>
    %190 = vector.broadcast %189 : vector<1x2048xf32> to vector<16x2048xf32>
    %191 = arith.addf %187, %190 : vector<16x2048xf32>
    %cst_79 = arith.constant 0.000000e+00 : f32
    %192 = vector.broadcast %cst_79 : f32 to vector<16x2048xf32>
    %193 = arith.maximumf %191, %192 : vector<16x2048xf32>
    %194 = arith.truncf %193 : vector<16x2048xf32> to vector<16x2048xbf16>
    %c0_80 = arith.constant 0 : index
    %c0_81 = arith.constant 0 : index
    %c0_82 = arith.constant 0 : index
    %195 = vector.load %arg16[%c0_80, %c0_81, %c0_82] : memref<1x2048x32xbf16, #tpu.memory_space<vmem>>, vector<1x2048x32xbf16>
    %196 = vector.shape_cast %195 : vector<1x2048x32xbf16> to vector<2048x32xbf16>
    %cst_83 = arith.constant dense<0.000000e+00> : vector<16x32xf32>
    %197 = tpu.matmul %194, %196, %cst_83 {dimension_numbers = #tpu.dot_dimension_numbers<[1], [0], [0], [1], [0, 0, 1, 1], [], []>} : vector<16x2048xbf16>, vector<2048x32xbf16>, vector<16x32xf32> -> vector<16x32xf32>
    %c0_84 = arith.constant 0 : index
    %c0_85 = arith.constant 0 : index
    %c0_86 = arith.constant 0 : index
    %198 = vector.load %arg17[%c0_84, %c0_85, %c0_86] : memref<1x1x32xf32, #tpu.memory_space<vmem>>, vector<1x1x32xf32>
    %199 = vector.shape_cast %198 : vector<1x1x32xf32> to vector<1x32xf32>
    %200 = vector.broadcast %199 : vector<1x32xf32> to vector<16x32xf32>
    %201 = arith.addf %197, %200 : vector<16x32xf32>
    %202 = arith.addf %183, %201 : vector<16x32xf32>
    %c0_87 = arith.constant 0 : index
    %c0_88 = arith.constant 0 : index
    %c0_89 = arith.constant 0 : index
    %203 = vector.load %arg12[%c0_87, %c0_88, %c0_89] : memref<1x1x32xf32, #tpu.memory_space<vmem>>, vector<1x1x32xf32>
    %204 = vector.shape_cast %203 : vector<1x1x32xf32> to vector<1x32xf32>
    %c0_90 = arith.constant 0 : index
    %c0_91 = arith.constant 0 : index
    %c0_92 = arith.constant 0 : index
    %205 = vector.load %arg13[%c0_90, %c0_91, %c0_92] : memref<1x1x32xf32, #tpu.memory_space<vmem>>, vector<1x1x32xf32>
    %206 = vector.shape_cast %205 : vector<1x1x32xf32> to vector<1x32xf32>
    %cst_93 = arith.constant dense<0.000000e+00> : vector<16xf32>
    %207 = vector.multi_reduction <add>, %202, %cst_93 [1] : vector<16x32xf32> to vector<16xf32>
    %208 = vector.shape_cast %207 : vector<16xf32> to vector<16x1xf32>
    %cst_94 = arith.constant 3.200000e+01 : f32
    %209 = vector.broadcast %cst_94 : f32 to vector<16x1xf32>
    %210 = arith.divf %208, %209 : vector<16x1xf32>
    %211 = vector.broadcast %210 : vector<16x1xf32> to vector<16x32xf32>
    %212 = arith.subf %202, %211 : vector<16x32xf32>
    %213 = arith.mulf %212, %212 : vector<16x32xf32>
    %cst_95 = arith.constant dense<0.000000e+00> : vector<16xf32>
    %214 = vector.multi_reduction <add>, %213, %cst_95 [1] : vector<16x32xf32> to vector<16xf32>
    %215 = vector.shape_cast %214 : vector<16xf32> to vector<16x1xf32>
    %cst_96 = arith.constant 3.200000e+01 : f32
    %216 = vector.broadcast %cst_96 : f32 to vector<16x1xf32>
    %217 = arith.divf %215, %216 : vector<16x1xf32>
    %218 = vector.broadcast %210 : vector<16x1xf32> to vector<16x32xf32>
    %219 = arith.subf %202, %218 : vector<16x32xf32>
    %cst_97 = arith.constant 9.99999974E-6 : f32
    %220 = vector.broadcast %cst_97 : f32 to vector<16x1xf32>
    %221 = arith.addf %217, %220 : vector<16x1xf32>
    %222 = math.rsqrt %221 : vector<16x1xf32>
    %223 = vector.broadcast %222 : vector<16x1xf32> to vector<16x32xf32>
    %224 = arith.mulf %219, %223 : vector<16x32xf32>
    %225 = vector.broadcast %204 : vector<1x32xf32> to vector<16x32xf32>
    %226 = arith.mulf %224, %225 : vector<16x32xf32>
    %227 = vector.broadcast %206 : vector<1x32xf32> to vector<16x32xf32>
    %228 = arith.addf %226, %227 : vector<16x32xf32>
    %c0_98 = arith.constant 0 : index
    %c0_99 = arith.constant 0 : index
    %229 = vector.load %arg21[%c0_98, %c0_99] : memref<16x32xf32, #tpu.memory_space<vmem>>, vector<16x32xf32>
    tpu.vector_store %arg21[%c0_98, %c0_99], %228 {strides = array<i32>} : memref<16x32xf32, #tpu.memory_space<vmem>>, vector<16x32xf32>,
    %c1_i32 = arith.constant 1 : i32
    %230 = arith.cmpi eq, %arg0, %c1_i32 : i32
    %231 = arith.extui %230 : i1 to i32
    %c0_i32_100 = arith.constant 0 : i32
    %232 = arith.cmpi ne, %231, %c0_i32_100 : i32
    scf.if %232 {
      %233 = vector.shape_cast %228 : vector<16x32xf32> to vector<2x8x32xf32>
      %cst_101 = arith.constant dense<0.000000e+00> : vector<2x32xf32>
      %234 = vector.multi_reduction <add>, %233, %cst_101 [1] : vector<2x8x32xf32> to vector<2x32xf32>
      %cst_102 = arith.constant 8.000000e+00 : f32
      %235 = vector.broadcast %cst_102 : f32 to vector<2x32xf32>
      %236 = arith.divf %234, %235 : vector<2x32xf32>
      %237 = arith.truncf %236 : vector<2x32xf32> to vector<2x32xbf16>
      %c0_103 = arith.constant 0 : index
      %c0_104 = arith.constant 0 : index
      %238 = vector.load %arg18[%c0_103, %c0_104] : memref<32x8xbf16, #tpu.memory_space<vmem>>, vector<32x8xbf16>
      %cst_105 = arith.constant dense<0.000000e+00> : vector<2x8xf32>
      %239 = tpu.matmul %237, %238, %cst_105 {dimension_numbers = #tpu.dot_dimension_numbers<[1], [0], [0], [1], [0, 0, 1, 1], [], []>} : vector<2x32xbf16>, vector<32x8xbf16>, vector<2x8xf32> -> vector<2x8xf32>
      %c0_106 = arith.constant 0 : index
      %c0_107 = arith.constant 0 : index
      %240 = vector.load %arg19[%c0_106, %c0_107] : memref<1x8xf32, #tpu.memory_space<vmem>>, vector<1x8xf32>
      %241 = vector.broadcast %240 : vector<1x8xf32> to vector<2x8xf32>
      %242 = arith.addf %239, %241 : vector<2x8xf32>
      %c0_108 = arith.constant 0 : index
      %c0_109 = arith.constant 0 : index
      %243 = vector.load %arg20[%c0_108, %c0_109] : memref<2x8xf32, #tpu.memory_space<vmem>>, vector<2x8xf32>
      tpu.vector_store %arg20[%c0_108, %c0_109], %242 {strides = array<i32>} : memref<2x8xf32, #tpu.memory_space<vmem>>, vector<2x8xf32>,
    } else {
    }
    return
  }
  func.func @transform_0(%arg0: i32) -> (i32, i32) {
    %c0_i32 = arith.constant 0 : i32
    %c0_i32_0 = arith.constant 0 : i32
    %c0_i32_1 = arith.constant 0 : i32
    return %c0_i32, %c0_i32_0 : i32, i32
  }
  func.func @transform_1(%arg0: i32) -> (i32, i32, i32) {
    %c0_i32 = arith.constant 0 : i32
    %c0_i32_0 = arith.constant 0 : i32
    %c0_i32_1 = arith.constant 0 : i32
    return %arg0, %c0_i32, %c0_i32_0 : i32, i32, i32
  }
  func.func @transform_2(%arg0: i32) -> (i32, i32, i32) {
    %c0_i32 = arith.constant 0 : i32
    %c0_i32_0 = arith.constant 0 : i32
    %c0_i32_1 = arith.constant 0 : i32
    return %arg0, %c0_i32, %c0_i32_0 : i32, i32, i32
  }
  func.func @transform_3(%arg0: i32) -> (i32, i32, i32) {
    %c0_i32 = arith.constant 0 : i32
    %c0_i32_0 = arith.constant 0 : i32
    %c0_i32_1 = arith.constant 0 : i32
    return %arg0, %c0_i32, %c0_i32_0 : i32, i32, i32
  }
  func.func @transform_4(%arg0: i32) -> (i32, i32, i32) {
    %c0_i32 = arith.constant 0 : i32
    %c0_i32_0 = arith.constant 0 : i32
    %c0_i32_1 = arith.constant 0 : i32
    return %arg0, %c0_i32, %c0_i32_0 : i32, i32, i32
  }
  func.func @transform_5(%arg0: i32) -> (i32, i32, i32) {
    %c0_i32 = arith.constant 0 : i32
    %c0_i32_0 = arith.constant 0 : i32
    %c0_i32_1 = arith.constant 0 : i32
    return %arg0, %c0_i32, %c0_i32_0 : i32, i32, i32
  }
  func.func @transform_6(%arg0: i32) -> (i32, i32, i32) {
    %c0_i32 = arith.constant 0 : i32
    %c0_i32_0 = arith.constant 0 : i32
    %c0_i32_1 = arith.constant 0 : i32
    return %arg0, %c0_i32, %c0_i32_0 : i32, i32, i32
  }
  func.func @transform_7(%arg0: i32) -> (i32, i32, i32) {
    %c0_i32 = arith.constant 0 : i32
    %c0_i32_0 = arith.constant 0 : i32
    %c0_i32_1 = arith.constant 0 : i32
    return %arg0, %c0_i32, %c0_i32_0 : i32, i32, i32
  }
  func.func @transform_8(%arg0: i32) -> (i32, i32, i32) {
    %c0_i32 = arith.constant 0 : i32
    %c0_i32_0 = arith.constant 0 : i32
    %c0_i32_1 = arith.constant 0 : i32
    return %arg0, %c0_i32, %c0_i32_0 : i32, i32, i32
  }
  func.func @transform_9(%arg0: i32) -> (i32, i32, i32) {
    %c0_i32 = arith.constant 0 : i32
    %c0_i32_0 = arith.constant 0 : i32
    %c0_i32_1 = arith.constant 0 : i32
    return %arg0, %c0_i32, %c0_i32_0 : i32, i32, i32
  }
  func.func @transform_10(%arg0: i32) -> (i32, i32, i32) {
    %c0_i32 = arith.constant 0 : i32
    %c0_i32_0 = arith.constant 0 : i32
    %c0_i32_1 = arith.constant 0 : i32
    return %arg0, %c0_i32, %c0_i32_0 : i32, i32, i32
  }
  func.func @transform_11(%arg0: i32) -> (i32, i32, i32) {
    %c0_i32 = arith.constant 0 : i32
    %c0_i32_0 = arith.constant 0 : i32
    %c0_i32_1 = arith.constant 0 : i32
    return %arg0, %c0_i32, %c0_i32_0 : i32, i32, i32
  }
  func.func @transform_12(%arg0: i32) -> (i32, i32, i32) {
    %c0_i32 = arith.constant 0 : i32
    %c0_i32_0 = arith.constant 0 : i32
    %c0_i32_1 = arith.constant 0 : i32
    return %arg0, %c0_i32, %c0_i32_0 : i32, i32, i32
  }
  func.func @transform_13(%arg0: i32) -> (i32, i32, i32) {
    %c0_i32 = arith.constant 0 : i32
    %c0_i32_0 = arith.constant 0 : i32
    %c0_i32_1 = arith.constant 0 : i32
    return %arg0, %c0_i32, %c0_i32_0 : i32, i32, i32
  }
  func.func @transform_14(%arg0: i32) -> (i32, i32, i32) {
    %c0_i32 = arith.constant 0 : i32
    %c0_i32_0 = arith.constant 0 : i32
    %c0_i32_1 = arith.constant 0 : i32
    return %arg0, %c0_i32, %c0_i32_0 : i32, i32, i32
  }
  func.func @transform_15(%arg0: i32) -> (i32, i32, i32) {
    %c0_i32 = arith.constant 0 : i32
    %c0_i32_0 = arith.constant 0 : i32
    %c0_i32_1 = arith.constant 0 : i32
    return %arg0, %c0_i32, %c0_i32_0 : i32, i32, i32
  }
  func.func @transform_16(%arg0: i32) -> (i32, i32, i32) {
    %c0_i32 = arith.constant 0 : i32
    %c0_i32_0 = arith.constant 0 : i32
    %c0_i32_1 = arith.constant 0 : i32
    return %arg0, %c0_i32, %c0_i32_0 : i32, i32, i32
  }
  func.func @transform_17(%arg0: i32) -> (i32, i32) {
    %c0_i32 = arith.constant 0 : i32
    %c0_i32_0 = arith.constant 0 : i32
    %c0_i32_1 = arith.constant 0 : i32
    return %c0_i32, %c0_i32_0 : i32, i32
  }
  func.func @transform_18(%arg0: i32) -> (i32, i32) {
    %c0_i32 = arith.constant 0 : i32
    %c0_i32_0 = arith.constant 0 : i32
    %c0_i32_1 = arith.constant 0 : i32
    return %c0_i32, %c0_i32_0 : i32, i32
  }
  func.func @transform_19(%arg0: i32) -> (i32, i32) {
    %c0_i32 = arith.constant 0 : i32
    %c0_i32_0 = arith.constant 0 : i32
    %c0_i32_1 = arith.constant 0 : i32
    return %c0_i32, %c0_i32_0 : i32, i32
  }
}

</mosaic_0001>

<llo_original>
// kernel: transformer_forward.1
$region0: #{transformer_forward.1}
  #allocation0 [shape = 'u32[]', space=smem, size = 0x4, offset = 0x4, fixed_abs, tag = 'smem constant byte address 0x4 - core index']
  #allocation1 [shape = 'u32[144,128]{1,0:T(1,128)}', space=vmem, size = 0x12000, scoped, tag = 'internal scratch']
  #allocation2 [shape = 'f32[16,32]{1,0:T(8,128)}', space=vmem, size = 0x2000, scoped, tag = 'scratch operand']
  %s0 = inlined_call_operand.vmem [shape: f32[16,32], index: 0, kind: input, shape index: {}]
  %s1 = inlined_call_operand.vmem [shape: bf16[2,32,32], index: 1, kind: input, shape index: {}]
  %s2 = inlined_call_operand.vmem [shape: bf16[2,32,32], index: 2, kind: input, shape index: {}]
  %s3 = inlined_call_operand.vmem [shape: bf16[2,32,32], index: 3, kind: input, shape index: {}]
  %s4 = inlined_call_operand.vmem [shape: f32[2,1,32], index: 4, kind: input, shape index: {}]
  %s5 = inlined_call_operand.vmem [shape: f32[2,1,32], index: 5, kind: input, shape index: {}]
  %s6 = inlined_call_operand.vmem [shape: f32[2,1,32], index: 6, kind: input, shape index: {}]
  %s7 = inlined_call_operand.vmem [shape: bf16[2,32,32], index: 7, kind: input, shape index: {}]
  %s8 = inlined_call_operand.vmem [shape: f32[2,1,32], index: 8, kind: input, shape index: {}]
  %s9 = inlined_call_operand.vmem [shape: f32[2,1,32], index: 9, kind: input, shape index: {}]
  %s10 = inlined_call_operand.vmem [shape: f32[2,1,32], index: 10, kind: input, shape index: {}]
  %s11 = inlined_call_operand.vmem [shape: f32[2,1,32], index: 11, kind: input, shape index: {}]
  %s12 = inlined_call_operand.vmem [shape: f32[2,1,32], index: 12, kind: input, shape index: {}]
  %s13 = inlined_call_operand.vmem [shape: bf16[2,32,2048], index: 13, kind: input, shape index: {}]
  %s14 = inlined_call_operand.vmem [shape: f32[2,1,2048], index: 14, kind: input, shape index: {}]
  %s15 = inlined_call_operand.vmem [shape: bf16[2,2048,32], index: 15, kind: input, shape index: {}]
  %s16 = inlined_call_operand.vmem [shape: f32[2,1,32], index: 16, kind: input, shape index: {}]
  %s17 = inlined_call_operand.vmem [shape: bf16[32,8], index: 17, kind: input, shape index: {}]
  %s18 = inlined_call_operand.vmem [shape: f32[1,8], index: 18, kind: input, shape index: {}]
  %s19 = inlined_call_operand.hbm [shape: f32[2,8], index: 19, kind: output, shape index: {}]
  %s20 = sld [smem:[#allocation0]]
  $region117: #{transformer_forward.1} parent=0
    _
  %s22 = ssub.s32 1, %s20
  %s23 = scalar_select 0, %s22, %s20
  $region1: #{transformer_forward.1} parent=0
    #allocation3 [shape = 'u8[1024]{0}', space=vmem, size = 0x400, scoped, tag = 'output window, operand 0, single buffered']
    #allocation4 [shape = 's32[2]{0}', space=sflag, size = 0x8, scoped, tag = 'scoped memory for transformer_forward.1']
    %24 = vsyncpa [#allocation4], 0
    loop: start=0, step=1, limit=4
    $region2: #{transformer_forward.1} parent=1 // loop_pre_header
      _
    $region3: #{transformer_forward.1} parent=1 // loop_header
      %s26 = sphi 0, %s30
      %p27 = scmp.ge.s32.totalorder %s26, 4
      %s34 = sphi 0, %s34
      %s36 = sphi 0, %s34
      %s37 = sphi 0, %s36
      %s51 = sphi 0, %s37
      %s57 = sphi 0, %s59
      %s60 = sphi 0, %s57
      %s61 = sphi 0, %s60
      %s77 = sphi 0, %s61
      %s83 = sphi 0, %s85
      %s86 = sphi 0, %s83
      %s87 = sphi 0, %s86
      %s103 = sphi 0, %s87
      %s109 = sphi 0, %s111
      %s112 = sphi 0, %s109
      %s113 = sphi 0, %s112
      %s129 = sphi 0, %s113
      %s135 = sphi 0, %s137
      %s138 = sphi 0, %s135
      %s139 = sphi 0, %s138
      %s155 = sphi 0, %s139
      %s161 = sphi 0, %s163
      %s164 = sphi 0, %s161
      %s165 = sphi 0, %s164
      %s181 = sphi 0, %s165
      %s187 = sphi 0, %s189
      %s190 = sphi 0, %s187
      %s191 = sphi 0, %s190
      %s207 = sphi 0, %s191
      %s213 = sphi 0, %s215
      %s216 = sphi 0, %s213
      %s217 = sphi 0, %s216
      %s233 = sphi 0, %s217
      %s239 = sphi 0, %s241
      %s242 = sphi 0, %s239
      %s243 = sphi 0, %s242
      %s259 = sphi 0, %s243
      %s265 = sphi 0, %s267
      %s268 = sphi 0, %s265
      %s269 = sphi 0, %s268
      %s285 = sphi 0, %s269
      %s291 = sphi 0, %s293
      %s294 = sphi 0, %s291
      %s295 = sphi 0, %s294
      %s311 = sphi 0, %s295
      %s317 = sphi 0, %s319
      %s320 = sphi 0, %s317
      %s321 = sphi 0, %s320
      %s337 = sphi 0, %s321
      %s343 = sphi 0, %s345
      %s346 = sphi 0, %s343
      %s347 = sphi 0, %s346
      %s363 = sphi 0, %s347
      %s369 = sphi 0, %s371
      %s372 = sphi 0, %s369
      %s373 = sphi 0, %s372
      %s389 = sphi 0, %s373
      %s395 = sphi 0, %s397
      %s398 = sphi 0, %s395
      %s399 = sphi 0, %s398
      %s415 = sphi 0, %s399
      %s421 = sphi 0, %s423
      %s424 = sphi 0, %s421
      %s425 = sphi 0, %s424
      %s441 = sphi 0, %s425
      %s447 = sphi 0, %s449
      %s450 = sphi 0, %s447
      %s451 = sphi 0, %s450
      %s467 = sphi 0, %s451
      %s471 = sphi 0, %s471
      %s473 = sphi 0, %s471
      %s474 = sphi 0, %s473
      %s488 = sphi 0, %s474
      %s492 = sphi 0, %s492
      %s494 = sphi 0, %s492
      %s495 = sphi 0, %s494
      %s509 = sphi 0, %s495
      %s513 = sphi 0, %s513
      %s515 = sphi 0, %s513
      %s516 = sphi 0, %s515
      %s530 = sphi 0, %s516
    $region4: #{transformer_forward.1} parent=1 // loop_header_branch
      %29 = sbr.rel (%p27) target = $region8
    $region5: #{transformer_forward.1} parent=1 // loop_body
      %s31 = ssub.s32 %s26, 1
      %s32 = ssub.s32 %s26, 2
      %s33 = sadd.s32 %s26, 1
      %s35 = sadd.s32 %s34, 1
      %p38 = scmp.eq.s32.totalorder %s26, 1
      %p39 = scmp.ne.s32.totalorder %s34, %s36
      %p40 = scmp.eq.s32.totalorder %s26, 0
      %p41 = por %p39, %p40
      %p42 = scmp.ne.s32.totalorder %s34, %s36
      %p43 = scmp.eq.s32.totalorder %s31, 1
      %p44 = por %p42, %p43
      %p45 = scmp.ne.s32.totalorder %s36, %s37
      %p46 = scmp.eq.s32.totalorder %s31, 0
      %p47 = por %p45, %p46
      %p48 = scmp.ne.s32.totalorder %s36, %s37
      %p49 = scmp.eq.s32.totalorder %s32, 1
      %p50 = por %p48, %p49
      %p52 = scmp.ne.s32.totalorder %s37, %s51
      %p53 = scmp.eq.s32.totalorder %s32, 0
      %p54 = por %p52, %p53
      %s55 = ssub.s32 %s26, %s33
      %p56 = scmp.eq.s32.totalorder %s55, 0
      %s58 = sadd.s32 %s57, 1
      %s59 = scalar_select %p56, %s57, %s58
      %p62 = pneg %p56
      %p63 = scmp.eq.s32.totalorder %s26, 1
      %p64 = por %p62, %p63
      %p65 = scmp.ne.s32.totalorder %s57, %s60
      %p66 = scmp.eq.s32.totalorder %s26, 0
      %p67 = por %p65, %p66
      %p68 = scmp.ne.s32.totalorder %s57, %s60
      %p69 = scmp.eq.s32.totalorder %s31, 1
      %p70 = por %p68, %p69
      %p71 = scmp.ne.s32.totalorder %s60, %s61
      %p72 = scmp.eq.s32.totalorder %s31, 0
      %p73 = por %p71, %p72
      %p74 = scmp.ne.s32.totalorder %s60, %s61
      %p75 = scmp.eq.s32.totalorder %s32, 1
      %p76 = por %p74, %p75
      %p78 = scmp.ne.s32.totalorder %s61, %s77
      %p79 = scmp.eq.s32.totalorder %s32, 0
      %p80 = por %p78, %p79
      %s81 = ssub.s32 %s26, %s33
      %p82 = scmp.eq.s32.totalorder %s81, 0
      %s84 = sadd.s32 %s83, 1
      %s85 = scalar_select %p82, %s83, %s84
      %p88 = pneg %p82
      %p89 = scmp.eq.s32.totalorder %s26, 1
      %p90 = por %p88, %p89
      %p91 = scmp.ne.s32.totalorder %s83, %s86
      %p92 = scmp.eq.s32.totalorder %s26, 0
      %p93 = por %p91, %p92
      %p94 = scmp.ne.s32.totalorder %s83, %s86
      %p95 = scmp.eq.s32.totalorder %s31, 1
      %p96 = por %p94, %p95
      %p97 = scmp.ne.s32.totalorder %s86, %s87
      %p98 = scmp.eq.s32.totalorder %s31, 0
      %p99 = por %p97, %p98
      %p100 = scmp.ne.s32.totalorder %s86, %s87
      %p101 = scmp.eq.s32.totalorder %s32, 1
      %p102 = por %p100, %p101
      %p104 = scmp.ne.s32.totalorder %s87, %s103
      %p105 = scmp.eq.s32.totalorder %s32, 0
      %p106 = por %p104, %p105
      %s107 = ssub.s32 %s26, %s33
      %p108 = scmp.eq.s32.totalorder %s107, 0
      %s110 = sadd.s32 %s109, 1
      %s111 = scalar_select %p108, %s109, %s110
      %p114 = pneg %p108
      %p115 = scmp.eq.s32.totalorder %s26, 1
      %p116 = por %p114, %p115
      %p117 = scmp.ne.s32.totalorder %s109, %s112
      %p118 = scmp.eq.s32.totalorder %s26, 0
      %p119 = por %p117, %p118
      %p120 = scmp.ne.s32.totalorder %s109, %s112
      %p121 = scmp.eq.s32.totalorder %s31, 1
      %p122 = por %p120, %p121
      %p123 = scmp.ne.s32.totalorder %s112, %s113
      %p124 = scmp.eq.s32.totalorder %s31, 0
      %p125 = por %p123, %p124
      %p126 = scmp.ne.s32.totalorder %s112, %s113
      %p127 = scmp.eq.s32.totalorder %s32, 1
      %p128 = por %p126, %p127
      %p130 = scmp.ne.s32.totalorder %s113, %s129
      %p131 = scmp.eq.s32.totalorder %s32, 0
      %p132 = por %p130, %p131
      %s133 = ssub.s32 %s26, %s33
      %p134 = scmp.eq.s32.totalorder %s133, 0
      %s136 = sadd.s32 %s135, 1
      %s137 = scalar_select %p134, %s135, %s136
      %p140 = pneg %p134
      %p141 = scmp.eq.s32.totalorder %s26, 1
      %p142 = por %p140, %p141
      %p143 = scmp.ne.s32.totalorder %s135, %s138
      %p144 = scmp.eq.s32.totalorder %s26, 0
      %p145 = por %p143, %p144
      %p146 = scmp.ne.s32.totalorder %s135, %s138
      %p147 = scmp.eq.s32.totalorder %s31, 1
      %p148 = por %p146, %p147
      %p149 = scmp.ne.s32.totalorder %s138, %s139
      %p150 = scmp.eq.s32.totalorder %s31, 0
      %p151 = por %p149, %p150
      %p152 = scmp.ne.s32.totalorder %s138, %s139
      %p153 = scmp.eq.s32.totalorder %s32, 1
      %p154 = por %p152, %p153
      %p156 = scmp.ne.s32.totalorder %s139, %s155
      %p157 = scmp.eq.s32.totalorder %s32, 0
      %p158 = por %p156, %p157
      %s159 = ssub.s32 %s26, %s33
      %p160 = scmp.eq.s32.totalorder %s159, 0
      %s162 = sadd.s32 %s161, 1
      %s163 = scalar_select %p160, %s161, %s162
      %p166 = pneg %p160
      %p167 = scmp.eq.s32.totalorder %s26, 1
      %p168 = por %p166, %p167
      %p169 = scmp.ne.s32.totalorder %s161, %s164
      %p170 = scmp.eq.s32.totalorder %s26, 0
      %p171 = por %p169, %p170
      %p172 = scmp.ne.s32.totalorder %s161, %s164
      %p173 = scmp.eq.s32.totalorder %s31, 1
      %p174 = por %p172, %p173
      %p175 = scmp.ne.s32.totalorder %s164, %s165
      %p176 = scmp.eq.s32.totalorder %s31, 0
      %p177 = por %p175, %p176
      %p178 = scmp.ne.s32.totalorder %s164, %s165
      %p179 = scmp.eq.s32.totalorder %s32, 1
      %p180 = por %p178, %p179
      %p182 = scmp.ne.s32.totalorder %s165, %s181
      %p183 = scmp.eq.s32.totalorder %s32, 0
      %p184 = por %p182, %p183
      %s185 = ssub.s32 %s26, %s33
      %p186 = scmp.eq.s32.totalorder %s185, 0
      %s188 = sadd.s32 %s187, 1
      %s189 = scalar_select %p186, %s187, %s188
      %p192 = pneg %p186
      %p193 = scmp.eq.s32.totalorder %s26, 1
      %p194 = por %p192, %p193
      %p195 = scmp.ne.s32.totalorder %s187, %s190
      %p196 = scmp.eq.s32.totalorder %s26, 0
      %p197 = por %p195, %p196
      %p198 = scmp.ne.s32.totalorder %s187, %s190
      %p199 = scmp.eq.s32.totalorder %s31, 1
      %p200 = por %p198, %p199
      %p201 = scmp.ne.s32.totalorder %s190, %s191
      %p202 = scmp.eq.s32.totalorder %s31, 0
      %p203 = por %p201, %p202
      %p204 = scmp.ne.s32.totalorder %s190, %s191
      %p205 = scmp.eq.s32.totalorder %s32, 1
      %p206 = por %p204, %p205
      %p208 = scmp.ne.s32.totalorder %s191, %s207
      %p209 = scmp.eq.s32.totalorder %s32, 0
      %p210 = por %p208, %p209
      %s211 = ssub.s32 %s26, %s33
      %p212 = scmp.eq.s32.totalorder %s211, 0
      %s214 = sadd.s32 %s213, 1
      %s215 = scalar_select %p212, %s213, %s214
      %p218 = pneg %p212
      %p219 = scmp.eq.s32.totalorder %s26, 1
      %p220 = por %p218, %p219
      %p221 = scmp.ne.s32.totalorder %s213, %s216
      %p222 = scmp.eq.s32.totalorder %s26, 0
      %p223 = por %p221, %p222
      %p224 = scmp.ne.s32.totalorder %s213, %s216
      %p225 = scmp.eq.s32.totalorder %s31, 1
      %p226 = por %p224, %p225
      %p227 = scmp.ne.s32.totalorder %s216, %s217
      %p228 = scmp.eq.s32.totalorder %s31, 0
      %p229 = por %p227, %p228
      %p230 = scmp.ne.s32.totalorder %s216, %s217
      %p231 = scmp.eq.s32.totalorder %s32, 1
      %p232 = por %p230, %p231
      %p234 = scmp.ne.s32.totalorder %s217, %s233
      %p235 = scmp.eq.s32.totalorder %s32, 0
      %p236 = por %p234, %p235
      %s237 = ssub.s32 %s26, %s33
      %p238 = scmp.eq.s32.totalorder %s237, 0
      %s240 = sadd.s32 %s239, 1
      %s241 = scalar_select %p238, %s239, %s240
      %p244 = pneg %p238
      %p245 = scmp.eq.s32.totalorder %s26, 1
      %p246 = por %p244, %p245
      %p247 = scmp.ne.s32.totalorder %s239, %s242
      %p248 = scmp.eq.s32.totalorder %s26, 0
      %p249 = por %p247, %p248
      %p250 = scmp.ne.s32.totalorder %s239, %s242
      %p251 = scmp.eq.s32.totalorder %s31, 1
      %p252 = por %p250, %p251
      %p253 = scmp.ne.s32.totalorder %s242, %s243
      %p254 = scmp.eq.s32.totalorder %s31, 0
      %p255 = por %p253, %p254
      %p256 = scmp.ne.s32.totalorder %s242, %s243
      %p257 = scmp.eq.s32.totalorder %s32, 1
      %p258 = por %p256, %p257
      %p260 = scmp.ne.s32.totalorder %s243, %s259
      %p261 = scmp.eq.s32.totalorder %s32, 0
      %p262 = por %p260, %p261
      %s263 = ssub.s32 %s26, %s33
      %p264 = scmp.eq.s32.totalorder %s263, 0
      %s266 = sadd.s32 %s265, 1
      %s267 = scalar_select %p264, %s265, %s266
      %p270 = pneg %p264
      %p271 = scmp.eq.s32.totalorder %s26, 1
      %p272 = por %p270, %p271
      %p273 = scmp.ne.s32.totalorder %s265, %s268
      %p274 = scmp.eq.s32.totalorder %s26, 0
      %p275 = por %p273, %p274
      %p276 = scmp.ne.s32.totalorder %s265, %s268
      %p277 = scmp.eq.s32.totalorder %s31, 1
      %p278 = por %p276, %p277
      %p279 = scmp.ne.s32.totalorder %s268, %s269
      %p280 = scmp.eq.s32.totalorder %s31, 0
      %p281 = por %p279, %p280
      %p282 = scmp.ne.s32.totalorder %s268, %s269
      %p283 = scmp.eq.s32.totalorder %s32, 1
      %p284 = por %p282, %p283
      %p286 = scmp.ne.s32.totalorder %s269, %s285
      %p287 = scmp.eq.s32.totalorder %s32, 0
      %p288 = por %p286, %p287
      %s289 = ssub.s32 %s26, %s33
      %p290 = scmp.eq.s32.totalorder %s289, 0
      %s292 = sadd.s32 %s291, 1
      %s293 = scalar_select %p290, %s291, %s292
      %p296 = pneg %p290
      %p297 = scmp.eq.s32.totalorder %s26, 1
      %p298 = por %p296, %p297
      %p299 = scmp.ne.s32.totalorder %s291, %s294
      %p300 = scmp.eq.s32.totalorder %s26, 0
      %p301 = por %p299, %p300
      %p302 = scmp.ne.s32.totalorder %s291, %s294
      %p303 = scmp.eq.s32.totalorder %s31, 1
      %p304 = por %p302, %p303
      %p305 = scmp.ne.s32.totalorder %s294, %s295
      %p306 = scmp.eq.s32.totalorder %s31, 0
      %p307 = por %p305, %p306
      %p308 = scmp.ne.s32.totalorder %s294, %s295
      %p309 = scmp.eq.s32.totalorder %s32, 1
      %p310 = por %p308, %p309
      %p312 = scmp.ne.s32.totalorder %s295, %s311
      %p313 = scmp.eq.s32.totalorder %s32, 0
      %p314 = por %p312, %p313
      %s315 = ssub.s32 %s26, %s33
      %p316 = scmp.eq.s32.totalorder %s315, 0
      %s318 = sadd.s32 %s317, 1
      %s319 = scalar_select %p316, %s317, %s318
      %p322 = pneg %p316
      %p323 = scmp.eq.s32.totalorder %s26, 1
      %p324 = por %p322, %p323
      %p325 = scmp.ne.s32.totalorder %s317, %s320
      %p326 = scmp.eq.s32.totalorder %s26, 0
      %p327 = por %p325, %p326
      %p328 = scmp.ne.s32.totalorder %s317, %s320
      %p329 = scmp.eq.s32.totalorder %s31, 1
      %p330 = por %p328, %p329
      %p331 = scmp.ne.s32.totalorder %s320, %s321
      %p332 = scmp.eq.s32.totalorder %s31, 0
      %p333 = por %p331, %p332
      %p334 = scmp.ne.s32.totalorder %s320, %s321
      %p335 = scmp.eq.s32.totalorder %s32, 1
      %p336 = por %p334, %p335
      %p338 = scmp.ne.s32.totalorder %s321, %s337
      %p339 = scmp.eq.s32.totalorder %s32, 0
      %p340 = por %p338, %p339
      %s341 = ssub.s32 %s26, %s33
      %p342 = scmp.eq.s32.totalorder %s341, 0
      %s344 = sadd.s32 %s343, 1
      %s345 = scalar_select %p342, %s343, %s344
      %p348 = pneg %p342
      %p349 = scmp.eq.s32.totalorder %s26, 1
      %p350 = por %p348, %p349
      %p351 = scmp.ne.s32.totalorder %s343, %s346
      %p352 = scmp.eq.s32.totalorder %s26, 0
      %p353 = por %p351, %p352
      %p354 = scmp.ne.s32.totalorder %s343, %s346
      %p355 = scmp.eq.s32.totalorder %s31, 1
      %p356 = por %p354, %p355
      %p357 = scmp.ne.s32.totalorder %s346, %s347
      %p358 = scmp.eq.s32.totalorder %s31, 0
      %p359 = por %p357, %p358
      %p360 = scmp.ne.s32.totalorder %s346, %s347
      %p361 = scmp.eq.s32.totalorder %s32, 1
      %p362 = por %p360, %p361
      %p364 = scmp.ne.s32.totalorder %s347, %s363
      %p365 = scmp.eq.s32.totalorder %s32, 0
      %p366 = por %p364, %p365
      %s367 = ssub.s32 %s26, %s33
      %p368 = scmp.eq.s32.totalorder %s367, 0
      %s370 = sadd.s32 %s369, 1
      %s371 = scalar_select %p368, %s369, %s370
      %p374 = pneg %p368
      %p375 = scmp.eq.s32.totalorder %s26, 1
      %p376 = por %p374, %p375
      %p377 = scmp.ne.s32.totalorder %s369, %s372
      %p378 = scmp.eq.s32.totalorder %s26, 0
      %p379 = por %p377, %p378
      %p380 = scmp.ne.s32.totalorder %s369, %s372
      %p381 = scmp.eq.s32.totalorder %s31, 1
      %p382 = por %p380, %p381
      %p383 = scmp.ne.s32.totalorder %s372, %s373
      %p384 = scmp.eq.s32.totalorder %s31, 0
      %p385 = por %p383, %p384
      %p386 = scmp.ne.s32.totalorder %s372, %s373
      %p387 = scmp.eq.s32.totalorder %s32, 1
      %p388 = por %p386, %p387
      %p390 = scmp.ne.s32.totalorder %s373, %s389
      %p391 = scmp.eq.s32.totalorder %s32, 0
      %p392 = por %p390, %p391
      %s393 = ssub.s32 %s26, %s33
      %p394 = scmp.eq.s32.totalorder %s393, 0
      %s396 = sadd.s32 %s395, 1
      %s397 = scalar_select %p394, %s395, %s396
      %p400 = pneg %p394
      %p401 = scmp.eq.s32.totalorder %s26, 1
      %p402 = por %p400, %p401
      %p403 = scmp.ne.s32.totalorder %s395, %s398
      %p404 = scmp.eq.s32.totalorder %s26, 0
      %p405 = por %p403, %p404
      %p406 = scmp.ne.s32.totalorder %s395, %s398
      %p407 = scmp.eq.s32.totalorder %s31, 1
      %p408 = por %p406, %p407
      %p409 = scmp.ne.s32.totalorder %s398, %s399
      %p410 = scmp.eq.s32.totalorder %s31, 0
      %p411 = por %p409, %p410
      %p412 = scmp.ne.s32.totalorder %s398, %s399
      %p413 = scmp.eq.s32.totalorder %s32, 1
      %p414 = por %p412, %p413
      %p416 = scmp.ne.s32.totalorder %s399, %s415
      %p417 = scmp.eq.s32.totalorder %s32, 0
      %p418 = por %p416, %p417
      %s419 = ssub.s32 %s26, %s33
      %p420 = scmp.eq.s32.totalorder %s419, 0
      %s422 = sadd.s32 %s421, 1
      %s423 = scalar_select %p420, %s421, %s422
      %p426 = pneg %p420
      %p427 = scmp.eq.s32.totalorder %s26, 1
      %p428 = por %p426, %p427
      %p429 = scmp.ne.s32.totalorder %s421, %s424
      %p430 = scmp.eq.s32.totalorder %s26, 0
      %p431 = por %p429, %p430
      %p432 = scmp.ne.s32.totalorder %s421, %s424
      %p433 = scmp.eq.s32.totalorder %s31, 1
      %p434 = por %p432, %p433
      %p435 = scmp.ne.s32.totalorder %s424, %s425
      %p436 = scmp.eq.s32.totalorder %s31, 0
      %p437 = por %p435, %p436
      %p438 = scmp.ne.s32.totalorder %s424, %s425
      %p439 = scmp.eq.s32.totalorder %s32, 1
      %p440 = por %p438, %p439
      %p442 = scmp.ne.s32.totalorder %s425, %s441
      %p443 = scmp.eq.s32.totalorder %s32, 0
      %p444 = por %p442, %p443
      %s445 = ssub.s32 %s26, %s33
      %p446 = scmp.eq.s32.totalorder %s445, 0
      %s448 = sadd.s32 %s447, 1
      %s449 = scalar_select %p446, %s447, %s448
      %p452 = pneg %p446
      %p453 = scmp.eq.s32.totalorder %s26, 1
      %p454 = por %p452, %p453
      %p455 = scmp.ne.s32.totalorder %s447, %s450
      %p456 = scmp.eq.s32.totalorder %s26, 0
      %p457 = por %p455, %p456
      %p458 = scmp.ne.s32.totalorder %s447, %s450
      %p459 = scmp.eq.s32.totalorder %s31, 1
      %p460 = por %p458, %p459
      %p461 = scmp.ne.s32.totalorder %s450, %s451
      %p462 = scmp.eq.s32.totalorder %s31, 0
      %p463 = por %p461, %p462
      %p464 = scmp.ne.s32.totalorder %s450, %s451
      %p465 = scmp.eq.s32.totalorder %s32, 1
      %p466 = por %p464, %p465
      %p468 = scmp.ne.s32.totalorder %s451, %s467
      %p469 = scmp.eq.s32.totalorder %s32, 0
      %p470 = por %p468, %p469
      %s472 = sadd.s32 %s471, 1
      %p475 = scmp.eq.s32.totalorder %s26, 1
      %p476 = scmp.ne.s32.totalorder %s471, %s473
      %p477 = scmp.eq.s32.totalorder %s26, 0
      %p478 = por %p476, %p477
      %p479 = scmp.ne.s32.totalorder %s471, %s473
      %p480 = scmp.eq.s32.totalorder %s31, 1
      %p481 = por %p479, %p480
      %p482 = scmp.ne.s32.totalorder %s473, %s474
      %p483 = scmp.eq.s32.totalorder %s31, 0
      %p484 = por %p482, %p483
      %p485 = scmp.ne.s32.totalorder %s473, %s474
      %p486 = scmp.eq.s32.totalorder %s32, 1
      %p487 = por %p485, %p486
      %p489 = scmp.ne.s32.totalorder %s474, %s488
      %p490 = scmp.eq.s32.totalorder %s32, 0
      %p491 = por %p489, %p490
      %s493 = sadd.s32 %s492, 1
      %p496 = scmp.eq.s32.totalorder %s26, 1
      %p497 = scmp.ne.s32.totalorder %s492, %s494
      %p498 = scmp.eq.s32.totalorder %s26, 0
      %p499 = por %p497, %p498
      %p500 = scmp.ne.s32.totalorder %s492, %s494
      %p501 = scmp.eq.s32.totalorder %s31, 1
      %p502 = por %p500, %p501
      %p503 = scmp.ne.s32.totalorder %s494, %s495
      %p504 = scmp.eq.s32.totalorder %s31, 0
      %p505 = por %p503, %p504
      %p506 = scmp.ne.s32.totalorder %s494, %s495
      %p507 = scmp.eq.s32.totalorder %s32, 1
      %p508 = por %p506, %p507
      %p510 = scmp.ne.s32.totalorder %s495, %s509
      %p511 = scmp.eq.s32.totalorder %s32, 0
      %p512 = por %p510, %p511
      %s514 = sadd.s32 %s513, 1
      %p517 = scmp.eq.s32.totalorder %s26, 1
      %p518 = scmp.ne.s32.totalorder %s513, %s515
      %p519 = scmp.eq.s32.totalorder %s26, 0
      %p520 = por %p518, %p519
      %p521 = scmp.ne.s32.totalorder %s513, %s515
      %p522 = scmp.eq.s32.totalorder %s31, 1
      %p523 = por %p521, %p522
      %p524 = scmp.ne.s32.totalorder %s515, %s516
      %p525 = scmp.eq.s32.totalorder %s31, 0
      %p526 = por %p524, %p525
      %p527 = scmp.ne.s32.totalorder %s515, %s516
      %p528 = scmp.eq.s32.totalorder %s32, 1
      %p529 = por %p527, %p528
      %p531 = scmp.ne.s32.totalorder %s516, %s530
      %p532 = scmp.eq.s32.totalorder %s32, 0
      %p533 = por %p531, %p532
      %p534 = scmp.le.s32.totalorder 1, %s26
      %p535 = scmp.lt.s32.totalorder %s26, 3
      %p536 = pnand %p534, %p535
      %p537 = pneg %p536
      // Predicated region
      $region9: #{transformer_forward.1} parent=5 // pred_check
        _
      $region10: #{transformer_forward.1} parent=5 // pred_check_branch
        %539 = sbr.rel (%p536) target = $region12
      $region11: #{transformer_forward.1} parent=5 // pred_region
        %s540 = ssub.s32 %s26, 1
        // Predicated region
        $region13: #{transformer_forward.1} parent=11 // pred_check
          %p541 = pneg %p47
        $region14: #{transformer_forward.1} parent=11 // pred_check_branch
          %543 = sbr.rel (%p541) target = $region16
        $region15: #{transformer_forward.1} parent=11 // pred_region
          _
        $region16: #{transformer_forward.1} parent=11 // pred_fallthru
          _
        // Predicated region
        $region17: #{transformer_forward.1} parent=11 // pred_check
          %p544 = pneg %p484
        $region18: #{transformer_forward.1} parent=11 // pred_check_branch
          %546 = sbr.rel (%p544) target = $region20
        $region19: #{transformer_forward.1} parent=11 // pred_region
          _
        $region20: #{transformer_forward.1} parent=11 // pred_fallthru
          _
        // Predicated region
        $region21: #{transformer_forward.1} parent=11 // pred_check
          %p547 = pneg %p505
        $region22: #{transformer_forward.1} parent=11 // pred_check_branch
          %549 = sbr.rel (%p547) target = $region24
        $region23: #{transformer_forward.1} parent=11 // pred_region
          _
        $region24: #{transformer_forward.1} parent=11 // pred_fallthru
          _
      $region12: #{transformer_forward.1} parent=5 // pred_fallthru
        _
      %p550 = scmp.lt.s32.totalorder %s26, 2
      // Predicated region
      $region25: #{transformer_forward.1} parent=5 // pred_check
        %p551 = pneg %p550
      $region26: #{transformer_forward.1} parent=5 // pred_check_branch
        %553 = sbr.rel (%p551) target = $region28
      $region27: #{transformer_forward.1} parent=5 // pred_region
        // Predicated region
        $region29: #{transformer_forward.1} parent=27 // pred_check
          %p554 = pneg %p67
        $region30: #{transformer_forward.1} parent=27 // pred_check_branch
          %556 = sbr.rel (%p554) target = $region32
        $region31: #{transformer_forward.1} parent=27 // pred_region
          %p557 = scmp.lt.s32.totalorder %s26, 1
          %s558 = scalar_select %p557, %s26, 1
          %s559 = smul.addr %s558, 4
          %s560 = smul.addr %s559, 4
          %s561 = scalar_lea.vmem %s1, %s560
        $region32: #{transformer_forward.1} parent=27 // pred_fallthru
          _
        // Predicated region
        $region33: #{transformer_forward.1} parent=27 // pred_check
          %p562 = pneg %p93
        $region34: #{transformer_forward.1} parent=27 // pred_check_branch
          %564 = sbr.rel (%p562) target = $region36
        $region35: #{transformer_forward.1} parent=27 // pred_region
          %p565 = scmp.lt.s32.totalorder %s26, 1
          %s566 = scalar_select %p565, %s26, 1
          %s567 = smul.addr %s566, 4
          %s568 = smul.addr %s567, 4
          %s569 = scalar_lea.vmem %s2, %s568
        $region36: #{transformer_forward.1} parent=27 // pred_fallthru
          _
        // Predicated region
        $region37: #{transformer_forward.1} parent=27 // pred_check
          %p570 = pneg %p119
        $region38: #{transformer_forward.1} parent=27 // pred_check_branch
          %572 = sbr.rel (%p570) target = $region40
        $region39: #{transformer_forward.1} parent=27 // pred_region
          %p573 = scmp.lt.s32.totalorder %s26, 1
          %s574 = scalar_select %p573, %s26, 1
          %s575 = smul.addr %s574, 4
          %s576 = smul.addr %s575, 4
          %s577 = scalar_lea.vmem %s3, %s576
        $region40: #{transformer_forward.1} parent=27 // pred_fallthru
          _
        // Predicated region
        $region41: #{transformer_forward.1} parent=27 // pred_check
          %p578 = pneg %p145
        $region42: #{transformer_forward.1} parent=27 // pred_check_branch
          %580 = sbr.rel (%p578) target = $region44
        $region43: #{transformer_forward.1} parent=27 // pred_region
          %p581 = scmp.lt.s32.totalorder %s26, 1
          %s582 = scalar_select %p581, %s26, 1
          %s583 = scalar_lea.vmem %s4, %s582
        $region44: #{transformer_forward.1} parent=27 // pred_fallthru
          _
        // Predicated region
        $region45: #{transformer_forward.1} parent=27 // pred_check
          %p584 = pneg %p171
        $region46: #{transformer_forward.1} parent=27 // pred_check_branch
          %586 = sbr.rel (%p584) target = $region48
        $region47: #{transformer_forward.1} parent=27 // pred_region
          %p587 = scmp.lt.s32.totalorder %s26, 1
          %s588 = scalar_select %p587, %s26, 1
          %s589 = scalar_lea.vmem %s5, %s588
        $region48: #{transformer_forward.1} parent=27 // pred_fallthru
          _
        // Predicated region
        $region49: #{transformer_forward.1} parent=27 // pred_check
          %p590 = pneg %p197
        $region50: #{transformer_forward.1} parent=27 // pred_check_branch
          %592 = sbr.rel (%p590) target = $region52
        $region51: #{transformer_forward.1} parent=27 // pred_region
          %p593 = scmp.lt.s32.totalorder %s26, 1
          %s594 = scalar_select %p593, %s26, 1
          %s595 = scalar_lea.vmem %s6, %s594
        $region52: #{transformer_forward.1} parent=27 // pred_fallthru
          _
        // Predicated region
        $region53: #{transformer_forward.1} parent=27 // pred_check
          %p596 = pneg %p223
        $region54: #{transformer_forward.1} parent=27 // pred_check_branch
          %598 = sbr.rel (%p596) target = $region56
        $region55: #{transformer_forward.1} parent=27 // pred_region
          %p599 = scmp.lt.s32.totalorder %s26, 1
          %s600 = scalar_select %p599, %s26, 1
          %s601 = smul.addr %s600, 4
          %s602 = smul.addr %s601, 4
          %s603 = scalar_lea.vmem %s7, %s602
        $region56: #{transformer_forward.1} parent=27 // pred_fallthru
          _
        // Predicated region
        $region57: #{transformer_forward.1} parent=27 // pred_check
          %p604 = pneg %p249
        $region58: #{transformer_forward.1} parent=27 // pred_check_branch
          %606 = sbr.rel (%p604) target = $region60
        $region59: #{transformer_forward.1} parent=27 // pred_region
          %p607 = scmp.lt.s32.totalorder %s26, 1
          %s608 = scalar_select %p607, %s26, 1
          %s609 = scalar_lea.vmem %s8, %s608
        $region60: #{transformer_forward.1} parent=27 // pred_fallthru
          _
        // Predicated region
        $region61: #{transformer_forward.1} parent=27 // pred_check
          %p610 = pneg %p275
        $region62: #{transformer_forward.1} parent=27 // pred_check_branch
          %612 = sbr.rel (%p610) target = $region64
        $region63: #{transformer_forward.1} parent=27 // pred_region
          %p613 = scmp.lt.s32.totalorder %s26, 1
          %s614 = scalar_select %p613, %s26, 1
          %s615 = scalar_lea.vmem %s9, %s614
        $region64: #{transformer_forward.1} parent=27 // pred_fallthru
          _
        // Predicated region
        $region65: #{transformer_forward.1} parent=27 // pred_check
          %p616 = pneg %p301
        $region66: #{transformer_forward.1} parent=27 // pred_check_branch
          %618 = sbr.rel (%p616) target = $region68
        $region67: #{transformer_forward.1} parent=27 // pred_region
          %p619 = scmp.lt.s32.totalorder %s26, 1
          %s620 = scalar_select %p619, %s26, 1
          %s621 = scalar_lea.vmem %s10, %s620
        $region68: #{transformer_forward.1} parent=27 // pred_fallthru
          _
        // Predicated region
        $region69: #{transformer_forward.1} parent=27 // pred_check
          %p622 = pneg %p327
        $region70: #{transformer_forward.1} parent=27 // pred_check_branch
          %624 = sbr.rel (%p622) target = $region72
        $region71: #{transformer_forward.1} parent=27 // pred_region
          %p625 = scmp.lt.s32.totalorder %s26, 1
          %s626 = scalar_select %p625, %s26, 1
          %s627 = scalar_lea.vmem %s11, %s626
        $region72: #{transformer_forward.1} parent=27 // pred_fallthru
          _
        // Predicated region
        $region73: #{transformer_forward.1} parent=27 // pred_check
          %p628 = pneg %p353
        $region74: #{transformer_forward.1} parent=27 // pred_check_branch
          %630 = sbr.rel (%p628) target = $region76
        $region75: #{transformer_forward.1} parent=27 // pred_region
          %p631 = scmp.lt.s32.totalorder %s26, 1
          %s632 = scalar_select %p631, %s26, 1
          %s633 = scalar_lea.vmem %s12, %s632
        $region76: #{transformer_forward.1} parent=27 // pred_fallthru
          _
        // Predicated region
        $region77: #{transformer_forward.1} parent=27 // pred_check
          %p634 = pneg %p379
        $region78: #{transformer_forward.1} parent=27 // pred_check_branch
          %636 = sbr.rel (%p634) target = $region80
        $region79: #{transformer_forward.1} parent=27 // pred_region
          %p637 = scmp.lt.s32.totalorder %s26, 1
          %s638 = scalar_select %p637, %s26, 1
          %s639 = smul.addr %s638, 64
          %s640 = smul.addr %s639, 4
          %s641 = scalar_lea.vmem %s13, %s640
        $region80: #{transformer_forward.1} parent=27 // pred_fallthru
          _
        // Predicated region
        $region81: #{transformer_forward.1} parent=27 // pred_check
          %p642 = pneg %p405
        $region82: #{transformer_forward.1} parent=27 // pred_check_branch
          %644 = sbr.rel (%p642) target = $region84
        $region83: #{transformer_forward.1} parent=27 // pred_region
          %p645 = scmp.lt.s32.totalorder %s26, 1
          %s646 = scalar_select %p645, %s26, 1
          %s647 = smul.addr %s646, 16
          %s648 = scalar_lea.vmem %s14, %s647
        $region84: #{transformer_forward.1} parent=27 // pred_fallthru
          _
        // Predicated region
        $region85: #{transformer_forward.1} parent=27 // pred_check
          %p649 = pneg %p431
        $region86: #{transformer_forward.1} parent=27 // pred_check_branch
          %651 = sbr.rel (%p649) target = $region88
        $region87: #{transformer_forward.1} parent=27 // pred_region
          %p652 = scmp.lt.s32.totalorder %s26, 1
          %s653 = scalar_select %p652, %s26, 1
          %s654 = smul.addr %s653, 256
          %s655 = smul.addr %s654, 4
          %s656 = scalar_lea.vmem %s15, %s655
        $region88: #{transformer_forward.1} parent=27 // pred_fallthru
          _
        // Predicated region
        $region89: #{transformer_forward.1} parent=27 // pred_check
          %p657 = pneg %p457
        $region90: #{transformer_forward.1} parent=27 // pred_check_branch
          %659 = sbr.rel (%p657) target = $region92
        $region91: #{transformer_forward.1} parent=27 // pred_region
          %p660 = scmp.lt.s32.totalorder %s26, 1
          %s661 = scalar_select %p660, %s26, 1
          %s662 = scalar_lea.vmem %s16, %s661
        $region92: #{transformer_forward.1} parent=27 // pred_fallthru
          _
      $region28: #{transformer_forward.1} parent=5 // pred_fallthru
        _
      %p663 = scmp.le.s32.totalorder 1, %s26
      %p664 = scmp.lt.s32.totalorder %s26, 3
      %p665 = pnand %p663, %p664
      %p666 = pneg %p665
      // Predicated region
      $region93: #{transformer_forward.1} parent=5 // pred_check
        _
      $region94: #{transformer_forward.1} parent=5 // pred_check_branch
        %668 = sbr.rel (%p665) target = $region96
      $region95: #{transformer_forward.1} parent=5 // pred_region
        %s669 = ssub.s32 %s26, 1
        %p670 = pneg %p47
        %p671 = pneg %p44
        %p672 = scmp.lt.s32.totalorder %s31, 1
        %s673 = scalar_select %p672, %s31, 1
        %s674 = smul.addr %s673, 4
        %s675 = smul.addr %s674, 4
        %s676 = scalar_lea.vmem %s1, %s675
        %p677 = pneg %p73
        %p678 = pneg %p70
        %p679 = scmp.lt.s32.totalorder %s31, 1
        %s680 = scalar_select %p679, %s31, 1
        %s681 = smul.addr %s680, 4
        %s682 = smul.addr %s681, 4
        %s683 = scalar_lea.vmem %s2, %s682
        %p684 = pneg %p99
        %p685 = pneg %p96
        %p686 = scmp.lt.s32.totalorder %s31, 1
        %s687 = scalar_select %p686, %s31, 1
        %s688 = smul.addr %s687, 4
        %s689 = smul.addr %s688, 4
        %s690 = scalar_lea.vmem %s3, %s689
        %p691 = pneg %p125
        %p692 = pneg %p122
        %p693 = scmp.lt.s32.totalorder %s31, 1
        %s694 = scalar_select %p693, %s31, 1
        %s695 = scalar_lea.vmem %s4, %s694
        %p696 = pneg %p151
        %p697 = pneg %p148
        %p698 = scmp.lt.s32.totalorder %s31, 1
        %s699 = scalar_select %p698, %s31, 1
        %s700 = scalar_lea.vmem %s5, %s699
        %p701 = pneg %p177
        %p702 = pneg %p174
        %p703 = scmp.lt.s32.totalorder %s31, 1
        %s704 = scalar_select %p703, %s31, 1
        %s705 = scalar_lea.vmem %s6, %s704
        %p706 = pneg %p203
        %p707 = pneg %p200
        %p708 = scmp.lt.s32.totalorder %s31, 1
        %s709 = scalar_select %p708, %s31, 1
        %s710 = smul.addr %s709, 4
        %s711 = smul.addr %s710, 4
        %s712 = scalar_lea.vmem %s7, %s711
        %p713 = pneg %p229
        %p714 = pneg %p226
        %p715 = scmp.lt.s32.totalorder %s31, 1
        %s716 = scalar_select %p715, %s31, 1
        %s717 = scalar_lea.vmem %s8, %s716
        %p718 = pneg %p255
        %p719 = pneg %p252
        %p720 = scmp.lt.s32.totalorder %s31, 1
        %s721 = scalar_select %p720, %s31, 1
        %s722 = scalar_lea.vmem %s9, %s721
        %p723 = pneg %p281
        %p724 = pneg %p278
        %p725 = scmp.lt.s32.totalorder %s31, 1
        %s726 = scalar_select %p725, %s31, 1
        %s727 = scalar_lea.vmem %s10, %s726
        %p728 = pneg %p307
        %p729 = pneg %p304
        %p730 = scmp.lt.s32.totalorder %s31, 1
        %s731 = scalar_select %p730, %s31, 1
        %s732 = scalar_lea.vmem %s11, %s731
        %p733 = pneg %p333
        %p734 = pneg %p330
        %p735 = scmp.lt.s32.totalorder %s31, 1
        %s736 = scalar_select %p735, %s31, 1
        %s737 = scalar_lea.vmem %s12, %s736
        %p738 = pneg %p359
        %p739 = pneg %p356
        %p740 = scmp.lt.s32.totalorder %s31, 1
        %s741 = scalar_select %p740, %s31, 1
        %s742 = smul.addr %s741, 64
        %s743 = smul.addr %s742, 4
        %s744 = scalar_lea.vmem %s13, %s743
        %p745 = pneg %p385
        %p746 = pneg %p382
        %p747 = scmp.lt.s32.totalorder %s31, 1
        %s748 = scalar_select %p747, %s31, 1
        %s749 = smul.addr %s748, 16
        %s750 = scalar_lea.vmem %s14, %s749
        %p751 = pneg %p411
        %p752 = pneg %p408
        %p753 = scmp.lt.s32.totalorder %s31, 1
        %s754 = scalar_select %p753, %s31, 1
        %s755 = smul.addr %s754, 256
        %s756 = smul.addr %s755, 4
        %s757 = scalar_lea.vmem %s15, %s756
        %p758 = pneg %p437
        %p759 = pneg %p434
        %p760 = scmp.lt.s32.totalorder %s31, 1
        %s761 = scalar_select %p760, %s31, 1
        %s762 = scalar_lea.vmem %s16, %s761
        %p763 = pneg %p463
        %p764 = pneg %p460
        %p765 = pneg %p484
        %p766 = pneg %p481
        %p767 = pneg %p505
        %p768 = pneg %p502
        %p769 = pneg %p526
        %p770 = pneg %p523
        %p771 = scmp.lt.s32.totalorder %s31, 1
        %s772 = scalar_select %p771, %s31, 1
        %s773 = smul.addr %s772, 4
        %s774 = smul.addr %s773, 4
        %s775 = scalar_lea.vmem %s1, %s774
        %p776 = scmp.lt.s32.totalorder %s31, 1
        %s777 = scalar_select %p776, %s31, 1
        %s778 = smul.addr %s777, 4
        %s779 = smul.addr %s778, 4
        %s780 = scalar_lea.vmem %s2, %s779
        %p781 = scmp.lt.s32.totalorder %s31, 1
        %s782 = scalar_select %p781, %s31, 1
        %s783 = smul.addr %s782, 4
        %s784 = smul.addr %s783, 4
        %s785 = scalar_lea.vmem %s3, %s784
        %p786 = scmp.lt.s32.totalorder %s31, 1
        %s787 = scalar_select %p786, %s31, 1
        %s788 = scalar_lea.vmem %s4, %s787
        %p789 = scmp.lt.s32.totalorder %s31, 1
        %s790 = scalar_select %p789, %s31, 1
        %s791 = scalar_lea.vmem %s5, %s790
        %p792 = scmp.lt.s32.totalorder %s31, 1
        %s793 = scalar_select %p792, %s31, 1
        %s794 = scalar_lea.vmem %s6, %s793
        %p795 = scmp.lt.s32.totalorder %s31, 1
        %s796 = scalar_select %p795, %s31, 1
        %s797 = smul.addr %s796, 4
        %s798 = smul.addr %s797, 4
        %s799 = scalar_lea.vmem %s7, %s798
        %p800 = scmp.lt.s32.totalorder %s31, 1
        %s801 = scalar_select %p800, %s31, 1
        %s802 = scalar_lea.vmem %s8, %s801
        %p803 = scmp.lt.s32.totalorder %s31, 1
        %s804 = scalar_select %p803, %s31, 1
        %s805 = scalar_lea.vmem %s9, %s804
        %p806 = scmp.lt.s32.totalorder %s31, 1
        %s807 = scalar_select %p806, %s31, 1
        %s808 = scalar_lea.vmem %s10, %s807
        %p809 = scmp.lt.s32.totalorder %s31, 1
        %s810 = scalar_select %p809, %s31, 1
        %s811 = scalar_lea.vmem %s11, %s810
        %p812 = scmp.lt.s32.totalorder %s31, 1
        %s813 = scalar_select %p812, %s31, 1
        %s814 = scalar_lea.vmem %s12, %s813
        %p815 = scmp.lt.s32.totalorder %s31, 1
        %s816 = scalar_select %p815, %s31, 1
        %s817 = smul.addr %s816, 64
        %s818 = smul.addr %s817, 4
        %s819 = scalar_lea.vmem %s13, %s818
        %p820 = scmp.lt.s32.totalorder %s31, 1
        %s821 = scalar_select %p820, %s31, 1
        %s822 = smul.addr %s821, 16
        %s823 = scalar_lea.vmem %s14, %s822
        %p824 = scmp.lt.s32.totalorder %s31, 1
        %s825 = scalar_select %p824, %s31, 1
        %s826 = smul.addr %s825, 256
        %s827 = smul.addr %s826, 4
        %s828 = scalar_lea.vmem %s15, %s827
        %p829 = scmp.lt.s32.totalorder %s31, 1
        %s830 = scalar_select %p829, %s31, 1
        %s831 = scalar_lea.vmem %s16, %s830
        %p833 = scmp.eq.s32.totalorder %s31, 0
        // Predicated region
        $region97: #{transformer_forward.1} parent=95 // pred_check
          %p834 = pneg %p833
        $region98: #{transformer_forward.1} parent=95 // pred_check_branch
          %836 = sbr.rel (%p834) target = $region100
        $region99: #{transformer_forward.1} parent=95 // pred_region
          %v837 = vld [vmem:[%s0] sm:$0xff]
          %v838 = vld [vmem:[%s0 + $0x8] sm:$0xff]
          %vm839 = vcmask 261120
          %840 = vst.msk [vmem:[#allocation2] sm:$0xff] %vm839, %v837
          %841 = vst.msk [vmem:[#allocation2 + $0x8] sm:$0xff] %vm839, %v838
        $region100: #{transformer_forward.1} parent=95 // pred_fallthru
          _
        %v842 = vld [vmem:[#allocation2] sm:$0xff]
        %v843 = vld [vmem:[#allocation2 + $0x8] sm:$0xff]
        %v844 = vpack.c.bf16 %v843, %v842
        %v845 = vld [vmem:[%s775] sm:$0xf]
        %v846 = vld [vmem:[%s775 + $0x4] sm:$0xf]
        %v847 = vld [vmem:[%s775 + $0x8] sm:$0xf]
        %v848 = vld [vmem:[%s775 + $0xc] sm:$0xf]
        %v849 = vld [vmem:[%s788] sm:$0x1]
        %v851 = vlaneseq
        %v852 = vshrl.u32 %v851, 7
        %v853 = vsub.s32 0, %v852
        %v854 = vrot.slane %v849, %v853
        %v860 = vunpack.c.l.b16 %v845
        %v861 = vunpack.c.l.b16 %v846
        %v862 = vunpack.c.l.b16 %v847
        %v863 = vunpack.c.l.b16 %v848
        %v864 = vpack.c.b16 %v861, %v860
        %v865 = vpack.c.b16 %v863, %v862
        %vm868 = vcmask 261120
        %v870 = vsel %vm868, %v844, 0
        %872 = vmatprep.subr.bf16.mxu0 0
        %873 = vmatpush1.bf16.msra.mxu0 0
        %874 = vmatprep.subr.bf16.mxu0 0
        %875 = vmatpush1.bf16.msra.mxu0 0
        %876 = vmatprep.subr.bf16.mxu0 0
        %877 = vmatpush1.bf16.msra.mxu0 0
        %878 = vmatprep.subr.bf16.mxu0 0
        %879 = vmatpush1.bf16.msra.mxu0 0
        %880 = vmatprep.subr.bf16.mxu0 0
        %881 = vmatpush1.bf16.msra.mxu0 0
        %882 = vmatprep.subr.bf16.mxu0 0
        %883 = vmatpush1.bf16.msra.mxu0 0
        %884 = vmatprep.subr.bf16.mxu0 0
        %885 = vmatpush1.bf16.msra.mxu0 %v865
        %886 = vmatprep.subr.bf16.mxu0 0
        %887 = vmatpush1.bf16.msra.mxu0 %v864
        %888 = vmatprep.subr.bf16.mxu0 0
        %889 = vmatpush2.bf16.msra.mxu0 0
        %890 = vmatprep.subr.bf16.mxu0 0
        %891 = vmatpush2.bf16.msra.mxu0 0
        %892 = vmatprep.subr.bf16.mxu0 0
        %893 = vmatpush2.bf16.msra.mxu0 0
        %894 = vmatprep.subr.bf16.mxu0 0
        %895 = vmatpush2.bf16.msra.mxu0 0
        %896 = vmatprep.subr.bf16.mxu0 0
        %897 = vmatpush2.bf16.msra.mxu0 0
        %898 = vmatprep.subr.bf16.mxu0 0
        %899 = vmatpush2.bf16.msra.mxu0 0
        %900 = vmatprep.subr.bf16.mxu0 0
        %901 = vmatpush2.bf16.msra.mxu0 0
        %902 = vmatprep.subr.bf16.mxu0 0
        %903 = vmatpush2.bf16.msra.mxu0 0
        %904 = vmatprep.mubr.bf16.mxu0 0
        %905 = vmatmul.mubr.bf16.gmra.mxu0 %v870
        %v906 = vpop.f32.mrf.mxu0
        %v907 = vadd.f32 %v854, %v906
        %v908 = vpop.f32.mrf.mxu0
        %v909 = vpop.f32.mrf.mxu0
        %v910 = vadd.f32 %v854, %v909
        %v911 = vpop.f32.mrf.mxu0
        %912 = vdwg.mxu0
        %v913 = vpack.c.bf16 %v907, %v907
        %v914 = vpack.c.bf16 %v910, %v910
        %v915 = vld [vmem:[%s780] sm:$0xf]
        %v916 = vld [vmem:[%s780 + $0x4] sm:$0xf]
        %v917 = vld [vmem:[%s780 + $0x8] sm:$0xf]
        %v918 = vld [vmem:[%s780 + $0xc] sm:$0xf]
        %v919 = vld [vmem:[%s791] sm:$0x1]
        %v921 = vlaneseq
        %v922 = vshrl.u32 %v921, 7
        %v923 = vsub.s32 0, %v922
        %v924 = vrot.slane %v919, %v923
        %v930 = vunpack.c.l.b16 %v915
        %v931 = vunpack.c.l.b16 %v916
        %v932 = vunpack.c.l.b16 %v917
        %v933 = vunpack.c.l.b16 %v918
        %v934 = vpack.c.b16 %v931, %v930
        %v935 = vpack.c.b16 %v933, %v932
        %938 = vmatprep.subr.bf16.mxu0 0
        %939 = vmatpush1.bf16.msra.mxu0 0
        %940 = vmatprep.subr.bf16.mxu0 0
        %941 = vmatpush1.bf16.msra.mxu0 0
        %942 = vmatprep.subr.bf16.mxu0 0
        %943 = vmatpush1.bf16.msra.mxu0 0
        %944 = vmatprep.subr.bf16.mxu0 0
        %945 = vmatpush1.bf16.msra.mxu0 0
        %946 = vmatprep.subr.bf16.mxu0 0
        %947 = vmatpush1.bf16.msra.mxu0 0
        %948 = vmatprep.subr.bf16.mxu0 0
        %949 = vmatpush1.bf16.msra.mxu0 0
        %950 = vmatprep.subr.bf16.mxu0 0
        %951 = vmatpush1.bf16.msra.mxu0 %v935
        %952 = vmatprep.subr.bf16.mxu0 0
        %953 = vmatpush1.bf16.msra.mxu0 %v934
        %954 = vmatprep.subr.bf16.mxu0 0
        %955 = vmatpush2.bf16.msra.mxu0 0
        %956 = vmatprep.subr.bf16.mxu0 0
        %957 = vmatpush2.bf16.msra.mxu0 0
        %958 = vmatprep.subr.bf16.mxu0 0
        %959 = vmatpush2.bf16.msra.mxu0 0
        %960 = vmatprep.subr.bf16.mxu0 0
        %961 = vmatpush2.bf16.msra.mxu0 0
        %962 = vmatprep.subr.bf16.mxu0 0
        %963 = vmatpush2.bf16.msra.mxu0 0
        %964 = vmatprep.subr.bf16.mxu0 0
        %965 = vmatpush2.bf16.msra.mxu0 0
        %966 = vmatprep.subr.bf16.mxu0 0
        %967 = vmatpush2.bf16.msra.mxu0 0
        %968 = vmatprep.subr.bf16.mxu0 0
        %969 = vmatpush2.bf16.msra.mxu0 0
        %970 = vmatprep.mubr.bf16.mxu0 0
        %971 = vmatmul.mubr.bf16.gmra.mxu0 %v870
        %v972 = vpop.f32.mrf.mxu0
        %v973 = vadd.f32 %v924, %v972
        %v974 = vpop.f32.mrf.mxu0
        %v975 = vpop.f32.mrf.mxu0
        %v976 = vadd.f32 %v924, %v975
        %v977 = vpop.f32.mrf.mxu0
        %978 = vdwg.mxu0
        %v979 = vpack.c.bf16 %v973, %v973
        %v980 = vpack.c.bf16 %v976, %v976
        %v981 = vld [vmem:[%s785] sm:$0xf]
        %v982 = vld [vmem:[%s785 + $0x4] sm:$0xf]
        %v983 = vld [vmem:[%s785 + $0x8] sm:$0xf]
        %v984 = vld [vmem:[%s785 + $0xc] sm:$0xf]
        %v985 = vld [vmem:[%s794] sm:$0x1]
        %v987 = vlaneseq
        %v988 = vshrl.u32 %v987, 7
        %v989 = vsub.s32 0, %v988
        %v990 = vrot.slane %v985, %v989
        %v996 = vunpack.c.l.b16 %v981
        %v997 = vunpack.c.l.b16 %v982
        %v998 = vunpack.c.l.b16 %v983
        %v999 = vunpack.c.l.b16 %v984
        %v1000 = vpack.c.b16 %v997, %v996
        %v1001 = vpack.c.b16 %v999, %v998
        %1004 = vmatprep.subr.bf16.mxu0 0
        %1005 = vmatpush1.bf16.msra.mxu0 0
        %1006 = vmatprep.subr.bf16.mxu0 0
        %1007 = vmatpush1.bf16.msra.mxu0 0
        %1008 = vmatprep.subr.bf16.mxu0 0
        %1009 = vmatpush1.bf16.msra.mxu0 0
        %1010 = vmatprep.subr.bf16.mxu0 0
        %1011 = vmatpush1.bf16.msra.mxu0 0
        %1012 = vmatprep.subr.bf16.mxu0 0
        %1013 = vmatpush1.bf16.msra.mxu0 0
        %1014 = vmatprep.subr.bf16.mxu0 0
        %1015 = vmatpush1.bf16.msra.mxu0 0
        %1016 = vmatprep.subr.bf16.mxu0 0
        %1017 = vmatpush1.bf16.msra.mxu0 %v1001
        %1018 = vmatprep.subr.bf16.mxu0 0
        %1019 = vmatpush1.bf16.msra.mxu0 %v1000
        %1020 = vmatprep.subr.bf16.mxu0 0
        %1021 = vmatpush2.bf16.msra.mxu0 0
        %1022 = vmatprep.subr.bf16.mxu0 0
        %1023 = vmatpush2.bf16.msra.mxu0 0
        %1024 = vmatprep.subr.bf16.mxu0 0
        %1025 = vmatpush2.bf16.msra.mxu0 0
        %1026 = vmatprep.subr.bf16.mxu0 0
        %1027 = vmatpush2.bf16.msra.mxu0 0
        %1028 = vmatprep.subr.bf16.mxu0 0
        %1029 = vmatpush2.bf16.msra.mxu0 0
        %1030 = vmatprep.subr.bf16.mxu0 0
        %1031 = vmatpush2.bf16.msra.mxu0 0
        %1032 = vmatprep.subr.bf16.mxu0 0
        %1033 = vmatpush2.bf16.msra.mxu0 0
        %1034 = vmatprep.subr.bf16.mxu0 0
        %1035 = vmatpush2.bf16.msra.mxu0 0
        %1036 = vmatprep.mubr.bf16.mxu0 0
        %1037 = vmatmul.mubr.bf16.gmra.mxu0 %v870
        %v1038 = vpop.f32.mrf.mxu0
        %v1039 = vadd.f32 %v990, %v1038
        %v1040 = vpop.f32.mrf.mxu0
        %v1041 = vpop.f32.mrf.mxu0
        %v1042 = vadd.f32 %v990, %v1041
        %v1043 = vpop.f32.mrf.mxu0
        %1044 = vdwg.mxu0
        %v1045 = vpack.c.bf16 %v1039, %v1039
        %v1046 = vpack.c.bf16 %v1042, %v1042
        %v1047 = vlaneseq
        %v1048 = vand.u32 %v1047, 127
        %vm1049 = vcmp.ge.s32.totalorder %v1048, 0
        %vm1050 = vcmp.lt.s32.totalorder %v1048, 8
        %vm1051 = vmand %vm1049, %vm1050
        %v1052 = vsel %vm1051, 1.0, 0.0
        %v1053 = vpack.c.bf16 %v1052, %v1052
        %v1054 = vmul.bf16 %v979, %v1053
        %v1055 = vmul.bf16 %v980, %v1053
        %v1057 = vsel %vm868, %v913, 0
        %v1060 = vsel %vm868, %v1054, 0
        %1062 = vmatprep.subr.bf16.mxu0 0
        %1063 = vmatpush1.bf16.xpose.msra.mxu0 0
        %1064 = vmatprep.subr.bf16.mxu0 0
        %1065 = vmatpush1.bf16.xpose.msra.mxu0 0
        %1066 = vmatprep.subr.bf16.mxu0 0
        %1067 = vmatpush1.bf16.xpose.msra.mxu0 0
        %1068 = vmatprep.subr.bf16.mxu0 0
        %1069 = vmatpush1.bf16.xpose.msra.mxu0 0
        %1070 = vmatprep.subr.bf16.mxu0 0
        %1071 = vmatpush1.bf16.xpose.msra.mxu0 0
        %1072 = vmatprep.subr.bf16.mxu0 0
        %1073 = vmatpush1.bf16.xpose.msra.mxu0 0
        %1074 = vmatprep.subr.bf16.mxu0 0
        %1075 = vmatpush1.bf16.xpose.msra.mxu0 0
        %1076 = vmatprep.subr.bf16.mxu0 0
        %1077 = vmatpush1.bf16.xpose.msra.mxu0 %v1060
        %1078 = vmatprep.subr.bf16.mxu0 0
        %1079 = vmatpush2.bf16.xpose.msra.mxu0 0
        %1080 = vmatprep.subr.bf16.mxu0 0
        %1081 = vmatpush2.bf16.xpose.msra.mxu0 0
        %1082 = vmatprep.subr.bf16.mxu0 0
        %1083 = vmatpush2.bf16.xpose.msra.mxu0 0
        %1084 = vmatprep.subr.bf16.mxu0 0
        %1085 = vmatpush2.bf16.xpose.msra.mxu0 0
        %1086 = vmatprep.subr.bf16.mxu0 0
        %1087 = vmatpush2.bf16.xpose.msra.mxu0 0
        %1088 = vmatprep.subr.bf16.mxu0 0
        %1089 = vmatpush2.bf16.xpose.msra.mxu0 0
        %1090 = vmatprep.subr.bf16.mxu0 0
        %1091 = vmatpush2.bf16.xpose.msra.mxu0 0
        %1092 = vmatprep.subr.bf16.mxu0 0
        %1093 = vmatpush2.bf16.xpose.msra.mxu0 0
        %1094 = vmatprep.mubr.bf16.mxu0 0
        %1095 = vmatmul.mubr.bf16.gmra.mxu0 %v1057
        %v1096 = vpop.f32.mrf.mxu0
        %v1097 = vadd.f32 0.0, %v1096
        %v1098 = vpop.f32.mrf.mxu0
        %v1099 = vpop.f32.mrf.mxu0
        %v1100 = vpop.f32.mrf.mxu0
        %1101 = vdwg.mxu0
        %v1103 = vsel %vm868, %v914, 0
        %v1106 = vsel %vm868, %v1055, 0
        %1108 = vmatprep.subr.bf16.mxu0 0
        %1109 = vmatpush1.bf16.xpose.msra.mxu0 0
        %1110 = vmatprep.subr.bf16.mxu0 0
        %1111 = vmatpush1.bf16.xpose.msra.mxu0 0
        %1112 = vmatprep.subr.bf16.mxu0 0
        %1113 = vmatpush1.bf16.xpose.msra.mxu0 0
        %1114 = vmatprep.subr.bf16.mxu0 0
        %1115 = vmatpush1.bf16.xpose.msra.mxu0 0
        %1116 = vmatprep.subr.bf16.mxu0 0
        %1117 = vmatpush1.bf16.xpose.msra.mxu0 0
        %1118 = vmatprep.subr.bf16.mxu0 0
        %1119 = vmatpush1.bf16.xpose.msra.mxu0 0
        %1120 = vmatprep.subr.bf16.mxu0 0
        %1121 = vmatpush1.bf16.xpose.msra.mxu0 0
        %1122 = vmatprep.subr.bf16.mxu0 0
        %1123 = vmatpush1.bf16.xpose.msra.mxu0 %v1106
        %1124 = vmatprep.subr.bf16.mxu0 0
        %1125 = vmatpush2.bf16.xpose.msra.mxu0 0
        %1126 = vmatprep.subr.bf16.mxu0 0
        %1127 = vmatpush2.bf16.xpose.msra.mxu0 0
        %1128 = vmatprep.subr.bf16.mxu0 0
        %1129 = vmatpush2.bf16.xpose.msra.mxu0 0
        %1130 = vmatprep.subr.bf16.mxu0 0
        %1131 = vmatpush2.bf16.xpose.msra.mxu0 0
        %1132 = vmatprep.subr.bf16.mxu0 0
        %1133 = vmatpush2.bf16.xpose.msra.mxu0 0
        %1134 = vmatprep.subr.bf16.mxu0 0
        %1135 = vmatpush2.bf16.xpose.msra.mxu0 0
        %1136 = vmatprep.subr.bf16.mxu0 0
        %1137 = vmatpush2.bf16.xpose.msra.mxu0 0
        %1138 = vmatprep.subr.bf16.mxu0 0
        %1139 = vmatpush2.bf16.xpose.msra.mxu0 0
        %1140 = vmatprep.mubr.bf16.mxu0 0
        %1141 = vmatmul.mubr.bf16.gmra.mxu0 %v1103
        %v1142 = vpop.f32.mrf.mxu0
        %v1143 = vadd.f32 0.0, %v1142
        %v1144 = vpop.f32.mrf.mxu0
        %v1145 = vpop.f32.mrf.mxu0
        %v1146 = vpop.f32.mrf.mxu0
        %1147 = vdwg.mxu0
        %v1148 = vmul.f32 %v1097, 0.35355338
        %v1149 = vmul.f32 %v1143, 0.35355338
        %vm1150 = vcmask 64512
        %v1151 = vsel %vm1150, %v1148, -inf
        %1152 = vmax.xlane.f32.xlu0 %v1151
        %v1153 = vpop.xlane.xlu0 %1152
        %v1154 = vsel %vm1150, %v1149, -inf
        %1155 = vmax.xlane.f32.xlu0 %v1154
        %v1156 = vpop.xlane.xlu0 %1155
        %v1157 = vsub.f32 %v1148, %v1153
        %v1158 = vsub.f32 %v1149, %v1156
        %v1159 = vmul.f32 %v1157, 1.442695
        %v1160 = vpow.pop %v1159
        %v1161 = vmul.f32 %v1158, 1.442695
        %v1162 = vpow.pop %v1161
        %v1163 = vsel %vm1150, %v1160, 0.0
        %1164 = vadd.xlane.f32.xlu0 %v1163
        %v1165 = vpop.xlane.xlu0 %1164
        %v1166 = vsel %vm1150, %v1162, 0.0
        %1167 = vadd.xlane.f32.xlu0 %v1166
        %v1168 = vpop.xlane.xlu0 %1167
        %v1169 = vrcp.pop %v1165
        %v1170 = vrcp.pop %v1168
        %v1171 = vmul.f32 %v1160, %v1169
        %v1172 = vmul.f32 %v1162, %v1170
        %v1173 = vpack.c.bf16 %v1171, %v1171
        %v1174 = vpack.c.bf16 %v1172, %v1172
        %v1175 = vmul.bf16 %v1045, %v1053
        %v1176 = vmul.bf16 %v1046, %v1053
        %vm1177 = vcmp.ge.s32.totalorder %v1048, 8
        %vm1178 = vcmp.lt.s32.totalorder %v1048, 16
        %vm1179 = vmand %vm1177, %vm1178
        %v1180 = vsel %vm1179, 1.0, 0.0
        %v1181 = vpack.c.bf16 %v1180, %v1180
        %v1182 = vmul.bf16 %v979, %v1181
        %v1183 = vmul.bf16 %v980, %v1181
        %v1185 = vsel %vm868, %v1182, 0
        %1187 = vmatprep.subr.bf16.mxu0 0
        %1188 = vmatpush1.bf16.xpose.msra.mxu0 0
        %1189 = vmatprep.subr.bf16.mxu0 0
        %1190 = vmatpush1.bf16.xpose.msra.mxu0 0
        %1191 = vmatprep.subr.bf16.mxu0 0
        %1192 = vmatpush1.bf16.xpose.msra.mxu0 0
        %1193 = vmatprep.subr.bf16.mxu0 0
        %1194 = vmatpush1.bf16.xpose.msra.mxu0 0
        %1195 = vmatprep.subr.bf16.mxu0 0
        %1196 = vmatpush1.bf16.xpose.msra.mxu0 0
        %1197 = vmatprep.subr.bf16.mxu0 0
        %1198 = vmatpush1.bf16.xpose.msra.mxu0 0
        %1199 = vmatprep.subr.bf16.mxu0 0
        %1200 = vmatpush1.bf16.xpose.msra.mxu0 0
        %1201 = vmatprep.subr.bf16.mxu0 0
        %1202 = vmatpush1.bf16.xpose.msra.mxu0 %v1185
        %1203 = vmatprep.subr.bf16.mxu0 0
        %1204 = vmatpush2.bf16.xpose.msra.mxu0 0
        %1205 = vmatprep.subr.bf16.mxu0 0
        %1206 = vmatpush2.bf16.xpose.msra.mxu0 0
        %1207 = vmatprep.subr.bf16.mxu0 0
        %1208 = vmatpush2.bf16.xpose.msra.mxu0 0
        %1209 = vmatprep.subr.bf16.mxu0 0
        %1210 = vmatpush2.bf16.xpose.msra.mxu0 0
        %1211 = vmatprep.subr.bf16.mxu0 0
        %1212 = vmatpush2.bf16.xpose.msra.mxu0 0
        %1213 = vmatprep.subr.bf16.mxu0 0
        %1214 = vmatpush2.bf16.xpose.msra.mxu0 0
        %1215 = vmatprep.subr.bf16.mxu0 0
        %1216 = vmatpush2.bf16.xpose.msra.mxu0 0
        %1217 = vmatprep.subr.bf16.mxu0 0
        %1218 = vmatpush2.bf16.xpose.msra.mxu0 0
        %1219 = vmatprep.mubr.bf16.mxu0 0
        %1220 = vmatmul.mubr.bf16.gmra.mxu0 %v1057
        %v1221 = vpop.f32.mrf.mxu0
        %v1222 = vadd.f32 0.0, %v1221
        %v1223 = vpop.f32.mrf.mxu0
        %v1224 = vpop.f32.mrf.mxu0
        %v1225 = vpop.f32.mrf.mxu0
        %1226 = vdwg.mxu0
        %v1228 = vsel %vm868, %v1183, 0
        %1230 = vmatprep.subr.bf16.mxu0 0
        %1231 = vmatpush1.bf16.xpose.msra.mxu0 0
        %1232 = vmatprep.subr.bf16.mxu0 0
        %1233 = vmatpush1.bf16.xpose.msra.mxu0 0
        %1234 = vmatprep.subr.bf16.mxu0 0
        %1235 = vmatpush1.bf16.xpose.msra.mxu0 0
        %1236 = vmatprep.subr.bf16.mxu0 0
        %1237 = vmatpush1.bf16.xpose.msra.mxu0 0
        %1238 = vmatprep.subr.bf16.mxu0 0
        %1239 = vmatpush1.bf16.xpose.msra.mxu0 0
        %1240 = vmatprep.subr.bf16.mxu0 0
        %1241 = vmatpush1.bf16.xpose.msra.mxu0 0
        %1242 = vmatprep.subr.bf16.mxu0 0
        %1243 = vmatpush1.bf16.xpose.msra.mxu0 0
        %1244 = vmatprep.subr.bf16.mxu0 0
        %1245 = vmatpush1.bf16.xpose.msra.mxu0 %v1228
        %1246 = vmatprep.subr.bf16.mxu0 0
        %1247 = vmatpush2.bf16.xpose.msra.mxu0 0
        %1248 = vmatprep.subr.bf16.mxu0 0
        %1249 = vmatpush2.bf16.xpose.msra.mxu0 0
        %1250 = vmatprep.subr.bf16.mxu0 0
        %1251 = vmatpush2.bf16.xpose.msra.mxu0 0
        %1252 = vmatprep.subr.bf16.mxu0 0
        %1253 = vmatpush2.bf16.xpose.msra.mxu0 0
        %1254 = vmatprep.subr.bf16.mxu0 0
        %1255 = vmatpush2.bf16.xpose.msra.mxu0 0
        %1256 = vmatprep.subr.bf16.mxu0 0
        %1257 = vmatpush2.bf16.xpose.msra.mxu0 0
        %1258 = vmatprep.subr.bf16.mxu0 0
        %1259 = vmatpush2.bf16.xpose.msra.mxu0 0
        %1260 = vmatprep.subr.bf16.mxu0 0
        %1261 = vmatpush2.bf16.xpose.msra.mxu0 0
        %1262 = vmatprep.mubr.bf16.mxu0 0
        %1263 = vmatmul.mubr.bf16.gmra.mxu0 %v1103
        %v1264 = vpop.f32.mrf.mxu0
        %v1265 = vadd.f32 0.0, %v1264
        %v1266 = vpop.f32.mrf.mxu0
        %v1267 = vpop.f32.mrf.mxu0
        %v1268 = vpop.f32.mrf.mxu0
        %1269 = vdwg.mxu0
        %v1270 = vmul.f32 %v1222, 0.35355338
        %v1271 = vmul.f32 %v1265, 0.35355338
        %v1272 = vsel %vm1150, %v1270, -inf
        %1273 = vmax.xlane.f32.xlu0 %v1272
        %v1274 = vpop.xlane.xlu0 %1273
        %v1275 = vsel %vm1150, %v1271, -inf
        %1276 = vmax.xlane.f32.xlu0 %v1275
        %v1277 = vpop.xlane.xlu0 %1276
        %v1278 = vsub.f32 %v1270, %v1274
        %v1279 = vsub.f32 %v1271, %v1277
        %v1280 = vmul.f32 %v1278, 1.442695
        %v1281 = vpow.pop %v1280
        %v1282 = vmul.f32 %v1279, 1.442695
        %v1283 = vpow.pop %v1282
        %v1284 = vsel %vm1150, %v1281, 0.0
        %1285 = vadd.xlane.f32.xlu0 %v1284
        %v1286 = vpop.xlane.xlu0 %1285
        %v1287 = vsel %vm1150, %v1283, 0.0
        %1288 = vadd.xlane.f32.xlu0 %v1287
        %v1289 = vpop.xlane.xlu0 %1288
        %v1290 = vrcp.pop %v1286
        %v1291 = vrcp.pop %v1289
        %v1292 = vmul.f32 %v1281, %v1290
        %v1293 = vmul.f32 %v1283, %v1291
        %v1294 = vpack.c.bf16 %v1292, %v1292
        %v1295 = vpack.c.bf16 %v1293, %v1293
        %v1296 = vmul.bf16 %v1045, %v1181
        %v1297 = vmul.bf16 %v1046, %v1181
        %v1299 = vsel %vm1150, %v1294, 0
        %vm1301 = vcmask 1043456
        %v1303 = vsel %vm1301, %v1296, 0
        %1305 = vmatprep.subr.bf16.mxu0 0
        %1306 = vmatpush1.bf16.msra.mxu0 0
        %1307 = vmatprep.subr.bf16.mxu0 0
        %1308 = vmatpush1.bf16.msra.mxu0 0
        %1309 = vmatprep.subr.bf16.mxu0 0
        %1310 = vmatpush1.bf16.msra.mxu0 0
        %1311 = vmatprep.subr.bf16.mxu0 0
        %1312 = vmatpush1.bf16.msra.mxu0 0
        %1313 = vmatprep.subr.bf16.mxu0 0
        %1314 = vmatpush1.bf16.msra.mxu0 0
        %1315 = vmatprep.subr.bf16.mxu0 0
        %1316 = vmatpush1.bf16.msra.mxu0 0
        %1317 = vmatprep.subr.bf16.mxu0 0
        %1318 = vmatpush1.bf16.msra.mxu0 0
        %1319 = vmatprep.subr.bf16.mxu0 0
        %1320 = vmatpush1.bf16.msra.mxu0 %v1303
        %1321 = vmatprep.subr.bf16.mxu0 0
        %1322 = vmatpush2.bf16.msra.mxu0 0
        %1323 = vmatprep.subr.bf16.mxu0 0
        %1324 = vmatpush2.bf16.msra.mxu0 0
        %1325 = vmatprep.subr.bf16.mxu0 0
        %1326 = vmatpush2.bf16.msra.mxu0 0
        %1327 = vmatprep.subr.bf16.mxu0 0
        %1328 = vmatpush2.bf16.msra.mxu0 0
        %1329 = vmatprep.subr.bf16.mxu0 0
        %1330 = vmatpush2.bf16.msra.mxu0 0
        %1331 = vmatprep.subr.bf16.mxu0 0
        %1332 = vmatpush2.bf16.msra.mxu0 0
        %1333 = vmatprep.subr.bf16.mxu0 0
        %1334 = vmatpush2.bf16.msra.mxu0 0
        %1335 = vmatprep.subr.bf16.mxu0 0
        %1336 = vmatpush2.bf16.msra.mxu0 0
        %1337 = vmatprep.mubr.bf16.mxu0 0
        %1338 = vmatmul.mubr.bf16.gmra.mxu0 %v1299
        %v1339 = vpop.f32.mrf.mxu0
        %v1340 = vadd.f32 0.0, %v1339
        %v1341 = vpop.f32.mrf.mxu0
        %v1342 = vpop.f32.mrf.mxu0
        %v1343 = vpop.f32.mrf.mxu0
        %1344 = vdwg.mxu0
        %v1346 = vsel %vm1150, %v1295, 0
        %v1349 = vsel %vm1301, %v1297, 0
        %1351 = vmatprep.subr.bf16.mxu0 0
        %1352 = vmatpush1.bf16.msra.mxu0 0
        %1353 = vmatprep.subr.bf16.mxu0 0
        %1354 = vmatpush1.bf16.msra.mxu0 0
        %1355 = vmatprep.subr.bf16.mxu0 0
        %1356 = vmatpush1.bf16.msra.mxu0 0
        %1357 = vmatprep.subr.bf16.mxu0 0
        %1358 = vmatpush1.bf16.msra.mxu0 0
        %1359 = vmatprep.subr.bf16.mxu0 0
        %1360 = vmatpush1.bf16.msra.mxu0 0
        %1361 = vmatprep.subr.bf16.mxu0 0
        %1362 = vmatpush1.bf16.msra.mxu0 0
        %1363 = vmatprep.subr.bf16.mxu0 0
        %1364 = vmatpush1.bf16.msra.mxu0 0
        %1365 = vmatprep.subr.bf16.mxu0 0
        %1366 = vmatpush1.bf16.msra.mxu0 %v1349
        %1367 = vmatprep.subr.bf16.mxu0 0
        %1368 = vmatpush2.bf16.msra.mxu0 0
        %1369 = vmatprep.subr.bf16.mxu0 0
        %1370 = vmatpush2.bf16.msra.mxu0 0
        %1371 = vmatprep.subr.bf16.mxu0 0
        %1372 = vmatpush2.bf16.msra.mxu0 0
        %1373 = vmatprep.subr.bf16.mxu0 0
        %1374 = vmatpush2.bf16.msra.mxu0 0
        %1375 = vmatprep.subr.bf16.mxu0 0
        %1376 = vmatpush2.bf16.msra.mxu0 0
        %1377 = vmatprep.subr.bf16.mxu0 0
        %1378 = vmatpush2.bf16.msra.mxu0 0
        %1379 = vmatprep.subr.bf16.mxu0 0
        %1380 = vmatpush2.bf16.msra.mxu0 0
        %1381 = vmatprep.subr.bf16.mxu0 0
        %1382 = vmatpush2.bf16.msra.mxu0 0
        %1383 = vmatprep.mubr.bf16.mxu0 0
        %1384 = vmatmul.mubr.bf16.gmra.mxu0 %v1346
        %v1385 = vpop.f32.mrf.mxu0
        %v1386 = vadd.f32 0.0, %v1385
        %v1387 = vpop.f32.mrf.mxu0
        %v1388 = vpop.f32.mrf.mxu0
        %v1389 = vpop.f32.mrf.mxu0
        %1390 = vdwg.mxu0
        %v1392 = vsel %vm1150, %v1173, 0
        %v1395 = vsel %vm1301, %v1175, 0
        %1397 = vmatprep.subr.bf16.mxu0 0
        %1398 = vmatpush1.bf16.msra.mxu0 0
        %1399 = vmatprep.subr.bf16.mxu0 0
        %1400 = vmatpush1.bf16.msra.mxu0 0
        %1401 = vmatprep.subr.bf16.mxu0 0
        %1402 = vmatpush1.bf16.msra.mxu0 0
        %1403 = vmatprep.subr.bf16.mxu0 0
        %1404 = vmatpush1.bf16.msra.mxu0 0
        %1405 = vmatprep.subr.bf16.mxu0 0
        %1406 = vmatpush1.bf16.msra.mxu0 0
        %1407 = vmatprep.subr.bf16.mxu0 0
        %1408 = vmatpush1.bf16.msra.mxu0 0
        %1409 = vmatprep.subr.bf16.mxu0 0
        %1410 = vmatpush1.bf16.msra.mxu0 0
        %1411 = vmatprep.subr.bf16.mxu0 0
        %1412 = vmatpush1.bf16.msra.mxu0 %v1395
        %1413 = vmatprep.subr.bf16.mxu0 0
        %1414 = vmatpush2.bf16.msra.mxu0 0
        %1415 = vmatprep.subr.bf16.mxu0 0
        %1416 = vmatpush2.bf16.msra.mxu0 0
        %1417 = vmatprep.subr.bf16.mxu0 0
        %1418 = vmatpush2.bf16.msra.mxu0 0
        %1419 = vmatprep.subr.bf16.mxu0 0
        %1420 = vmatpush2.bf16.msra.mxu0 0
        %1421 = vmatprep.subr.bf16.mxu0 0
        %1422 = vmatpush2.bf16.msra.mxu0 0
        %1423 = vmatprep.subr.bf16.mxu0 0
        %1424 = vmatpush2.bf16.msra.mxu0 0
        %1425 = vmatprep.subr.bf16.mxu0 0
        %1426 = vmatpush2.bf16.msra.mxu0 0
        %1427 = vmatprep.subr.bf16.mxu0 0
        %1428 = vmatpush2.bf16.msra.mxu0 0
        %1429 = vmatprep.mubr.bf16.mxu0 0
        %1430 = vmatmul.mubr.bf16.gmra.mxu0 %v1392
        %v1431 = vpop.f32.mrf.mxu0
        %v1432 = vadd.f32 %v1340, %v1431
        %v1433 = vpop.f32.mrf.mxu0
        %v1434 = vpop.f32.mrf.mxu0
        %v1435 = vpop.f32.mrf.mxu0
        %1436 = vdwg.mxu0
        %v1438 = vsel %vm1150, %v1174, 0
        %v1441 = vsel %vm1301, %v1176, 0
        %1443 = vmatprep.subr.bf16.mxu0 0
        %1444 = vmatpush1.bf16.msra.mxu0 0
        %1445 = vmatprep.subr.bf16.mxu0 0
        %1446 = vmatpush1.bf16.msra.mxu0 0
        %1447 = vmatprep.subr.bf16.mxu0 0
        %1448 = vmatpush1.bf16.msra.mxu0 0
        %1449 = vmatprep.subr.bf16.mxu0 0
        %1450 = vmatpush1.bf16.msra.mxu0 0
        %1451 = vmatprep.subr.bf16.mxu0 0
        %1452 = vmatpush1.bf16.msra.mxu0 0
        %1453 = vmatprep.subr.bf16.mxu0 0
        %1454 = vmatpush1.bf16.msra.mxu0 0
        %1455 = vmatprep.subr.bf16.mxu0 0
        %1456 = vmatpush1.bf16.msra.mxu0 0
        %1457 = vmatprep.subr.bf16.mxu0 0
        %1458 = vmatpush1.bf16.msra.mxu0 %v1441
        %1459 = vmatprep.subr.bf16.mxu0 0
        %1460 = vmatpush2.bf16.msra.mxu0 0
        %1461 = vmatprep.subr.bf16.mxu0 0
        %1462 = vmatpush2.bf16.msra.mxu0 0
        %1463 = vmatprep.subr.bf16.mxu0 0
        %1464 = vmatpush2.bf16.msra.mxu0 0
        %1465 = vmatprep.subr.bf16.mxu0 0
        %1466 = vmatpush2.bf16.msra.mxu0 0
        %1467 = vmatprep.subr.bf16.mxu0 0
        %1468 = vmatpush2.bf16.msra.mxu0 0
        %1469 = vmatprep.subr.bf16.mxu0 0
        %1470 = vmatpush2.bf16.msra.mxu0 0
        %1471 = vmatprep.subr.bf16.mxu0 0
        %1472 = vmatpush2.bf16.msra.mxu0 0
        %1473 = vmatprep.subr.bf16.mxu0 0
        %1474 = vmatpush2.bf16.msra.mxu0 0
        %1475 = vmatprep.mubr.bf16.mxu0 0
        %1476 = vmatmul.mubr.bf16.gmra.mxu0 %v1438
        %v1477 = vpop.f32.mrf.mxu0
        %v1478 = vadd.f32 %v1386, %v1477
        %v1479 = vpop.f32.mrf.mxu0
        %v1480 = vpop.f32.mrf.mxu0
        %v1481 = vpop.f32.mrf.mxu0
        %1482 = vdwg.mxu0
        %vm1483 = vcmp.ge.s32.totalorder %v1048, 16
        %vm1484 = vcmp.lt.s32.totalorder %v1048, 24
        %vm1485 = vmand %vm1483, %vm1484
        %v1486 = vsel %vm1485, 1.0, 0.0
        %v1487 = vpack.c.bf16 %v1486, %v1486
        %v1488 = vmul.bf16 %v979, %v1487
        %v1489 = vmul.bf16 %v980, %v1487
        %v1491 = vsel %vm868, %v1488, 0
        %1493 = vmatprep.subr.bf16.mxu0 0
        %1494 = vmatpush1.bf16.xpose.msra.mxu0 0
        %1495 = vmatprep.subr.bf16.mxu0 0
        %1496 = vmatpush1.bf16.xpose.msra.mxu0 0
        %1497 = vmatprep.subr.bf16.mxu0 0
        %1498 = vmatpush1.bf16.xpose.msra.mxu0 0
        %1499 = vmatprep.subr.bf16.mxu0 0
        %1500 = vmatpush1.bf16.xpose.msra.mxu0 0
        %1501 = vmatprep.subr.bf16.mxu0 0
        %1502 = vmatpush1.bf16.xpose.msra.mxu0 0
        %1503 = vmatprep.subr.bf16.mxu0 0
        %1504 = vmatpush1.bf16.xpose.msra.mxu0 0
        %1505 = vmatprep.subr.bf16.mxu0 0
        %1506 = vmatpush1.bf16.xpose.msra.mxu0 0
        %1507 = vmatprep.subr.bf16.mxu0 0
        %1508 = vmatpush1.bf16.xpose.msra.mxu0 %v1491
        %1509 = vmatprep.subr.bf16.mxu0 0
        %1510 = vmatpush2.bf16.xpose.msra.mxu0 0
        %1511 = vmatprep.subr.bf16.mxu0 0
        %1512 = vmatpush2.bf16.xpose.msra.mxu0 0
        %1513 = vmatprep.subr.bf16.mxu0 0
        %1514 = vmatpush2.bf16.xpose.msra.mxu0 0
        %1515 = vmatprep.subr.bf16.mxu0 0
        %1516 = vmatpush2.bf16.xpose.msra.mxu0 0
        %1517 = vmatprep.subr.bf16.mxu0 0
        %1518 = vmatpush2.bf16.xpose.msra.mxu0 0
        %1519 = vmatprep.subr.bf16.mxu0 0
        %1520 = vmatpush2.bf16.xpose.msra.mxu0 0
        %1521 = vmatprep.subr.bf16.mxu0 0
        %1522 = vmatpush2.bf16.xpose.msra.mxu0 0
        %1523 = vmatprep.subr.bf16.mxu0 0
        %1524 = vmatpush2.bf16.xpose.msra.mxu0 0
        %1525 = vmatprep.mubr.bf16.mxu0 0
        %1526 = vmatmul.mubr.bf16.gmra.mxu0 %v1057
        %v1527 = vpop.f32.mrf.mxu0
        %v1528 = vadd.f32 0.0, %v1527
        %v1529 = vpop.f32.mrf.mxu0
        %v1530 = vpop.f32.mrf.mxu0
        %v1531 = vpop.f32.mrf.mxu0
        %1532 = vdwg.mxu0
        %v1534 = vsel %vm868, %v1489, 0
        %1536 = vmatprep.subr.bf16.mxu0 0
        %1537 = vmatpush1.bf16.xpose.msra.mxu0 0
        %1538 = vmatprep.subr.bf16.mxu0 0
        %1539 = vmatpush1.bf16.xpose.msra.mxu0 0
        %1540 = vmatprep.subr.bf16.mxu0 0
        %1541 = vmatpush1.bf16.xpose.msra.mxu0 0
        %1542 = vmatprep.subr.bf16.mxu0 0
        %1543 = vmatpush1.bf16.xpose.msra.mxu0 0
        %1544 = vmatprep.subr.bf16.mxu0 0
        %1545 = vmatpush1.bf16.xpose.msra.mxu0 0
        %1546 = vmatprep.subr.bf16.mxu0 0
        %1547 = vmatpush1.bf16.xpose.msra.mxu0 0
        %1548 = vmatprep.subr.bf16.mxu0 0
        %1549 = vmatpush1.bf16.xpose.msra.mxu0 0
        %1550 = vmatprep.subr.bf16.mxu0 0
        %1551 = vmatpush1.bf16.xpose.msra.mxu0 %v1534
        %1552 = vmatprep.subr.bf16.mxu0 0
        %1553 = vmatpush2.bf16.xpose.msra.mxu0 0
        %1554 = vmatprep.subr.bf16.mxu0 0
        %1555 = vmatpush2.bf16.xpose.msra.mxu0 0
        %1556 = vmatprep.subr.bf16.mxu0 0
        %1557 = vmatpush2.bf16.xpose.msra.mxu0 0
        %1558 = vmatprep.subr.bf16.mxu0 0
        %1559 = vmatpush2.bf16.xpose.msra.mxu0 0
        %1560 = vmatprep.subr.bf16.mxu0 0
        %1561 = vmatpush2.bf16.xpose.msra.mxu0 0
        %1562 = vmatprep.subr.bf16.mxu0 0
        %1563 = vmatpush2.bf16.xpose.msra.mxu0 0
        %1564 = vmatprep.subr.bf16.mxu0 0
        %1565 = vmatpush2.bf16.xpose.msra.mxu0 0
        %1566 = vmatprep.subr.bf16.mxu0 0
        %1567 = vmatpush2.bf16.xpose.msra.mxu0 0
        %1568 = vmatprep.mubr.bf16.mxu0 0
        %1569 = vmatmul.mubr.bf16.gmra.mxu0 %v1103
        %v1570 = vpop.f32.mrf.mxu0
        %v1571 = vadd.f32 0.0, %v1570
        %v1572 = vpop.f32.mrf.mxu0
        %v1573 = vpop.f32.mrf.mxu0
        %v1574 = vpop.f32.mrf.mxu0
        %1575 = vdwg.mxu0
        %v1576 = vmul.f32 %v1528, 0.35355338
        %v1577 = vmul.f32 %v1571, 0.35355338
        %v1578 = vsel %vm1150, %v1576, -inf
        %1579 = vmax.xlane.f32.xlu0 %v1578
        %v1580 = vpop.xlane.xlu0 %1579
        %v1581 = vsel %vm1150, %v1577, -inf
        %1582 = vmax.xlane.f32.xlu0 %v1581
        %v1583 = vpop.xlane.xlu0 %1582
        %v1584 = vsub.f32 %v1576, %v1580
        %v1585 = vsub.f32 %v1577, %v1583
        %v1586 = vmul.f32 %v1584, 1.442695
        %v1587 = vpow.pop %v1586
        %v1588 = vmul.f32 %v1585, 1.442695
        %v1589 = vpow.pop %v1588
        %v1590 = vsel %vm1150, %v1587, 0.0
        %1591 = vadd.xlane.f32.xlu0 %v1590
        %v1592 = vpop.xlane.xlu0 %1591
        %v1593 = vsel %vm1150, %v1589, 0.0
        %1594 = vadd.xlane.f32.xlu0 %v1593
        %v1595 = vpop.xlane.xlu0 %1594
        %v1596 = vrcp.pop %v1592
        %v1597 = vrcp.pop %v1595
        %v1598 = vmul.f32 %v1587, %v1596
        %v1599 = vmul.f32 %v1589, %v1597
        %v1600 = vpack.c.bf16 %v1598, %v1598
        %v1601 = vpack.c.bf16 %v1599, %v1599
        %v1602 = vmul.bf16 %v1045, %v1487
        %v1603 = vmul.bf16 %v1046, %v1487
        %v1605 = vsel %vm1150, %v1600, 0
        %v1608 = vsel %vm1301, %v1602, 0
        %1610 = vmatprep.subr.bf16.mxu0 0
        %1611 = vmatpush1.bf16.msra.mxu0 0
        %1612 = vmatprep.subr.bf16.mxu0 0
        %1613 = vmatpush1.bf16.msra.mxu0 0
        %1614 = vmatprep.subr.bf16.mxu0 0
        %1615 = vmatpush1.bf16.msra.mxu0 0
        %1616 = vmatprep.subr.bf16.mxu0 0
        %1617 = vmatpush1.bf16.msra.mxu0 0
        %1618 = vmatprep.subr.bf16.mxu0 0
        %1619 = vmatpush1.bf16.msra.mxu0 0
        %1620 = vmatprep.subr.bf16.mxu0 0
        %1621 = vmatpush1.bf16.msra.mxu0 0
        %1622 = vmatprep.subr.bf16.mxu0 0
        %1623 = vmatpush1.bf16.msra.mxu0 0
        %1624 = vmatprep.subr.bf16.mxu0 0
        %1625 = vmatpush1.bf16.msra.mxu0 %v1608
        %1626 = vmatprep.subr.bf16.mxu0 0
        %1627 = vmatpush2.bf16.msra.mxu0 0
        %1628 = vmatprep.subr.bf16.mxu0 0
        %1629 = vmatpush2.bf16.msra.mxu0 0
        %1630 = vmatprep.subr.bf16.mxu0 0
        %1631 = vmatpush2.bf16.msra.mxu0 0
        %1632 = vmatprep.subr.bf16.mxu0 0
        %1633 = vmatpush2.bf16.msra.mxu0 0
        %1634 = vmatprep.subr.bf16.mxu0 0
        %1635 = vmatpush2.bf16.msra.mxu0 0
        %1636 = vmatprep.subr.bf16.mxu0 0
        %1637 = vmatpush2.bf16.msra.mxu0 0
        %1638 = vmatprep.subr.bf16.mxu0 0
        %1639 = vmatpush2.bf16.msra.mxu0 0
        %1640 = vmatprep.subr.bf16.mxu0 0
        %1641 = vmatpush2.bf16.msra.mxu0 0
        %1642 = vmatprep.mubr.bf16.mxu0 0
        %1643 = vmatmul.mubr.bf16.gmra.mxu0 %v1605
        %v1644 = vpop.f32.mrf.mxu0
        %v1645 = vadd.f32 0.0, %v1644
        %v1646 = vpop.f32.mrf.mxu0
        %v1647 = vpop.f32.mrf.mxu0
        %v1648 = vpop.f32.mrf.mxu0
        %1649 = vdwg.mxu0
        %v1651 = vsel %vm1150, %v1601, 0
        %v1654 = vsel %vm1301, %v1603, 0
        %1656 = vmatprep.subr.bf16.mxu0 0
        %1657 = vmatpush1.bf16.msra.mxu0 0
        %1658 = vmatprep.subr.bf16.mxu0 0
        %1659 = vmatpush1.bf16.msra.mxu0 0
        %1660 = vmatprep.subr.bf16.mxu0 0
        %1661 = vmatpush1.bf16.msra.mxu0 0
        %1662 = vmatprep.subr.bf16.mxu0 0
        %1663 = vmatpush1.bf16.msra.mxu0 0
        %1664 = vmatprep.subr.bf16.mxu0 0
        %1665 = vmatpush1.bf16.msra.mxu0 0
        %1666 = vmatprep.subr.bf16.mxu0 0
        %1667 = vmatpush1.bf16.msra.mxu0 0
        %1668 = vmatprep.subr.bf16.mxu0 0
        %1669 = vmatpush1.bf16.msra.mxu0 0
        %1670 = vmatprep.subr.bf16.mxu0 0
        %1671 = vmatpush1.bf16.msra.mxu0 %v1654
        %1672 = vmatprep.subr.bf16.mxu0 0
        %1673 = vmatpush2.bf16.msra.mxu0 0
        %1674 = vmatprep.subr.bf16.mxu0 0
        %1675 = vmatpush2.bf16.msra.mxu0 0
        %1676 = vmatprep.subr.bf16.mxu0 0
        %1677 = vmatpush2.bf16.msra.mxu0 0
        %1678 = vmatprep.subr.bf16.mxu0 0
        %1679 = vmatpush2.bf16.msra.mxu0 0
        %1680 = vmatprep.subr.bf16.mxu0 0
        %1681 = vmatpush2.bf16.msra.mxu0 0
        %1682 = vmatprep.subr.bf16.mxu0 0
        %1683 = vmatpush2.bf16.msra.mxu0 0
        %1684 = vmatprep.subr.bf16.mxu0 0
        %1685 = vmatpush2.bf16.msra.mxu0 0
        %1686 = vmatprep.subr.bf16.mxu0 0
        %1687 = vmatpush2.bf16.msra.mxu0 0
        %1688 = vmatprep.mubr.bf16.mxu0 0
        %1689 = vmatmul.mubr.bf16.gmra.mxu0 %v1651
        %v1690 = vpop.f32.mrf.mxu0
        %v1691 = vadd.f32 0.0, %v1690
        %v1692 = vpop.f32.mrf.mxu0
        %v1693 = vpop.f32.mrf.mxu0
        %v1694 = vpop.f32.mrf.mxu0
        %1695 = vdwg.mxu0
        %v1696 = vadd.f32 %v1432, %v1645
        %v1697 = vadd.f32 %v1478, %v1691
        %vm1698 = vcmp.ge.s32.totalorder %v1048, 24
        %vm1699 = vcmp.lt.s32.totalorder %v1048, 32
        %vm1700 = vmand %vm1698, %vm1699
        %v1701 = vsel %vm1700, 1.0, 0.0
        %v1702 = vpack.c.bf16 %v1701, %v1701
        %v1703 = vmul.bf16 %v979, %v1702
        %v1704 = vmul.bf16 %v980, %v1702
        %v1706 = vsel %vm868, %v1703, 0
        %1708 = vmatprep.subr.bf16.mxu0 0
        %1709 = vmatpush1.bf16.xpose.msra.mxu0 0
        %1710 = vmatprep.subr.bf16.mxu0 0
        %1711 = vmatpush1.bf16.xpose.msra.mxu0 0
        %1712 = vmatprep.subr.bf16.mxu0 0
        %1713 = vmatpush1.bf16.xpose.msra.mxu0 0
        %1714 = vmatprep.subr.bf16.mxu0 0
        %1715 = vmatpush1.bf16.xpose.msra.mxu0 0
        %1716 = vmatprep.subr.bf16.mxu0 0
        %1717 = vmatpush1.bf16.xpose.msra.mxu0 0
        %1718 = vmatprep.subr.bf16.mxu0 0
        %1719 = vmatpush1.bf16.xpose.msra.mxu0 0
        %1720 = vmatprep.subr.bf16.mxu0 0
        %1721 = vmatpush1.bf16.xpose.msra.mxu0 0
        %1722 = vmatprep.subr.bf16.mxu0 0
        %1723 = vmatpush1.bf16.xpose.msra.mxu0 %v1706
        %1724 = vmatprep.subr.bf16.mxu0 0
        %1725 = vmatpush2.bf16.xpose.msra.mxu0 0
        %1726 = vmatprep.subr.bf16.mxu0 0
        %1727 = vmatpush2.bf16.xpose.msra.mxu0 0
        %1728 = vmatprep.subr.bf16.mxu0 0
        %1729 = vmatpush2.bf16.xpose.msra.mxu0 0
        %1730 = vmatprep.subr.bf16.mxu0 0
        %1731 = vmatpush2.bf16.xpose.msra.mxu0 0
        %1732 = vmatprep.subr.bf16.mxu0 0
        %1733 = vmatpush2.bf16.xpose.msra.mxu0 0
        %1734 = vmatprep.subr.bf16.mxu0 0
        %1735 = vmatpush2.bf16.xpose.msra.mxu0 0
        %1736 = vmatprep.subr.bf16.mxu0 0
        %1737 = vmatpush2.bf16.xpose.msra.mxu0 0
        %1738 = vmatprep.subr.bf16.mxu0 0
        %1739 = vmatpush2.bf16.xpose.msra.mxu0 0
        %1740 = vmatprep.mubr.bf16.mxu0 0
        %1741 = vmatmul.mubr.bf16.gmra.mxu0 %v1057
        %v1742 = vpop.f32.mrf.mxu0
        %v1743 = vadd.f32 0.0, %v1742
        %v1744 = vpop.f32.mrf.mxu0
        %v1745 = vpop.f32.mrf.mxu0
        %v1746 = vpop.f32.mrf.mxu0
        %1747 = vdwg.mxu0
        %v1749 = vsel %vm868, %v1704, 0
        %1751 = vmatprep.subr.bf16.mxu0 0
        %1752 = vmatpush1.bf16.xpose.msra.mxu0 0
        %1753 = vmatprep.subr.bf16.mxu0 0
        %1754 = vmatpush1.bf16.xpose.msra.mxu0 0
        %1755 = vmatprep.subr.bf16.mxu0 0
        %1756 = vmatpush1.bf16.xpose.msra.mxu0 0
        %1757 = vmatprep.subr.bf16.mxu0 0
        %1758 = vmatpush1.bf16.xpose.msra.mxu0 0
        %1759 = vmatprep.subr.bf16.mxu0 0
        %1760 = vmatpush1.bf16.xpose.msra.mxu0 0
        %1761 = vmatprep.subr.bf16.mxu0 0
        %1762 = vmatpush1.bf16.xpose.msra.mxu0 0
        %1763 = vmatprep.subr.bf16.mxu0 0
        %1764 = vmatpush1.bf16.xpose.msra.mxu0 0
        %1765 = vmatprep.subr.bf16.mxu0 0
        %1766 = vmatpush1.bf16.xpose.msra.mxu0 %v1749
        %1767 = vmatprep.subr.bf16.mxu0 0
        %1768 = vmatpush2.bf16.xpose.msra.mxu0 0
        %1769 = vmatprep.subr.bf16.mxu0 0
        %1770 = vmatpush2.bf16.xpose.msra.mxu0 0
        %1771 = vmatprep.subr.bf16.mxu0 0
        %1772 = vmatpush2.bf16.xpose.msra.mxu0 0
        %1773 = vmatprep.subr.bf16.mxu0 0
        %1774 = vmatpush2.bf16.xpose.msra.mxu0 0
        %1775 = vmatprep.subr.bf16.mxu0 0
        %1776 = vmatpush2.bf16.xpose.msra.mxu0 0
        %1777 = vmatprep.subr.bf16.mxu0 0
        %1778 = vmatpush2.bf16.xpose.msra.mxu0 0
        %1779 = vmatprep.subr.bf16.mxu0 0
        %1780 = vmatpush2.bf16.xpose.msra.mxu0 0
        %1781 = vmatprep.subr.bf16.mxu0 0
        %1782 = vmatpush2.bf16.xpose.msra.mxu0 0
        %1783 = vmatprep.mubr.bf16.mxu0 0
        %1784 = vmatmul.mubr.bf16.gmra.mxu0 %v1103
        %v1785 = vpop.f32.mrf.mxu0
        %v1786 = vadd.f32 0.0, %v1785
        %v1787 = vpop.f32.mrf.mxu0
        %v1788 = vpop.f32.mrf.mxu0
        %v1789 = vpop.f32.mrf.mxu0
        %1790 = vdwg.mxu0
        %v1791 = vmul.f32 %v1743, 0.35355338
        %v1792 = vmul.f32 %v1786, 0.35355338
        %v1793 = vsel %vm1150, %v1791, -inf
        %1794 = vmax.xlane.f32.xlu0 %v1793
        %v1795 = vpop.xlane.xlu0 %1794
        %v1796 = vsel %vm1150, %v1792, -inf
        %1797 = vmax.xlane.f32.xlu0 %v1796
        %v1798 = vpop.xlane.xlu0 %1797
        %v1799 = vsub.f32 %v1791, %v1795
        %v1800 = vsub.f32 %v1792, %v1798
        %v1801 = vmul.f32 %v1799, 1.442695
        %v1802 = vpow.pop %v1801
        %v1803 = vmul.f32 %v1800, 1.442695
        %v1804 = vpow.pop %v1803
        %v1805 = vsel %vm1150, %v1802, 0.0
        %1806 = vadd.xlane.f32.xlu0 %v1805
        %v1807 = vpop.xlane.xlu0 %1806
        %v1808 = vsel %vm1150, %v1804, 0.0
        %1809 = vadd.xlane.f32.xlu0 %v1808
        %v1810 = vpop.xlane.xlu0 %1809
        %v1811 = vrcp.pop %v1807
        %v1812 = vrcp.pop %v1810
        %v1813 = vmul.f32 %v1802, %v1811
        %v1814 = vmul.f32 %v1804, %v1812
        %v1815 = vpack.c.bf16 %v1813, %v1813
        %v1816 = vpack.c.bf16 %v1814, %v1814
        %v1817 = vmul.bf16 %v1045, %v1702
        %v1818 = vmul.bf16 %v1046, %v1702
        %v1820 = vsel %vm1150, %v1815, 0
        %v1823 = vsel %vm1301, %v1817, 0
        %1825 = vmatprep.subr.bf16.mxu0 0
        %1826 = vmatpush1.bf16.msra.mxu0 0
        %1827 = vmatprep.subr.bf16.mxu0 0
        %1828 = vmatpush1.bf16.msra.mxu0 0
        %1829 = vmatprep.subr.bf16.mxu0 0
        %1830 = vmatpush1.bf16.msra.mxu0 0
        %1831 = vmatprep.subr.bf16.mxu0 0
        %1832 = vmatpush1.bf16.msra.mxu0 0
        %1833 = vmatprep.subr.bf16.mxu0 0
        %1834 = vmatpush1.bf16.msra.mxu0 0
        %1835 = vmatprep.subr.bf16.mxu0 0
        %1836 = vmatpush1.bf16.msra.mxu0 0
        %1837 = vmatprep.subr.bf16.mxu0 0
        %1838 = vmatpush1.bf16.msra.mxu0 0
        %1839 = vmatprep.subr.bf16.mxu0 0
        %1840 = vmatpush1.bf16.msra.mxu0 %v1823
        %1841 = vmatprep.subr.bf16.mxu0 0
        %1842 = vmatpush2.bf16.msra.mxu0 0
        %1843 = vmatprep.subr.bf16.mxu0 0
        %1844 = vmatpush2.bf16.msra.mxu0 0
        %1845 = vmatprep.subr.bf16.mxu0 0
        %1846 = vmatpush2.bf16.msra.mxu0 0
        %1847 = vmatprep.subr.bf16.mxu0 0
        %1848 = vmatpush2.bf16.msra.mxu0 0
        %1849 = vmatprep.subr.bf16.mxu0 0
        %1850 = vmatpush2.bf16.msra.mxu0 0
        %1851 = vmatprep.subr.bf16.mxu0 0
        %1852 = vmatpush2.bf16.msra.mxu0 0
        %1853 = vmatprep.subr.bf16.mxu0 0
        %1854 = vmatpush2.bf16.msra.mxu0 0
        %1855 = vmatprep.subr.bf16.mxu0 0
        %1856 = vmatpush2.bf16.msra.mxu0 0
        %1857 = vmatprep.mubr.bf16.mxu0 0
        %1858 = vmatmul.mubr.bf16.gmra.mxu0 %v1820
        %v1859 = vpop.f32.mrf.mxu0
        %v1860 = vadd.f32 0.0, %v1859
        %v1861 = vpop.f32.mrf.mxu0
        %v1862 = vpop.f32.mrf.mxu0
        %v1863 = vpop.f32.mrf.mxu0
        %1864 = vdwg.mxu0
        %v1866 = vsel %vm1150, %v1816, 0
        %v1869 = vsel %vm1301, %v1818, 0
        %1871 = vmatprep.subr.bf16.mxu0 0
        %1872 = vmatpush1.bf16.msra.mxu0 0
        %1873 = vmatprep.subr.bf16.mxu0 0
        %1874 = vmatpush1.bf16.msra.mxu0 0
        %1875 = vmatprep.subr.bf16.mxu0 0
        %1876 = vmatpush1.bf16.msra.mxu0 0
        %1877 = vmatprep.subr.bf16.mxu0 0
        %1878 = vmatpush1.bf16.msra.mxu0 0
        %1879 = vmatprep.subr.bf16.mxu0 0
        %1880 = vmatpush1.bf16.msra.mxu0 0
        %1881 = vmatprep.subr.bf16.mxu0 0
        %1882 = vmatpush1.bf16.msra.mxu0 0
        %1883 = vmatprep.subr.bf16.mxu0 0
        %1884 = vmatpush1.bf16.msra.mxu0 0
        %1885 = vmatprep.subr.bf16.mxu0 0
        %1886 = vmatpush1.bf16.msra.mxu0 %v1869
        %1887 = vmatprep.subr.bf16.mxu0 0
        %1888 = vmatpush2.bf16.msra.mxu0 0
        %1889 = vmatprep.subr.bf16.mxu0 0
        %1890 = vmatpush2.bf16.msra.mxu0 0
        %1891 = vmatprep.subr.bf16.mxu0 0
        %1892 = vmatpush2.bf16.msra.mxu0 0
        %1893 = vmatprep.subr.bf16.mxu0 0
        %1894 = vmatpush2.bf16.msra.mxu0 0
        %1895 = vmatprep.subr.bf16.mxu0 0
        %1896 = vmatpush2.bf16.msra.mxu0 0
        %1897 = vmatprep.subr.bf16.mxu0 0
        %1898 = vmatpush2.bf16.msra.mxu0 0
        %1899 = vmatprep.subr.bf16.mxu0 0
        %1900 = vmatpush2.bf16.msra.mxu0 0
        %1901 = vmatprep.subr.bf16.mxu0 0
        %1902 = vmatpush2.bf16.msra.mxu0 0
        %1903 = vmatprep.mubr.bf16.mxu0 0
        %1904 = vmatmul.mubr.bf16.gmra.mxu0 %v1866
        %v1905 = vpop.f32.mrf.mxu0
        %v1906 = vadd.f32 0.0, %v1905
        %v1907 = vpop.f32.mrf.mxu0
        %v1908 = vpop.f32.mrf.mxu0
        %v1909 = vpop.f32.mrf.mxu0
        %1910 = vdwg.mxu0
        %v1911 = vadd.f32 %v1696, %v1860
        %v1912 = vadd.f32 %v1697, %v1906
        %v1913 = vpack.c.bf16 %v1912, %v1911
        %v1914 = vld [vmem:[%s799] sm:$0xf]
        %v1915 = vld [vmem:[%s799 + $0x4] sm:$0xf]
        %v1916 = vld [vmem:[%s799 + $0x8] sm:$0xf]
        %v1917 = vld [vmem:[%s799 + $0xc] sm:$0xf]
        %v1918 = vld [vmem:[%s802] sm:$0x1]
        %v1920 = vlaneseq
        %v1921 = vshrl.u32 %v1920, 7
        %v1922 = vsub.s32 0, %v1921
        %v1923 = vrot.slane %v1918, %v1922
        %v1929 = vunpack.c.l.b16 %v1914
        %v1930 = vunpack.c.l.b16 %v1915
        %v1931 = vunpack.c.l.b16 %v1916
        %v1932 = vunpack.c.l.b16 %v1917
        %v1933 = vpack.c.b16 %v1930, %v1929
        %v1934 = vpack.c.b16 %v1932, %v1931
        %v1938 = vsel %vm868, %v1913, 0
        %1940 = vmatprep.subr.bf16.mxu0 0
        %1941 = vmatpush1.bf16.msra.mxu0 0
        %1942 = vmatprep.subr.bf16.mxu0 0
        %1943 = vmatpush1.bf16.msra.mxu0 0
        %1944 = vmatprep.subr.bf16.mxu0 0
        %1945 = vmatpush1.bf16.msra.mxu0 0
        %1946 = vmatprep.subr.bf16.mxu0 0
        %1947 = vmatpush1.bf16.msra.mxu0 0
        %1948 = vmatprep.subr.bf16.mxu0 0
        %1949 = vmatpush1.bf16.msra.mxu0 0
        %1950 = vmatprep.subr.bf16.mxu0 0
        %1951 = vmatpush1.bf16.msra.mxu0 0
        %1952 = vmatprep.subr.bf16.mxu0 0
        %1953 = vmatpush1.bf16.msra.mxu0 %v1934
        %1954 = vmatprep.subr.bf16.mxu0 0
        %1955 = vmatpush1.bf16.msra.mxu0 %v1933
        %1956 = vmatprep.subr.bf16.mxu0 0
        %1957 = vmatpush2.bf16.msra.mxu0 0
        %1958 = vmatprep.subr.bf16.mxu0 0
        %1959 = vmatpush2.bf16.msra.mxu0 0
        %1960 = vmatprep.subr.bf16.mxu0 0
        %1961 = vmatpush2.bf16.msra.mxu0 0
        %1962 = vmatprep.subr.bf16.mxu0 0
        %1963 = vmatpush2.bf16.msra.mxu0 0
        %1964 = vmatprep.subr.bf16.mxu0 0
        %1965 = vmatpush2.bf16.msra.mxu0 0
        %1966 = vmatprep.subr.bf16.mxu0 0
        %1967 = vmatpush2.bf16.msra.mxu0 0
        %1968 = vmatprep.subr.bf16.mxu0 0
        %1969 = vmatpush2.bf16.msra.mxu0 0
        %1970 = vmatprep.subr.bf16.mxu0 0
        %1971 = vmatpush2.bf16.msra.mxu0 0
        %1972 = vmatprep.mubr.bf16.mxu0 0
        %1973 = vmatmul.mubr.bf16.gmra.mxu0 %v1938
        %v1974 = vpop.f32.mrf.mxu0
        %v1975 = vadd.f32 %v1923, %v1974
        %v1976 = vpop.f32.mrf.mxu0
        %v1977 = vpop.f32.mrf.mxu0
        %v1978 = vadd.f32 %v1923, %v1977
        %v1979 = vpop.f32.mrf.mxu0
        %1980 = vdwg.mxu0
        %v1981 = vadd.f32 %v842, %v1975
        %v1982 = vadd.f32 %v843, %v1978
        %v1983 = vld [vmem:[%s805] sm:$0x1]
        %v1984 = vld [vmem:[%s808] sm:$0x1]
        %v1985 = vsel %vm868, %v1981, 0.0
        %1986 = vadd.xlane.f32.xlu0 %v1985
        %v1987 = vpop.xlane.xlu0 %1986
        %v1988 = vsel %vm868, %v1982, 0.0
        %1989 = vadd.xlane.f32.xlu0 %v1988
        %v1990 = vpop.xlane.xlu0 %1989
        %v1991 = vrcp.pop 32.0
        %v1992 = vmul.f32 %v1987, %v1991
        %v1993 = vmul.f32 %v1990, %v1991
        %v1994 = vsub.f32 %v1981, %v1992
        %v1995 = vsub.f32 %v1982, %v1993
        %v1996 = vmul.f32 %v1994, %v1994
        %v1997 = vmul.f32 %v1995, %v1995
        %v1998 = vsel %vm868, %v1996, 0.0
        %1999 = vadd.xlane.f32.xlu0 %v1998
        %v2000 = vpop.xlane.xlu0 %1999
        %v2001 = vsel %vm868, %v1997, 0.0
        %2002 = vadd.xlane.f32.xlu0 %v2001
        %v2003 = vpop.xlane.xlu0 %2002
        %v2004 = vmul.f32 %v2000, %v1991
        %v2005 = vmul.f32 %v2003, %v1991
        %v2006 = vadd.f32 %v2004, 1e-05
        %v2007 = vadd.f32 %v2005, 1e-05
        %v2008 = vrsqrt.pop %v2006
        %v2009 = vrsqrt.pop %v2007
        %v2010 = vmul.f32 %v1994, %v2008
        %v2011 = vmul.f32 %v1995, %v2009
        %v2013 = vlaneseq
        %v2014 = vshrl.u32 %v2013, 7
        %v2015 = vsub.s32 0, %v2014
        %v2016 = vrot.slane %v1983, %v2015
        %v2018 = vmul.f32 %v2010, %v2016
        %v2019 = vmul.f32 %v2011, %v2016
        %v2021 = vlaneseq
        %v2022 = vshrl.u32 %v2021, 7
        %v2023 = vsub.s32 0, %v2022
        %v2024 = vrot.slane %v1984, %v2023
        %v2026 = vadd.f32 %v2018, %v2024
        %v2027 = vadd.f32 %v2019, %v2024
        %v2028 = vpack.c.bf16 %v2027, %v2026
        %v2029 = vld [vmem:[%s819] sm:$0xff]
        %v2030 = vld [vmem:[%s819 + $0x8] sm:$0xff]
        %v2031 = vld [vmem:[%s819 + $0x10] sm:$0xff]
        %v2032 = vld [vmem:[%s819 + $0x18] sm:$0xff]
        %v2033 = vld [vmem:[%s819 + $0x20] sm:$0xff]
        %v2034 = vld [vmem:[%s819 + $0x28] sm:$0xff]
        %v2035 = vld [vmem:[%s819 + $0x30] sm:$0xff]
        %v2036 = vld [vmem:[%s819 + $0x38] sm:$0xff]
        %v2037 = vld [vmem:[%s819 + $0x40] sm:$0xff]
        %v2038 = vld [vmem:[%s819 + $0x48] sm:$0xff]
        %v2039 = vld [vmem:[%s819 + $0x50] sm:$0xff]
        %v2040 = vld [vmem:[%s819 + $0x58] sm:$0xff]
        %v2041 = vld [vmem:[%s819 + $0x60] sm:$0xff]
        %v2042 = vld [vmem:[%s819 + $0x68] sm:$0xff]
        %v2043 = vld [vmem:[%s819 + $0x70] sm:$0xff]
        %v2044 = vld [vmem:[%s819 + $0x78] sm:$0xff]
        %v2045 = vld [vmem:[%s819 + $0x80] sm:$0xff]
        %v2046 = vld [vmem:[%s819 + $0x88] sm:$0xff]
        %v2047 = vld [vmem:[%s819 + $0x90] sm:$0xff]
        %v2048 = vld [vmem:[%s819 + $0x98] sm:$0xff]
        %v2049 = vld [vmem:[%s819 + $0xa0] sm:$0xff]
        %v2050 = vld [vmem:[%s819 + $0xa8] sm:$0xff]
        %v2051 = vld [vmem:[%s819 + $0xb0] sm:$0xff]
        %v2052 = vld [vmem:[%s819 + $0xb8] sm:$0xff]
        %v2053 = vld [vmem:[%s819 + $0xc0] sm:$0xff]
        %v2054 = vld [vmem:[%s819 + $0xc8] sm:$0xff]
        %v2055 = vld [vmem:[%s819 + $0xd0] sm:$0xff]
        %v2056 = vld [vmem:[%s819 + $0xd8] sm:$0xff]
        %v2057 = vld [vmem:[%s819 + $0xe0] sm:$0xff]
        %v2058 = vld [vmem:[%s819 + $0xe8] sm:$0xff]
        %v2059 = vld [vmem:[%s819 + $0xf0] sm:$0xff]
        %v2060 = vld [vmem:[%s819 + $0xf8] sm:$0xff]
        %v2061 = vld [vmem:[%s823] sm:$0xff]
        %v2062 = vld [vmem:[%s823 + $0x8] sm:$0xff]
        %v2065 = vlaneseq
        %v2066 = vshrl.u32 %v2065, 7
        %v2067 = vsub.s32 0, %v2066
        %v2068 = vrot.slane %v2061, %v2067
        %v2069 = vlaneseq
        %v2070 = vshrl.u32 %v2069, 7
        %v2071 = vsub.s32 1, %v2070
        %v2072 = vrot.slane %v2061, %v2071
        %v2073 = vlaneseq
        %v2074 = vshrl.u32 %v2073, 7
        %v2075 = vsub.s32 2, %v2074
        %v2076 = vrot.slane %v2061, %v2075
        %v2077 = vlaneseq
        %v2078 = vshrl.u32 %v2077, 7
        %v2079 = vsub.s32 3, %v2078
        %v2080 = vrot.slane %v2061, %v2079
        %v2081 = vlaneseq
        %v2082 = vshrl.u32 %v2081, 7
        %v2083 = vsub.s32 4, %v2082
        %v2084 = vrot.slane %v2061, %v2083
        %v2085 = vlaneseq
        %v2086 = vshrl.u32 %v2085, 7
        %v2087 = vsub.s32 5, %v2086
        %v2088 = vrot.slane %v2061, %v2087
        %v2089 = vlaneseq
        %v2090 = vshrl.u32 %v2089, 7
        %v2091 = vsub.s32 6, %v2090
        %v2092 = vrot.slane %v2061, %v2091
        %v2093 = vlaneseq
        %v2094 = vshrl.u32 %v2093, 7
        %v2095 = vsub.s32 7, %v2094
        %v2096 = vrot.slane %v2061, %v2095
        %v2097 = vlaneseq
        %v2098 = vshrl.u32 %v2097, 7
        %v2099 = vsub.s32 0, %v2098
        %v2100 = vrot.slane %v2062, %v2099
        %v2101 = vlaneseq
        %v2102 = vshrl.u32 %v2101, 7
        %v2103 = vsub.s32 1, %v2102
        %v2104 = vrot.slane %v2062, %v2103
        %v2105 = vlaneseq
        %v2106 = vshrl.u32 %v2105, 7
        %v2107 = vsub.s32 2, %v2106
        %v2108 = vrot.slane %v2062, %v2107
        %v2109 = vlaneseq
        %v2110 = vshrl.u32 %v2109, 7
        %v2111 = vsub.s32 3, %v2110
        %v2112 = vrot.slane %v2062, %v2111
        %v2113 = vlaneseq
        %v2114 = vshrl.u32 %v2113, 7
        %v2115 = vsub.s32 4, %v2114
        %v2116 = vrot.slane %v2062, %v2115
        %v2117 = vlaneseq
        %v2118 = vshrl.u32 %v2117, 7
        %v2119 = vsub.s32 5, %v2118
        %v2120 = vrot.slane %v2062, %v2119
        %v2121 = vlaneseq
        %v2122 = vshrl.u32 %v2121, 7
        %v2123 = vsub.s32 6, %v2122
        %v2124 = vrot.slane %v2062, %v2123
        %v2125 = vlaneseq
        %v2126 = vshrl.u32 %v2125, 7
        %v2127 = vsub.s32 7, %v2126
        %v2128 = vrot.slane %v2062, %v2127
        %v2177 = vunpack.c.l.b16 %v2029
        %v2178 = vunpack.c.h.b16 %v2029
        %v2179 = vunpack.c.l.b16 %v2030
        %v2180 = vunpack.c.h.b16 %v2030
        %v2181 = vunpack.c.l.b16 %v2031
        %v2182 = vunpack.c.h.b16 %v2031
        %v2183 = vunpack.c.l.b16 %v2032
        %v2184 = vunpack.c.h.b16 %v2032
        %v2185 = vunpack.c.l.b16 %v2033
        %v2186 = vunpack.c.h.b16 %v2033
        %v2187 = vunpack.c.l.b16 %v2034
        %v2188 = vunpack.c.h.b16 %v2034
        %v2189 = vunpack.c.l.b16 %v2035
        %v2190 = vunpack.c.h.b16 %v2035
        %v2191 = vunpack.c.l.b16 %v2036
        %v2192 = vunpack.c.h.b16 %v2036
        %v2193 = vunpack.c.l.b16 %v2037
        %v2194 = vunpack.c.h.b16 %v2037
        %v2195 = vunpack.c.l.b16 %v2038
        %v2196 = vunpack.c.h.b16 %v2038
        %v2197 = vunpack.c.l.b16 %v2039
        %v2198 = vunpack.c.h.b16 %v2039
        %v2199 = vunpack.c.l.b16 %v2040
        %v2200 = vunpack.c.h.b16 %v2040
        %v2201 = vunpack.c.l.b16 %v2041
        %v2202 = vunpack.c.h.b16 %v2041
        %v2203 = vunpack.c.l.b16 %v2042
        %v2204 = vunpack.c.h.b16 %v2042
        %v2205 = vunpack.c.l.b16 %v2043
        %v2206 = vunpack.c.h.b16 %v2043
        %v2207 = vunpack.c.l.b16 %v2044
        %v2208 = vunpack.c.h.b16 %v2044
        %v2209 = vunpack.c.l.b16 %v2045
        %v2210 = vunpack.c.h.b16 %v2045
        %v2211 = vunpack.c.l.b16 %v2046
        %v2212 = vunpack.c.h.b16 %v2046
        %v2213 = vunpack.c.l.b16 %v2047
        %v2214 = vunpack.c.h.b16 %v2047
        %v2215 = vunpack.c.l.b16 %v2048
        %v2216 = vunpack.c.h.b16 %v2048
        %v2217 = vunpack.c.l.b16 %v2049
        %v2218 = vunpack.c.h.b16 %v2049
        %v2219 = vunpack.c.l.b16 %v2050
        %v2220 = vunpack.c.h.b16 %v2050
        %v2221 = vunpack.c.l.b16 %v2051
        %v2222 = vunpack.c.h.b16 %v2051
        %v2223 = vunpack.c.l.b16 %v2052
        %v2224 = vunpack.c.h.b16 %v2052
        %v2225 = vunpack.c.l.b16 %v2053
        %v2226 = vunpack.c.h.b16 %v2053
        %v2227 = vunpack.c.l.b16 %v2054
        %v2228 = vunpack.c.h.b16 %v2054
        %v2229 = vunpack.c.l.b16 %v2055
        %v2230 = vunpack.c.h.b16 %v2055
        %v2231 = vunpack.c.l.b16 %v2056
        %v2232 = vunpack.c.h.b16 %v2056
        %v2233 = vunpack.c.l.b16 %v2057
        %v2234 = vunpack.c.h.b16 %v2057
        %v2235 = vunpack.c.l.b16 %v2058
        %v2236 = vunpack.c.h.b16 %v2058
        %v2237 = vunpack.c.l.b16 %v2059
        %v2238 = vunpack.c.h.b16 %v2059
        %v2239 = vunpack.c.l.b16 %v2060
        %v2240 = vunpack.c.h.b16 %v2060
        %v2241 = vpack.c.b16 %v2193, %v2177
        %v2242 = vpack.c.b16 %v2194, %v2178
        %v2243 = vpack.c.b16 %v2195, %v2179
        %v2244 = vpack.c.b16 %v2196, %v2180
        %v2245 = vpack.c.b16 %v2197, %v2181
        %v2246 = vpack.c.b16 %v2198, %v2182
        %v2247 = vpack.c.b16 %v2199, %v2183
        %v2248 = vpack.c.b16 %v2200, %v2184
        %v2249 = vpack.c.b16 %v2201, %v2185
        %v2250 = vpack.c.b16 %v2202, %v2186
        %v2251 = vpack.c.b16 %v2203, %v2187
        %v2252 = vpack.c.b16 %v2204, %v2188
        %v2253 = vpack.c.b16 %v2205, %v2189
        %v2254 = vpack.c.b16 %v2206, %v2190
        %v2255 = vpack.c.b16 %v2207, %v2191
        %v2256 = vpack.c.b16 %v2208, %v2192
        %v2257 = vpack.c.b16 %v2225, %v2209
        %v2258 = vpack.c.b16 %v2226, %v2210
        %v2259 = vpack.c.b16 %v2227, %v2211
        %v2260 = vpack.c.b16 %v2228, %v2212
        %v2261 = vpack.c.b16 %v2229, %v2213
        %v2262 = vpack.c.b16 %v2230, %v2214
        %v2263 = vpack.c.b16 %v2231, %v2215
        %v2264 = vpack.c.b16 %v2232, %v2216
        %v2265 = vpack.c.b16 %v2233, %v2217
        %v2266 = vpack.c.b16 %v2234, %v2218
        %v2267 = vpack.c.b16 %v2235, %v2219
        %v2268 = vpack.c.b16 %v2236, %v2220
        %v2269 = vpack.c.b16 %v2237, %v2221
        %v2270 = vpack.c.b16 %v2238, %v2222
        %v2271 = vpack.c.b16 %v2239, %v2223
        %v2272 = vpack.c.b16 %v2240, %v2224
        %v2306 = vsel %vm868, %v2028, 0
        %2308 = vmatprep.subr.bf16.mxu0 0
        %2309 = vmatpush1.bf16.msra.mxu0 0
        %2310 = vmatprep.subr.bf16.mxu0 0
        %2311 = vmatpush1.bf16.msra.mxu0 0
        %2312 = vmatprep.subr.bf16.mxu0 0
        %2313 = vmatpush1.bf16.msra.mxu0 0
        %2314 = vmatprep.subr.bf16.mxu0 0
        %2315 = vmatpush1.bf16.msra.mxu0 0
        %2316 = vmatprep.subr.bf16.mxu0 0
        %2317 = vmatpush1.bf16.msra.mxu0 0
        %2318 = vmatprep.subr.bf16.mxu0 0
        %2319 = vmatpush1.bf16.msra.mxu0 0
        %2320 = vmatprep.subr.bf16.mxu0 %v2258
        %2321 = vmatpush1.bf16.msra.mxu0 %v2257
        %2322 = vmatprep.subr.bf16.mxu0 %v2242
        %2323 = vmatpush1.bf16.msra.mxu0 %v2241
        %2324 = vmatprep.subr.bf16.mxu0 0
        %2325 = vmatpush2.bf16.msra.mxu0 0
        %2326 = vmatprep.subr.bf16.mxu0 0
        %2327 = vmatpush2.bf16.msra.mxu0 0
        %2328 = vmatprep.subr.bf16.mxu0 0
        %2329 = vmatpush2.bf16.msra.mxu0 0
        %2330 = vmatprep.subr.bf16.mxu0 0
        %2331 = vmatpush2.bf16.msra.mxu0 0
        %2332 = vmatprep.subr.bf16.mxu0 0
        %2333 = vmatpush2.bf16.msra.mxu0 0
        %2334 = vmatprep.subr.bf16.mxu0 0
        %2335 = vmatpush2.bf16.msra.mxu0 0
        %2336 = vmatprep.subr.bf16.mxu0 0
        %2337 = vmatpush2.bf16.msra.mxu0 0
        %2338 = vmatprep.subr.bf16.mxu0 0
        %2339 = vmatpush2.bf16.msra.mxu0 0
        %2340 = vmatprep.mubr.bf16.mxu0 0
        %2341 = vmatmul.mubr.bf16.gmra.mxu0 %v2306
        %v2342 = vpop.f32.mrf.mxu0
        %v2343 = vadd.f32 %v2068, %v2342
        %v2344 = vpop.f32.mrf.mxu0
        %v2345 = vadd.f32 %v2072, %v2344
        %v2346 = vpop.f32.mrf.mxu0
        %v2347 = vadd.f32 %v2068, %v2346
        %v2348 = vpop.f32.mrf.mxu0
        %v2349 = vadd.f32 %v2072, %v2348
        %2350 = vdwg.mxu0
        %2351 = vmatprep.subr.bf16.mxu0 0
        %2352 = vmatpush1.bf16.msra.mxu0 0
        %2353 = vmatprep.subr.bf16.mxu0 0
        %2354 = vmatpush1.bf16.msra.mxu0 0
        %2355 = vmatprep.subr.bf16.mxu0 0
        %2356 = vmatpush1.bf16.msra.mxu0 0
        %2357 = vmatprep.subr.bf16.mxu0 0
        %2358 = vmatpush1.bf16.msra.mxu0 0
        %2359 = vmatprep.subr.bf16.mxu0 0
        %2360 = vmatpush1.bf16.msra.mxu0 0
        %2361 = vmatprep.subr.bf16.mxu0 0
        %2362 = vmatpush1.bf16.msra.mxu0 0
        %2363 = vmatprep.subr.bf16.mxu0 %v2260
        %2364 = vmatpush1.bf16.msra.mxu0 %v2259
        %2365 = vmatprep.subr.bf16.mxu0 %v2244
        %2366 = vmatpush1.bf16.msra.mxu0 %v2243
        %2367 = vmatprep.subr.bf16.mxu0 0
        %2368 = vmatpush2.bf16.msra.mxu0 0
        %2369 = vmatprep.subr.bf16.mxu0 0
        %2370 = vmatpush2.bf16.msra.mxu0 0
        %2371 = vmatprep.subr.bf16.mxu0 0
        %2372 = vmatpush2.bf16.msra.mxu0 0
        %2373 = vmatprep.subr.bf16.mxu0 0
        %2374 = vmatpush2.bf16.msra.mxu0 0
        %2375 = vmatprep.subr.bf16.mxu0 0
        %2376 = vmatpush2.bf16.msra.mxu0 0
        %2377 = vmatprep.subr.bf16.mxu0 0
        %2378 = vmatpush2.bf16.msra.mxu0 0
        %2379 = vmatprep.subr.bf16.mxu0 0
        %2380 = vmatpush2.bf16.msra.mxu0 0
        %2381 = vmatprep.subr.bf16.mxu0 0
        %2382 = vmatpush2.bf16.msra.mxu0 0
        %2383 = vmatprep.mubr.bf16.mxu0 0
        %2384 = vmatmul.mubr.bf16.gmra.mxu0 %v2306
        %v2385 = vpop.f32.mrf.mxu0
        %v2386 = vadd.f32 %v2076, %v2385
        %v2387 = vpop.f32.mrf.mxu0
        %v2388 = vadd.f32 %v2080, %v2387
        %v2389 = vpop.f32.mrf.mxu0
        %v2390 = vadd.f32 %v2076, %v2389
        %v2391 = vpop.f32.mrf.mxu0
        %v2392 = vadd.f32 %v2080, %v2391
        %2393 = vdwg.mxu0
        %2394 = vmatprep.subr.bf16.mxu0 0
        %2395 = vmatpush1.bf16.msra.mxu0 0
        %2396 = vmatprep.subr.bf16.mxu0 0
        %2397 = vmatpush1.bf16.msra.mxu0 0
        %2398 = vmatprep.subr.bf16.mxu0 0
        %2399 = vmatpush1.bf16.msra.mxu0 0
        %2400 = vmatprep.subr.bf16.mxu0 0
        %2401 = vmatpush1.bf16.msra.mxu0 0
        %2402 = vmatprep.subr.bf16.mxu0 0
        %2403 = vmatpush1.bf16.msra.mxu0 0
        %2404 = vmatprep.subr.bf16.mxu0 0
        %2405 = vmatpush1.bf16.msra.mxu0 0
        %2406 = vmatprep.subr.bf16.mxu0 %v2262
        %2407 = vmatpush1.bf16.msra.mxu0 %v2261
        %2408 = vmatprep.subr.bf16.mxu0 %v2246
        %2409 = vmatpush1.bf16.msra.mxu0 %v2245
        %2410 = vmatprep.subr.bf16.mxu0 0
        %2411 = vmatpush2.bf16.msra.mxu0 0
        %2412 = vmatprep.subr.bf16.mxu0 0
        %2413 = vmatpush2.bf16.msra.mxu0 0
        %2414 = vmatprep.subr.bf16.mxu0 0
        %2415 = vmatpush2.bf16.msra.mxu0 0
        %2416 = vmatprep.subr.bf16.mxu0 0
        %2417 = vmatpush2.bf16.msra.mxu0 0
        %2418 = vmatprep.subr.bf16.mxu0 0
        %2419 = vmatpush2.bf16.msra.mxu0 0
        %2420 = vmatprep.subr.bf16.mxu0 0
        %2421 = vmatpush2.bf16.msra.mxu0 0
        %2422 = vmatprep.subr.bf16.mxu0 0
        %2423 = vmatpush2.bf16.msra.mxu0 0
        %2424 = vmatprep.subr.bf16.mxu0 0
        %2425 = vmatpush2.bf16.msra.mxu0 0
        %2426 = vmatprep.mubr.bf16.mxu0 0
        %2427 = vmatmul.mubr.bf16.gmra.mxu0 %v2306
        %v2428 = vpop.f32.mrf.mxu0
        %v2429 = vadd.f32 %v2084, %v2428
        %v2430 = vpop.f32.mrf.mxu0
        %v2431 = vadd.f32 %v2088, %v2430
        %v2432 = vpop.f32.mrf.mxu0
        %v2433 = vadd.f32 %v2084, %v2432
        %v2434 = vpop.f32.mrf.mxu0
        %v2435 = vadd.f32 %v2088, %v2434
        %2436 = vdwg.mxu0
        %2437 = vmatprep.subr.bf16.mxu0 0
        %2438 = vmatpush1.bf16.msra.mxu0 0
        %2439 = vmatprep.subr.bf16.mxu0 0
        %2440 = vmatpush1.bf16.msra.mxu0 0
        %2441 = vmatprep.subr.bf16.mxu0 0
        %2442 = vmatpush1.bf16.msra.mxu0 0
        %2443 = vmatprep.subr.bf16.mxu0 0
        %2444 = vmatpush1.bf16.msra.mxu0 0
        %2445 = vmatprep.subr.bf16.mxu0 0
        %2446 = vmatpush1.bf16.msra.mxu0 0
        %2447 = vmatprep.subr.bf16.mxu0 0
        %2448 = vmatpush1.bf16.msra.mxu0 0
        %2449 = vmatprep.subr.bf16.mxu0 %v2264
        %2450 = vmatpush1.bf16.msra.mxu0 %v2263
        %2451 = vmatprep.subr.bf16.mxu0 %v2248
        %2452 = vmatpush1.bf16.msra.mxu0 %v2247
        %2453 = vmatprep.subr.bf16.mxu0 0
        %2454 = vmatpush2.bf16.msra.mxu0 0
        %2455 = vmatprep.subr.bf16.mxu0 0
        %2456 = vmatpush2.bf16.msra.mxu0 0
        %2457 = vmatprep.subr.bf16.mxu0 0
        %2458 = vmatpush2.bf16.msra.mxu0 0
        %2459 = vmatprep.subr.bf16.mxu0 0
        %2460 = vmatpush2.bf16.msra.mxu0 0
        %2461 = vmatprep.subr.bf16.mxu0 0
        %2462 = vmatpush2.bf16.msra.mxu0 0
        %2463 = vmatprep.subr.bf16.mxu0 0
        %2464 = vmatpush2.bf16.msra.mxu0 0
        %2465 = vmatprep.subr.bf16.mxu0 0
        %2466 = vmatpush2.bf16.msra.mxu0 0
        %2467 = vmatprep.subr.bf16.mxu0 0
        %2468 = vmatpush2.bf16.msra.mxu0 0
        %2469 = vmatprep.mubr.bf16.mxu0 0
        %2470 = vmatmul.mubr.bf16.gmra.mxu0 %v2306
        %v2471 = vpop.f32.mrf.mxu0
        %v2472 = vadd.f32 %v2092, %v2471
        %v2473 = vpop.f32.mrf.mxu0
        %v2474 = vadd.f32 %v2096, %v2473
        %v2475 = vpop.f32.mrf.mxu0
        %v2476 = vadd.f32 %v2092, %v2475
        %v2477 = vpop.f32.mrf.mxu0
        %v2478 = vadd.f32 %v2096, %v2477
        %2479 = vdwg.mxu0
        %2480 = vmatprep.subr.bf16.mxu0 0
        %2481 = vmatpush1.bf16.msra.mxu0 0
        %2482 = vmatprep.subr.bf16.mxu0 0
        %2483 = vmatpush1.bf16.msra.mxu0 0
        %2484 = vmatprep.subr.bf16.mxu0 0
        %2485 = vmatpush1.bf16.msra.mxu0 0
        %2486 = vmatprep.subr.bf16.mxu0 0
        %2487 = vmatpush1.bf16.msra.mxu0 0
        %2488 = vmatprep.subr.bf16.mxu0 0
        %2489 = vmatpush1.bf16.msra.mxu0 0
        %2490 = vmatprep.subr.bf16.mxu0 0
        %2491 = vmatpush1.bf16.msra.mxu0 0
        %2492 = vmatprep.subr.bf16.mxu0 %v2266
        %2493 = vmatpush1.bf16.msra.mxu0 %v2265
        %2494 = vmatprep.subr.bf16.mxu0 %v2250
        %2495 = vmatpush1.bf16.msra.mxu0 %v2249
        %2496 = vmatprep.subr.bf16.mxu0 0
        %2497 = vmatpush2.bf16.msra.mxu0 0
        %2498 = vmatprep.subr.bf16.mxu0 0
        %2499 = vmatpush2.bf16.msra.mxu0 0
        %2500 = vmatprep.subr.bf16.mxu0 0
        %2501 = vmatpush2.bf16.msra.mxu0 0
        %2502 = vmatprep.subr.bf16.mxu0 0
        %2503 = vmatpush2.bf16.msra.mxu0 0
        %2504 = vmatprep.subr.bf16.mxu0 0
        %2505 = vmatpush2.bf16.msra.mxu0 0
        %2506 = vmatprep.subr.bf16.mxu0 0
        %2507 = vmatpush2.bf16.msra.mxu0 0
        %2508 = vmatprep.subr.bf16.mxu0 0
        %2509 = vmatpush2.bf16.msra.mxu0 0
        %2510 = vmatprep.subr.bf16.mxu0 0
        %2511 = vmatpush2.bf16.msra.mxu0 0
        %2512 = vmatprep.mubr.bf16.mxu0 0
        %2513 = vmatmul.mubr.bf16.gmra.mxu0 %v2306
        %v2514 = vpop.f32.mrf.mxu0
        %v2515 = vadd.f32 %v2100, %v2514
        %v2516 = vpop.f32.mrf.mxu0
        %v2517 = vadd.f32 %v2104, %v2516
        %v2518 = vpop.f32.mrf.mxu0
        %v2519 = vadd.f32 %v2100, %v2518
        %v2520 = vpop.f32.mrf.mxu0
        %v2521 = vadd.f32 %v2104, %v2520
        %2522 = vdwg.mxu0
        %2523 = vmatprep.subr.bf16.mxu0 0
        %2524 = vmatpush1.bf16.msra.mxu0 0
        %2525 = vmatprep.subr.bf16.mxu0 0
        %2526 = vmatpush1.bf16.msra.mxu0 0
        %2527 = vmatprep.subr.bf16.mxu0 0
        %2528 = vmatpush1.bf16.msra.mxu0 0
        %2529 = vmatprep.subr.bf16.mxu0 0
        %2530 = vmatpush1.bf16.msra.mxu0 0
        %2531 = vmatprep.subr.bf16.mxu0 0
        %2532 = vmatpush1.bf16.msra.mxu0 0
        %2533 = vmatprep.subr.bf16.mxu0 0
        %2534 = vmatpush1.bf16.msra.mxu0 0
        %2535 = vmatprep.subr.bf16.mxu0 %v2268
        %2536 = vmatpush1.bf16.msra.mxu0 %v2267
        %2537 = vmatprep.subr.bf16.mxu0 %v2252
        %2538 = vmatpush1.bf16.msra.mxu0 %v2251
        %2539 = vmatprep.subr.bf16.mxu0 0
        %2540 = vmatpush2.bf16.msra.mxu0 0
        %2541 = vmatprep.subr.bf16.mxu0 0
        %2542 = vmatpush2.bf16.msra.mxu0 0
        %2543 = vmatprep.subr.bf16.mxu0 0
        %2544 = vmatpush2.bf16.msra.mxu0 0
        %2545 = vmatprep.subr.bf16.mxu0 0
        %2546 = vmatpush2.bf16.msra.mxu0 0
        %2547 = vmatprep.subr.bf16.mxu0 0
        %2548 = vmatpush2.bf16.msra.mxu0 0
        %2549 = vmatprep.subr.bf16.mxu0 0
        %2550 = vmatpush2.bf16.msra.mxu0 0
        %2551 = vmatprep.subr.bf16.mxu0 0
        %2552 = vmatpush2.bf16.msra.mxu0 0
        %2553 = vmatprep.subr.bf16.mxu0 0
        %2554 = vmatpush2.bf16.msra.mxu0 0
        %2555 = vmatprep.mubr.bf16.mxu0 0
        %2556 = vmatmul.mubr.bf16.gmra.mxu0 %v2306
        %v2557 = vpop.f32.mrf.mxu0
        %v2558 = vadd.f32 %v2108, %v2557
        %v2559 = vpop.f32.mrf.mxu0
        %v2560 = vadd.f32 %v2112, %v2559
        %v2561 = vpop.f32.mrf.mxu0
        %v2562 = vadd.f32 %v2108, %v2561
        %v2563 = vpop.f32.mrf.mxu0
        %v2564 = vadd.f32 %v2112, %v2563
        %2565 = vdwg.mxu0
        %2566 = vmatprep.subr.bf16.mxu0 0
        %2567 = vmatpush1.bf16.msra.mxu0 0
        %2568 = vmatprep.subr.bf16.mxu0 0
        %2569 = vmatpush1.bf16.msra.mxu0 0
        %2570 = vmatprep.subr.bf16.mxu0 0
        %2571 = vmatpush1.bf16.msra.mxu0 0
        %2572 = vmatprep.subr.bf16.mxu0 0
        %2573 = vmatpush1.bf16.msra.mxu0 0
        %2574 = vmatprep.subr.bf16.mxu0 0
        %2575 = vmatpush1.bf16.msra.mxu0 0
        %2576 = vmatprep.subr.bf16.mxu0 0
        %2577 = vmatpush1.bf16.msra.mxu0 0
        %2578 = vmatprep.subr.bf16.mxu0 %v2270
        %2579 = vmatpush1.bf16.msra.mxu0 %v2269
        %2580 = vmatprep.subr.bf16.mxu0 %v2254
        %2581 = vmatpush1.bf16.msra.mxu0 %v2253
        %2582 = vmatprep.subr.bf16.mxu0 0
        %2583 = vmatpush2.bf16.msra.mxu0 0
        %2584 = vmatprep.subr.bf16.mxu0 0
        %2585 = vmatpush2.bf16.msra.mxu0 0
        %2586 = vmatprep.subr.bf16.mxu0 0
        %2587 = vmatpush2.bf16.msra.mxu0 0
        %2588 = vmatprep.subr.bf16.mxu0 0
        %2589 = vmatpush2.bf16.msra.mxu0 0
        %2590 = vmatprep.subr.bf16.mxu0 0
        %2591 = vmatpush2.bf16.msra.mxu0 0
        %2592 = vmatprep.subr.bf16.mxu0 0
        %2593 = vmatpush2.bf16.msra.mxu0 0
        %2594 = vmatprep.subr.bf16.mxu0 0
        %2595 = vmatpush2.bf16.msra.mxu0 0
        %2596 = vmatprep.subr.bf16.mxu0 0
        %2597 = vmatpush2.bf16.msra.mxu0 0
        %2598 = vmatprep.mubr.bf16.mxu0 0
        %2599 = vmatmul.mubr.bf16.gmra.mxu0 %v2306
        %v2600 = vpop.f32.mrf.mxu0
        %v2601 = vadd.f32 %v2116, %v2600
        %v2602 = vpop.f32.mrf.mxu0
        %v2603 = vadd.f32 %v2120, %v2602
        %v2604 = vpop.f32.mrf.mxu0
        %v2605 = vadd.f32 %v2116, %v2604
        %v2606 = vpop.f32.mrf.mxu0
        %v2607 = vadd.f32 %v2120, %v2606
        %2608 = vdwg.mxu0
        %2609 = vmatprep.subr.bf16.mxu0 0
        %2610 = vmatpush1.bf16.msra.mxu0 0
        %2611 = vmatprep.subr.bf16.mxu0 0
        %2612 = vmatpush1.bf16.msra.mxu0 0
        %2613 = vmatprep.subr.bf16.mxu0 0
        %2614 = vmatpush1.bf16.msra.mxu0 0
        %2615 = vmatprep.subr.bf16.mxu0 0
        %2616 = vmatpush1.bf16.msra.mxu0 0
        %2617 = vmatprep.subr.bf16.mxu0 0
        %2618 = vmatpush1.bf16.msra.mxu0 0
        %2619 = vmatprep.subr.bf16.mxu0 0
        %2620 = vmatpush1.bf16.msra.mxu0 0
        %2621 = vmatprep.subr.bf16.mxu0 %v2272
        %2622 = vmatpush1.bf16.msra.mxu0 %v2271
        %2623 = vmatprep.subr.bf16.mxu0 %v2256
        %2624 = vmatpush1.bf16.msra.mxu0 %v2255
        %2625 = vmatprep.subr.bf16.mxu0 0
        %2626 = vmatpush2.bf16.msra.mxu0 0
        %2627 = vmatprep.subr.bf16.mxu0 0
        %2628 = vmatpush2.bf16.msra.mxu0 0
        %2629 = vmatprep.subr.bf16.mxu0 0
        %2630 = vmatpush2.bf16.msra.mxu0 0
        %2631 = vmatprep.subr.bf16.mxu0 0
        %2632 = vmatpush2.bf16.msra.mxu0 0
        %2633 = vmatprep.subr.bf16.mxu0 0
        %2634 = vmatpush2.bf16.msra.mxu0 0
        %2635 = vmatprep.subr.bf16.mxu0 0
        %2636 = vmatpush2.bf16.msra.mxu0 0
        %2637 = vmatprep.subr.bf16.mxu0 0
        %2638 = vmatpush2.bf16.msra.mxu0 0
        %2639 = vmatprep.subr.bf16.mxu0 0
        %2640 = vmatpush2.bf16.msra.mxu0 0
        %2641 = vmatprep.mubr.bf16.mxu0 0
        %2642 = vmatmul.mubr.bf16.gmra.mxu0 %v2306
        %v2643 = vpop.f32.mrf.mxu0
        %v2644 = vadd.f32 %v2124, %v2643
        %v2645 = vpop.f32.mrf.mxu0
        %v2646 = vadd.f32 %v2128, %v2645
        %v2647 = vpop.f32.mrf.mxu0
        %v2648 = vadd.f32 %v2124, %v2647
        %v2649 = vpop.f32.mrf.mxu0
        %v2650 = vadd.f32 %v2128, %v2649
        %2651 = vdwg.mxu0
        %v2652 = vmax.f32 %v2343, 0.0
        %v2653 = vmax.f32 %v2345, 0.0
        %v2654 = vmax.f32 %v2386, 0.0
        %v2655 = vmax.f32 %v2388, 0.0
        %v2656 = vmax.f32 %v2429, 0.0
        %v2657 = vmax.f32 %v2431, 0.0
        %v2658 = vmax.f32 %v2472, 0.0
        %v2659 = vmax.f32 %v2474, 0.0
        %v2660 = vmax.f32 %v2515, 0.0
        %v2661 = vmax.f32 %v2517, 0.0
        %v2662 = vmax.f32 %v2558, 0.0
        %v2663 = vmax.f32 %v2560, 0.0
        %v2664 = vmax.f32 %v2601, 0.0
        %v2665 = vmax.f32 %v2603, 0.0
        %v2666 = vmax.f32 %v2644, 0.0
        %v2667 = vmax.f32 %v2646, 0.0
        %v2668 = vmax.f32 %v2347, 0.0
        %v2669 = vmax.f32 %v2349, 0.0
        %v2670 = vmax.f32 %v2390, 0.0
        %v2671 = vmax.f32 %v2392, 0.0
        %v2672 = vmax.f32 %v2433, 0.0
        %v2673 = vmax.f32 %v2435, 0.0
        %v2674 = vmax.f32 %v2476, 0.0
        %v2675 = vmax.f32 %v2478, 0.0
        %v2676 = vmax.f32 %v2519, 0.0
        %v2677 = vmax.f32 %v2521, 0.0
        %v2678 = vmax.f32 %v2562, 0.0
        %v2679 = vmax.f32 %v2564, 0.0
        %v2680 = vmax.f32 %v2605, 0.0
        %v2681 = vmax.f32 %v2607, 0.0
        %v2682 = vmax.f32 %v2648, 0.0
        %v2683 = vmax.f32 %v2650, 0.0
        %v2684 = vpack.c.bf16 %v2668, %v2652
        %v2685 = vpack.c.bf16 %v2669, %v2653
        %v2686 = vpack.c.bf16 %v2670, %v2654
        %v2687 = vpack.c.bf16 %v2671, %v2655
        %v2688 = vpack.c.bf16 %v2672, %v2656
        %v2689 = vpack.c.bf16 %v2673, %v2657
        %v2690 = vpack.c.bf16 %v2674, %v2658
        %v2691 = vpack.c.bf16 %v2675, %v2659
        %v2692 = vpack.c.bf16 %v2676, %v2660
        %v2693 = vpack.c.bf16 %v2677, %v2661
        %v2694 = vpack.c.bf16 %v2678, %v2662
        %v2695 = vpack.c.bf16 %v2679, %v2663
        %v2696 = vpack.c.bf16 %v2680, %v2664
        %v2697 = vpack.c.bf16 %v2681, %v2665
        %v2698 = vpack.c.bf16 %v2682, %v2666
        %v2699 = vpack.c.bf16 %v2683, %v2667
        %v2700 = vld [vmem:[%s828] sm:$0xf]
        %v2701 = vld [vmem:[%s828 + $0x4] sm:$0xf]
        %v2702 = vld [vmem:[%s828 + $0x8] sm:$0xf]
        %v2703 = vld [vmem:[%s828 + $0xc] sm:$0xf]
        %v2704 = vld [vmem:[%s828 + $0x10] sm:$0xf]
        %v2705 = vld [vmem:[%s828 + $0x14] sm:$0xf]
        %v2706 = vld [vmem:[%s828 + $0x18] sm:$0xf]
        %v2707 = vld [vmem:[%s828 + $0x1c] sm:$0xf]
        %v2708 = vld [vmem:[%s828 + $0x20] sm:$0xf]
        %v2709 = vld [vmem:[%s828 + $0x24] sm:$0xf]
        %v2710 = vld [vmem:[%s828 + $0x28] sm:$0xf]
        %v2711 = vld [vmem:[%s828 + $0x2c] sm:$0xf]
        %v2712 = vld [vmem:[%s828 + $0x30] sm:$0xf]
        %v2713 = vld [vmem:[%s828 + $0x34] sm:$0xf]
        %v2714 = vld [vmem:[%s828 + $0x38] sm:$0xf]
        %v2715 = vld [vmem:[%s828 + $0x3c] sm:$0xf]
        %v2716 = vld [vmem:[%s828 + $0x40] sm:$0xf]
        %v2717 = vld [vmem:[%s828 + $0x44] sm:$0xf]
        %v2718 = vld [vmem:[%s828 + $0x48] sm:$0xf]
        %v2719 = vld [vmem:[%s828 + $0x4c] sm:$0xf]
        %v2720 = vld [vmem:[%s828 + $0x50] sm:$0xf]
        %v2721 = vld [vmem:[%s828 + $0x54] sm:$0xf]
        %v2722 = vld [vmem:[%s828 + $0x58] sm:$0xf]
        %v2723 = vld [vmem:[%s828 + $0x5c] sm:$0xf]
        %v2724 = vld [vmem:[%s828 + $0x60] sm:$0xf]
        %v2725 = vld [vmem:[%s828 + $0x64] sm:$0xf]
        %v2726 = vld [vmem:[%s828 + $0x68] sm:$0xf]
        %v2727 = vld [vmem:[%s828 + $0x6c] sm:$0xf]
        %v2728 = vld [vmem:[%s828 + $0x70] sm:$0xf]
        %v2729 = vld [vmem:[%s828 + $0x74] sm:$0xf]
        %v2730 = vld [vmem:[%s828 + $0x78] sm:$0xf]
        %v2731 = vld [vmem:[%s828 + $0x7c] sm:$0xf]
        %v2732 = vld [vmem:[%s828 + $0x80] sm:$0xf]
        %v2733 = vld [vmem:[%s828 + $0x84] sm:$0xf]
        %v2734 = vld [vmem:[%s828 + $0x88] sm:$0xf]
        %v2735 = vld [vmem:[%s828 + $0x8c] sm:$0xf]
        %v2736 = vld [vmem:[%s828 + $0x90] sm:$0xf]
        %v2737 = vld [vmem:[%s828 + $0x94] sm:$0xf]
        %v2738 = vld [vmem:[%s828 + $0x98] sm:$0xf]
        %v2739 = vld [vmem:[%s828 + $0x9c] sm:$0xf]
        %v2740 = vld [vmem:[%s828 + $0xa0] sm:$0xf]
        %v2741 = vld [vmem:[%s828 + $0xa4] sm:$0xf]
        %v2742 = vld [vmem:[%s828 + $0xa8] sm:$0xf]
        %v2743 = vld [vmem:[%s828 + $0xac] sm:$0xf]
        %v2744 = vld [vmem:[%s828 + $0xb0] sm:$0xf]
        %v2745 = vld [vmem:[%s828 + $0xb4] sm:$0xf]
        %v2746 = vld [vmem:[%s828 + $0xb8] sm:$0xf]
        %v2747 = vld [vmem:[%s828 + $0xbc] sm:$0xf]
        %v2748 = vld [vmem:[%s828 + $0xc0] sm:$0xf]
        %v2749 = vld [vmem:[%s828 + $0xc4] sm:$0xf]
        %v2750 = vld [vmem:[%s828 + $0xc8] sm:$0xf]
        %v2751 = vld [vmem:[%s828 + $0xcc] sm:$0xf]
        %v2752 = vld [vmem:[%s828 + $0xd0] sm:$0xf]
        %v2753 = vld [vmem:[%s828 + $0xd4] sm:$0xf]
        %v2754 = vld [vmem:[%s828 + $0xd8] sm:$0xf]
        %v2755 = vld [vmem:[%s828 + $0xdc] sm:$0xf]
        %v2756 = vld [vmem:[%s828 + $0xe0] sm:$0xf]
        %v2757 = vld [vmem:[%s828 + $0xe4] sm:$0xf]
        %v2758 = vld [vmem:[%s828 + $0xe8] sm:$0xf]
        %v2759 = vld [vmem:[%s828 + $0xec] sm:$0xf]
        %v2760 = vld [vmem:[%s828 + $0xf0] sm:$0xf]
        %v2761 = vld [vmem:[%s828 + $0xf4] sm:$0xf]
        %v2762 = vld [vmem:[%s828 + $0xf8] sm:$0xf]
        %v2763 = vld [vmem:[%s828 + $0xfc] sm:$0xf]
        %v2764 = vld [vmem:[%s828 + $0x100] sm:$0xf]
        %v2765 = vld [vmem:[%s828 + $0x104] sm:$0xf]
        %v2766 = vld [vmem:[%s828 + $0x108] sm:$0xf]
        %v2767 = vld [vmem:[%s828 + $0x10c] sm:$0xf]
        %v2768 = vld [vmem:[%s828 + $0x110] sm:$0xf]
        %v2769 = vld [vmem:[%s828 + $0x114] sm:$0xf]
        %v2770 = vld [vmem:[%s828 + $0x118] sm:$0xf]
        %v2771 = vld [vmem:[%s828 + $0x11c] sm:$0xf]
        %v2772 = vld [vmem:[%s828 + $0x120] sm:$0xf]
        %v2773 = vld [vmem:[%s828 + $0x124] sm:$0xf]
        %v2774 = vld [vmem:[%s828 + $0x128] sm:$0xf]
        %v2775 = vld [vmem:[%s828 + $0x12c] sm:$0xf]
        %v2776 = vld [vmem:[%s828 + $0x130] sm:$0xf]
        %v2777 = vld [vmem:[%s828 + $0x134] sm:$0xf]
        %v2778 = vld [vmem:[%s828 + $0x138] sm:$0xf]
        %v2779 = vld [vmem:[%s828 + $0x13c] sm:$0xf]
        %v2780 = vld [vmem:[%s828 + $0x140] sm:$0xf]
        %v2781 = vld [vmem:[%s828 + $0x144] sm:$0xf]
        %v2782 = vld [vmem:[%s828 + $0x148] sm:$0xf]
        %v2783 = vld [vmem:[%s828 + $0x14c] sm:$0xf]
        %v2784 = vld [vmem:[%s828 + $0x150] sm:$0xf]
        %v2785 = vld [vmem:[%s828 + $0x154] sm:$0xf]
        %v2786 = vld [vmem:[%s828 + $0x158] sm:$0xf]
        %v2787 = vld [vmem:[%s828 + $0x15c] sm:$0xf]
        %v2788 = vld [vmem:[%s828 + $0x160] sm:$0xf]
        %v2789 = vld [vmem:[%s828 + $0x164] sm:$0xf]
        %v2790 = vld [vmem:[%s828 + $0x168] sm:$0xf]
        %v2791 = vld [vmem:[%s828 + $0x16c] sm:$0xf]
        %v2792 = vld [vmem:[%s828 + $0x170] sm:$0xf]
        %v2793 = vld [vmem:[%s828 + $0x174] sm:$0xf]
        %v2794 = vld [vmem:[%s828 + $0x178] sm:$0xf]
        %v2795 = vld [vmem:[%s828 + $0x17c] sm:$0xf]
        %v2796 = vld [vmem:[%s828 + $0x180] sm:$0xf]
        %v2797 = vld [vmem:[%s828 + $0x184] sm:$0xf]
        %v2798 = vld [vmem:[%s828 + $0x188] sm:$0xf]
        %v2799 = vld [vmem:[%s828 + $0x18c] sm:$0xf]
        %v2800 = vld [vmem:[%s828 + $0x190] sm:$0xf]
        %v2801 = vld [vmem:[%s828 + $0x194] sm:$0xf]
        %v2802 = vld [vmem:[%s828 + $0x198] sm:$0xf]
        %v2803 = vld [vmem:[%s828 + $0x19c] sm:$0xf]
        %v2804 = vld [vmem:[%s828 + $0x1a0] sm:$0xf]
        %v2805 = vld [vmem:[%s828 + $0x1a4] sm:$0xf]
        %v2806 = vld [vmem:[%s828 + $0x1a8] sm:$0xf]
        %v2807 = vld [vmem:[%s828 + $0x1ac] sm:$0xf]
        %v2808 = vld [vmem:[%s828 + $0x1b0] sm:$0xf]
        %v2809 = vld [vmem:[%s828 + $0x1b4] sm:$0xf]
        %v2810 = vld [vmem:[%s828 + $0x1b8] sm:$0xf]
        %v2811 = vld [vmem:[%s828 + $0x1bc] sm:$0xf]
        %v2812 = vld [vmem:[%s828 + $0x1c0] sm:$0xf]
        %v2813 = vld [vmem:[%s828 + $0x1c4] sm:$0xf]
        %v2814 = vld [vmem:[%s828 + $0x1c8] sm:$0xf]
        %v2815 = vld [vmem:[%s828 + $0x1cc] sm:$0xf]
        %v2816 = vld [vmem:[%s828 + $0x1d0] sm:$0xf]
        %v2817 = vld [vmem:[%s828 + $0x1d4] sm:$0xf]
        %v2818 = vld [vmem:[%s828 + $0x1d8] sm:$0xf]
        %v2819 = vld [vmem:[%s828 + $0x1dc] sm:$0xf]
        %v2820 = vld [vmem:[%s828 + $0x1e0] sm:$0xf]
        %v2821 = vld [vmem:[%s828 + $0x1e4] sm:$0xf]
        %v2822 = vld [vmem:[%s828 + $0x1e8] sm:$0xf]
        %v2823 = vld [vmem:[%s828 + $0x1ec] sm:$0xf]
        %v2824 = vld [vmem:[%s828 + $0x1f0] sm:$0xf]
        %v2825 = vld [vmem:[%s828 + $0x1f4] sm:$0xf]
        %v2826 = vld [vmem:[%s828 + $0x1f8] sm:$0xf]
        %v2827 = vld [vmem:[%s828 + $0x1fc] sm:$0xf]
        %v2828 = vld [vmem:[%s828 + $0x200] sm:$0xf]
        %v2829 = vld [vmem:[%s828 + $0x204] sm:$0xf]
        %v2830 = vld [vmem:[%s828 + $0x208] sm:$0xf]
        %v2831 = vld [vmem:[%s828 + $0x20c] sm:$0xf]
        %v2832 = vld [vmem:[%s828 + $0x210] sm:$0xf]
        %v2833 = vld [vmem:[%s828 + $0x214] sm:$0xf]
        %v2834 = vld [vmem:[%s828 + $0x218] sm:$0xf]
        %v2835 = vld [vmem:[%s828 + $0x21c] sm:$0xf]
        %v2836 = vld [vmem:[%s828 + $0x220] sm:$0xf]
        %v2837 = vld [vmem:[%s828 + $0x224] sm:$0xf]
        %v2838 = vld [vmem:[%s828 + $0x228] sm:$0xf]
        %v2839 = vld [vmem:[%s828 + $0x22c] sm:$0xf]
        %v2840 = vld [vmem:[%s828 + $0x230] sm:$0xf]
        %v2841 = vld [vmem:[%s828 + $0x234] sm:$0xf]
        %v2842 = vld [vmem:[%s828 + $0x238] sm:$0xf]
        %v2843 = vld [vmem:[%s828 + $0x23c] sm:$0xf]
        %v2844 = vld [vmem:[%s828 + $0x240] sm:$0xf]
        %v2845 = vld [vmem:[%s828 + $0x244] sm:$0xf]
        %v2846 = vld [vmem:[%s828 + $0x248] sm:$0xf]
        %v2847 = vld [vmem:[%s828 + $0x24c] sm:$0xf]
        %v2848 = vld [vmem:[%s828 + $0x250] sm:$0xf]
        %v2849 = vld [vmem:[%s828 + $0x254] sm:$0xf]
        %v2850 = vld [vmem:[%s828 + $0x258] sm:$0xf]
        %v2851 = vld [vmem:[%s828 + $0x25c] sm:$0xf]
        %v2852 = vld [vmem:[%s828 + $0x260] sm:$0xf]
        %v2853 = vld [vmem:[%s828 + $0x264] sm:$0xf]
        %v2854 = vld [vmem:[%s828 + $0x268] sm:$0xf]
        %v2855 = vld [vmem:[%s828 + $0x26c] sm:$0xf]
        %v2856 = vld [vmem:[%s828 + $0x270] sm:$0xf]
        %v2857 = vld [vmem:[%s828 + $0x274] sm:$0xf]
        %v2858 = vld [vmem:[%s828 + $0x278] sm:$0xf]
        %v2859 = vld [vmem:[%s828 + $0x27c] sm:$0xf]
        %v2860 = vld [vmem:[%s828 + $0x280] sm:$0xf]
        %v2861 = vld [vmem:[%s828 + $0x284] sm:$0xf]
        %v2862 = vld [vmem:[%s828 + $0x288] sm:$0xf]
        %v2863 = vld [vmem:[%s828 + $0x28c] sm:$0xf]
        %v2864 = vld [vmem:[%s828 + $0x290] sm:$0xf]
        %v2865 = vld [vmem:[%s828 + $0x294] sm:$0xf]
        %v2866 = vld [vmem:[%s828 + $0x298] sm:$0xf]
        %v2867 = vld [vmem:[%s828 + $0x29c] sm:$0xf]
        %v2868 = vld [vmem:[%s828 + $0x2a0] sm:$0xf]
        %v2869 = vld [vmem:[%s828 + $0x2a4] sm:$0xf]
        %v2870 = vld [vmem:[%s828 + $0x2a8] sm:$0xf]
        %v2871 = vld [vmem:[%s828 + $0x2ac] sm:$0xf]
        %v2872 = vld [vmem:[%s828 + $0x2b0] sm:$0xf]
        %v2873 = vld [vmem:[%s828 + $0x2b4] sm:$0xf]
        %v2874 = vld [vmem:[%s828 + $0x2b8] sm:$0xf]
        %v2875 = vld [vmem:[%s828 + $0x2bc] sm:$0xf]
        %v2876 = vld [vmem:[%s828 + $0x2c0] sm:$0xf]
        %v2877 = vld [vmem:[%s828 + $0x2c4] sm:$0xf]
        %v2878 = vld [vmem:[%s828 + $0x2c8] sm:$0xf]
        %v2879 = vld [vmem:[%s828 + $0x2cc] sm:$0xf]
        %v2880 = vld [vmem:[%s828 + $0x2d0] sm:$0xf]
        %v2881 = vld [vmem:[%s828 + $0x2d4] sm:$0xf]
        %v2882 = vld [vmem:[%s828 + $0x2d8] sm:$0xf]
        %v2883 = vld [vmem:[%s828 + $0x2dc] sm:$0xf]
        %v2884 = vld [vmem:[%s828 + $0x2e0] sm:$0xf]
        %v2885 = vld [vmem:[%s828 + $0x2e4] sm:$0xf]
        %v2886 = vld [vmem:[%s828 + $0x2e8] sm:$0xf]
        %v2887 = vld [vmem:[%s828 + $0x2ec] sm:$0xf]
        %v2888 = vld [vmem:[%s828 + $0x2f0] sm:$0xf]
        %v2889 = vld [vmem:[%s828 + $0x2f4] sm:$0xf]
        %v2890 = vld [vmem:[%s828 + $0x2f8] sm:$0xf]
        %v2891 = vld [vmem:[%s828 + $0x2fc] sm:$0xf]
        %v2892 = vld [vmem:[%s828 + $0x300] sm:$0xf]
        %v2893 = vld [vmem:[%s828 + $0x304] sm:$0xf]
        %v2894 = vld [vmem:[%s828 + $0x308] sm:$0xf]
        %v2895 = vld [vmem:[%s828 + $0x30c] sm:$0xf]
        %v2896 = vld [vmem:[%s828 + $0x310] sm:$0xf]
        %v2897 = vld [vmem:[%s828 + $0x314] sm:$0xf]
        %v2898 = vld [vmem:[%s828 + $0x318] sm:$0xf]
        %v2899 = vld [vmem:[%s828 + $0x31c] sm:$0xf]
        %v2900 = vld [vmem:[%s828 + $0x320] sm:$0xf]
        %v2901 = vld [vmem:[%s828 + $0x324] sm:$0xf]
        %v2902 = vld [vmem:[%s828 + $0x328] sm:$0xf]
        %v2903 = vld [vmem:[%s828 + $0x32c] sm:$0xf]
        %v2904 = vld [vmem:[%s828 + $0x330] sm:$0xf]
        %v2905 = vld [vmem:[%s828 + $0x334] sm:$0xf]
        %v2906 = vld [vmem:[%s828 + $0x338] sm:$0xf]
        %v2907 = vld [vmem:[%s828 + $0x33c] sm:$0xf]
        %v2908 = vld [vmem:[%s828 + $0x340] sm:$0xf]
        %v2909 = vld [vmem:[%s828 + $0x344] sm:$0xf]
        %v2910 = vld [vmem:[%s828 + $0x348] sm:$0xf]
        %v2911 = vld [vmem:[%s828 + $0x34c] sm:$0xf]
        %v2912 = vld [vmem:[%s828 + $0x350] sm:$0xf]
        %v2913 = vld [vmem:[%s828 + $0x354] sm:$0xf]
        %v2914 = vld [vmem:[%s828 + $0x358] sm:$0xf]
        %v2915 = vld [vmem:[%s828 + $0x35c] sm:$0xf]
        %v2916 = vld [vmem:[%s828 + $0x360] sm:$0xf]
        %v2917 = vld [vmem:[%s828 + $0x364] sm:$0xf]
        %v2918 = vld [vmem:[%s828 + $0x368] sm:$0xf]
        %v2919 = vld [vmem:[%s828 + $0x36c] sm:$0xf]
        %v2920 = vld [vmem:[%s828 + $0x370] sm:$0xf]
        %v2921 = vld [vmem:[%s828 + $0x374] sm:$0xf]
        %v2922 = vld [vmem:[%s828 + $0x378] sm:$0xf]
        %v2923 = vld [vmem:[%s828 + $0x37c] sm:$0xf]
        %v2924 = vld [vmem:[%s828 + $0x380] sm:$0xf]
        %v2925 = vld [vmem:[%s828 + $0x384] sm:$0xf]
        %v2926 = vld [vmem:[%s828 + $0x388] sm:$0xf]
        %v2927 = vld [vmem:[%s828 + $0x38c] sm:$0xf]
        %v2928 = vld [vmem:[%s828 + $0x390] sm:$0xf]
        %v2929 = vld [vmem:[%s828 + $0x394] sm:$0xf]
        %v2930 = vld [vmem:[%s828 + $0x398] sm:$0xf]
        %v2931 = vld [vmem:[%s828 + $0x39c] sm:$0xf]
        %v2932 = vld [vmem:[%s828 + $0x3a0] sm:$0xf]
        %v2933 = vld [vmem:[%s828 + $0x3a4] sm:$0xf]
        %v2934 = vld [vmem:[%s828 + $0x3a8] sm:$0xf]
        %v2935 = vld [vmem:[%s828 + $0x3ac] sm:$0xf]
        %v2936 = vld [vmem:[%s828 + $0x3b0] sm:$0xf]
        %v2937 = vld [vmem:[%s828 + $0x3b4] sm:$0xf]
        %v2938 = vld [vmem:[%s828 + $0x3b8] sm:$0xf]
        %v2939 = vld [vmem:[%s828 + $0x3bc] sm:$0xf]
        %v2940 = vld [vmem:[%s828 + $0x3c0] sm:$0xf]
        %v2941 = vld [vmem:[%s828 + $0x3c4] sm:$0xf]
        %v2942 = vld [vmem:[%s828 + $0x3c8] sm:$0xf]
        %v2943 = vld [vmem:[%s828 + $0x3cc] sm:$0xf]
        %v2944 = vld [vmem:[%s828 + $0x3d0] sm:$0xf]
        %v2945 = vld [vmem:[%s828 + $0x3d4] sm:$0xf]
        %v2946 = vld [vmem:[%s828 + $0x3d8] sm:$0xf]
        %v2947 = vld [vmem:[%s828 + $0x3dc] sm:$0xf]
        %v2948 = vld [vmem:[%s828 + $0x3e0] sm:$0xf]
        %v2949 = vld [vmem:[%s828 + $0x3e4] sm:$0xf]
        %v2950 = vld [vmem:[%s828 + $0x3e8] sm:$0xf]
        %v2951 = vld [vmem:[%s828 + $0x3ec] sm:$0xf]
        %v2952 = vld [vmem:[%s828 + $0x3f0] sm:$0xf]
        %v2953 = vld [vmem:[%s828 + $0x3f4] sm:$0xf]
        %v2954 = vld [vmem:[%s828 + $0x3f8] sm:$0xf]
        %v2955 = vld [vmem:[%s828 + $0x3fc] sm:$0xf]
        %v2956 = vld [vmem:[%s831] sm:$0x1]
        %v2958 = vlaneseq
        %v2959 = vshrl.u32 %v2958, 7
        %v2960 = vsub.s32 0, %v2959
        %v2961 = vrot.slane %v2956, %v2960
        %v3219 = vunpack.c.l.b16 %v2700
        %v3220 = vunpack.c.l.b16 %v2701
        %v3221 = vunpack.c.l.b16 %v2702
        %v3222 = vunpack.c.l.b16 %v2703
        %v3223 = vunpack.c.l.b16 %v2704
        %v3224 = vunpack.c.l.b16 %v2705
        %v3225 = vunpack.c.l.b16 %v2706
        %v3226 = vunpack.c.l.b16 %v2707
        %v3227 = vunpack.c.l.b16 %v2708
        %v3228 = vunpack.c.l.b16 %v2709
        %v3229 = vunpack.c.l.b16 %v2710
        %v3230 = vunpack.c.l.b16 %v2711
        %v3231 = vunpack.c.l.b16 %v2712
        %v3232 = vunpack.c.l.b16 %v2713
        %v3233 = vunpack.c.l.b16 %v2714
        %v3234 = vunpack.c.l.b16 %v2715
        %v3235 = vunpack.c.l.b16 %v2716
        %v3236 = vunpack.c.l.b16 %v2717
        %v3237 = vunpack.c.l.b16 %v2718
        %v3238 = vunpack.c.l.b16 %v2719
        %v3239 = vunpack.c.l.b16 %v2720
        %v3240 = vunpack.c.l.b16 %v2721
        %v3241 = vunpack.c.l.b16 %v2722
        %v3242 = vunpack.c.l.b16 %v2723
        %v3243 = vunpack.c.l.b16 %v2724
        %v3244 = vunpack.c.l.b16 %v2725
        %v3245 = vunpack.c.l.b16 %v2726
        %v3246 = vunpack.c.l.b16 %v2727
        %v3247 = vunpack.c.l.b16 %v2728
        %v3248 = vunpack.c.l.b16 %v2729
        %v3249 = vunpack.c.l.b16 %v2730
        %v3250 = vunpack.c.l.b16 %v2731
        %v3251 = vunpack.c.l.b16 %v2732
        %v3252 = vunpack.c.l.b16 %v2733
        %v3253 = vunpack.c.l.b16 %v2734
        %v3254 = vunpack.c.l.b16 %v2735
        %v3255 = vunpack.c.l.b16 %v2736
        %v3256 = vunpack.c.l.b16 %v2737
        %v3257 = vunpack.c.l.b16 %v2738
        %v3258 = vunpack.c.l.b16 %v2739
        %v3259 = vunpack.c.l.b16 %v2740
        %v3260 = vunpack.c.l.b16 %v2741
        %v3261 = vunpack.c.l.b16 %v2742
        %v3262 = vunpack.c.l.b16 %v2743
        %v3263 = vunpack.c.l.b16 %v2744
        %v3264 = vunpack.c.l.b16 %v2745
        %v3265 = vunpack.c.l.b16 %v2746
        %v3266 = vunpack.c.l.b16 %v2747
        %v3267 = vunpack.c.l.b16 %v2748
        %v3268 = vunpack.c.l.b16 %v2749
        %v3269 = vunpack.c.l.b16 %v2750
        %v3270 = vunpack.c.l.b16 %v2751
        %v3271 = vunpack.c.l.b16 %v2752
        %v3272 = vunpack.c.l.b16 %v2753
        %v3273 = vunpack.c.l.b16 %v2754
        %v3274 = vunpack.c.l.b16 %v2755
        %v3275 = vunpack.c.l.b16 %v2756
        %v3276 = vunpack.c.l.b16 %v2757
        %v3277 = vunpack.c.l.b16 %v2758
        %v3278 = vunpack.c.l.b16 %v2759
        %v3279 = vunpack.c.l.b16 %v2760
        %v3280 = vunpack.c.l.b16 %v2761
        %v3281 = vunpack.c.l.b16 %v2762
        %v3282 = vunpack.c.l.b16 %v2763
        %v3283 = vunpack.c.l.b16 %v2764
        %v3284 = vunpack.c.l.b16 %v2765
        %v3285 = vunpack.c.l.b16 %v2766
        %v3286 = vunpack.c.l.b16 %v2767
        %v3287 = vunpack.c.l.b16 %v2768
        %v3288 = vunpack.c.l.b16 %v2769
        %v3289 = vunpack.c.l.b16 %v2770
        %v3290 = vunpack.c.l.b16 %v2771
        %v3291 = vunpack.c.l.b16 %v2772
        %v3292 = vunpack.c.l.b16 %v2773
        %v3293 = vunpack.c.l.b16 %v2774
        %v3294 = vunpack.c.l.b16 %v2775
        %v3295 = vunpack.c.l.b16 %v2776
        %v3296 = vunpack.c.l.b16 %v2777
        %v3297 = vunpack.c.l.b16 %v2778
        %v3298 = vunpack.c.l.b16 %v2779
        %v3299 = vunpack.c.l.b16 %v2780
        %v3300 = vunpack.c.l.b16 %v2781
        %v3301 = vunpack.c.l.b16 %v2782
        %v3302 = vunpack.c.l.b16 %v2783
        %v3303 = vunpack.c.l.b16 %v2784
        %v3304 = vunpack.c.l.b16 %v2785
        %v3305 = vunpack.c.l.b16 %v2786
        %v3306 = vunpack.c.l.b16 %v2787
        %v3307 = vunpack.c.l.b16 %v2788
        %v3308 = vunpack.c.l.b16 %v2789
        %v3309 = vunpack.c.l.b16 %v2790
        %v3310 = vunpack.c.l.b16 %v2791
        %v3311 = vunpack.c.l.b16 %v2792
        %v3312 = vunpack.c.l.b16 %v2793
        %v3313 = vunpack.c.l.b16 %v2794
        %v3314 = vunpack.c.l.b16 %v2795
        %v3315 = vunpack.c.l.b16 %v2796
        %v3316 = vunpack.c.l.b16 %v2797
        %v3317 = vunpack.c.l.b16 %v2798
        %v3318 = vunpack.c.l.b16 %v2799
        %v3319 = vunpack.c.l.b16 %v2800
        %v3320 = vunpack.c.l.b16 %v2801
        %v3321 = vunpack.c.l.b16 %v2802
        %v3322 = vunpack.c.l.b16 %v2803
        %v3323 = vunpack.c.l.b16 %v2804
        %v3324 = vunpack.c.l.b16 %v2805
        %v3325 = vunpack.c.l.b16 %v2806
        %v3326 = vunpack.c.l.b16 %v2807
        %v3327 = vunpack.c.l.b16 %v2808
        %v3328 = vunpack.c.l.b16 %v2809
        %v3329 = vunpack.c.l.b16 %v2810
        %v3330 = vunpack.c.l.b16 %v2811
        %v3331 = vunpack.c.l.b16 %v2812
        %v3332 = vunpack.c.l.b16 %v2813
        %v3333 = vunpack.c.l.b16 %v2814
        %v3334 = vunpack.c.l.b16 %v2815
        %v3335 = vunpack.c.l.b16 %v2816
        %v3336 = vunpack.c.l.b16 %v2817
        %v3337 = vunpack.c.l.b16 %v2818
        %v3338 = vunpack.c.l.b16 %v2819
        %v3339 = vunpack.c.l.b16 %v2820
        %v3340 = vunpack.c.l.b16 %v2821
        %v3341 = vunpack.c.l.b16 %v2822
        %v3342 = vunpack.c.l.b16 %v2823
        %v3343 = vunpack.c.l.b16 %v2824
        %v3344 = vunpack.c.l.b16 %v2825
        %v3345 = vunpack.c.l.b16 %v2826
        %v3346 = vunpack.c.l.b16 %v2827
        %v3347 = vunpack.c.l.b16 %v2828
        %v3348 = vunpack.c.l.b16 %v2829
        %v3349 = vunpack.c.l.b16 %v2830
        %v3350 = vunpack.c.l.b16 %v2831
        %v3351 = vunpack.c.l.b16 %v2832
        %v3352 = vunpack.c.l.b16 %v2833
        %v3353 = vunpack.c.l.b16 %v2834
        %v3354 = vunpack.c.l.b16 %v2835
        %v3355 = vunpack.c.l.b16 %v2836
        %v3356 = vunpack.c.l.b16 %v2837
        %v3357 = vunpack.c.l.b16 %v2838
        %v3358 = vunpack.c.l.b16 %v2839
        %v3359 = vunpack.c.l.b16 %v2840
        %v3360 = vunpack.c.l.b16 %v2841
        %v3361 = vunpack.c.l.b16 %v2842
        %v3362 = vunpack.c.l.b16 %v2843
        %v3363 = vunpack.c.l.b16 %v2844
        %v3364 = vunpack.c.l.b16 %v2845
        %v3365 = vunpack.c.l.b16 %v2846
        %v3366 = vunpack.c.l.b16 %v2847
        %v3367 = vunpack.c.l.b16 %v2848
        %v3368 = vunpack.c.l.b16 %v2849
        %v3369 = vunpack.c.l.b16 %v2850
        %v3370 = vunpack.c.l.b16 %v2851
        %v3371 = vunpack.c.l.b16 %v2852
        %v3372 = vunpack.c.l.b16 %v2853
        %v3373 = vunpack.c.l.b16 %v2854
        %v3374 = vunpack.c.l.b16 %v2855
        %v3375 = vunpack.c.l.b16 %v2856
        %v3376 = vunpack.c.l.b16 %v2857
        %v3377 = vunpack.c.l.b16 %v2858
        %v3378 = vunpack.c.l.b16 %v2859
        %v3379 = vunpack.c.l.b16 %v2860
        %v3380 = vunpack.c.l.b16 %v2861
        %v3381 = vunpack.c.l.b16 %v2862
        %v3382 = vunpack.c.l.b16 %v2863
        %v3383 = vunpack.c.l.b16 %v2864
        %v3384 = vunpack.c.l.b16 %v2865
        %v3385 = vunpack.c.l.b16 %v2866
        %v3386 = vunpack.c.l.b16 %v2867
        %v3387 = vunpack.c.l.b16 %v2868
        %v3388 = vunpack.c.l.b16 %v2869
        %v3389 = vunpack.c.l.b16 %v2870
        %v3390 = vunpack.c.l.b16 %v2871
        %v3391 = vunpack.c.l.b16 %v2872
        %v3392 = vunpack.c.l.b16 %v2873
        %v3393 = vunpack.c.l.b16 %v2874
        %v3394 = vunpack.c.l.b16 %v2875
        %v3395 = vunpack.c.l.b16 %v2876
        %v3396 = vunpack.c.l.b16 %v2877
        %v3397 = vunpack.c.l.b16 %v2878
        %v3398 = vunpack.c.l.b16 %v2879
        %v3399 = vunpack.c.l.b16 %v2880
        %v3400 = vunpack.c.l.b16 %v2881
        %v3401 = vunpack.c.l.b16 %v2882
        %v3402 = vunpack.c.l.b16 %v2883
        %v3403 = vunpack.c.l.b16 %v2884
        %v3404 = vunpack.c.l.b16 %v2885
        %v3405 = vunpack.c.l.b16 %v2886
        %v3406 = vunpack.c.l.b16 %v2887
        %v3407 = vunpack.c.l.b16 %v2888
        %v3408 = vunpack.c.l.b16 %v2889
        %v3409 = vunpack.c.l.b16 %v2890
        %v3410 = vunpack.c.l.b16 %v2891
        %v3411 = vunpack.c.l.b16 %v2892
        %v3412 = vunpack.c.l.b16 %v2893
        %v3413 = vunpack.c.l.b16 %v2894
        %v3414 = vunpack.c.l.b16 %v2895
        %v3415 = vunpack.c.l.b16 %v2896
        %v3416 = vunpack.c.l.b16 %v2897
        %v3417 = vunpack.c.l.b16 %v2898
        %v3418 = vunpack.c.l.b16 %v2899
        %v3419 = vunpack.c.l.b16 %v2900
        %v3420 = vunpack.c.l.b16 %v2901
        %v3421 = vunpack.c.l.b16 %v2902
        %v3422 = vunpack.c.l.b16 %v2903
        %v3423 = vunpack.c.l.b16 %v2904
        %v3424 = vunpack.c.l.b16 %v2905
        %v3425 = vunpack.c.l.b16 %v2906
        %v3426 = vunpack.c.l.b16 %v2907
        %v3427 = vunpack.c.l.b16 %v2908
        %v3428 = vunpack.c.l.b16 %v2909
        %v3429 = vunpack.c.l.b16 %v2910
        %v3430 = vunpack.c.l.b16 %v2911
        %v3431 = vunpack.c.l.b16 %v2912
        %v3432 = vunpack.c.l.b16 %v2913
        %v3433 = vunpack.c.l.b16 %v2914
        %v3434 = vunpack.c.l.b16 %v2915
        %v3435 = vunpack.c.l.b16 %v2916
        %v3436 = vunpack.c.l.b16 %v2917
        %v3437 = vunpack.c.l.b16 %v2918
        %v3438 = vunpack.c.l.b16 %v2919
        %v3439 = vunpack.c.l.b16 %v2920
        %v3440 = vunpack.c.l.b16 %v2921
        %v3441 = vunpack.c.l.b16 %v2922
        %v3442 = vunpack.c.l.b16 %v2923
        %v3443 = vunpack.c.l.b16 %v2924
        %v3444 = vunpack.c.l.b16 %v2925
        %v3445 = vunpack.c.l.b16 %v2926
        %v3446 = vunpack.c.l.b16 %v2927
        %v3447 = vunpack.c.l.b16 %v2928
        %v3448 = vunpack.c.l.b16 %v2929
        %v3449 = vunpack.c.l.b16 %v2930
        %v3450 = vunpack.c.l.b16 %v2931
        %v3451 = vunpack.c.l.b16 %v2932
        %v3452 = vunpack.c.l.b16 %v2933
        %v3453 = vunpack.c.l.b16 %v2934
        %v3454 = vunpack.c.l.b16 %v2935
        %v3455 = vunpack.c.l.b16 %v2936
        %v3456 = vunpack.c.l.b16 %v2937
        %v3457 = vunpack.c.l.b16 %v2938
        %v3458 = vunpack.c.l.b16 %v2939
        %v3459 = vunpack.c.l.b16 %v2940
        %v3460 = vunpack.c.l.b16 %v2941
        %v3461 = vunpack.c.l.b16 %v2942
        %v3462 = vunpack.c.l.b16 %v2943
        %v3463 = vunpack.c.l.b16 %v2944
        %v3464 = vunpack.c.l.b16 %v2945
        %v3465 = vunpack.c.l.b16 %v2946
        %v3466 = vunpack.c.l.b16 %v2947
        %v3467 = vunpack.c.l.b16 %v2948
        %v3468 = vunpack.c.l.b16 %v2949
        %v3469 = vunpack.c.l.b16 %v2950
        %v3470 = vunpack.c.l.b16 %v2951
        %v3471 = vunpack.c.l.b16 %v2952
        %v3472 = vunpack.c.l.b16 %v2953
        %v3473 = vunpack.c.l.b16 %v2954
        %v3474 = vunpack.c.l.b16 %v2955
        %v3475 = vpack.c.b16 %v3220, %v3219
        %v3476 = vpack.c.b16 %v3222, %v3221
        %v3477 = vpack.c.b16 %v3224, %v3223
        %v3478 = vpack.c.b16 %v3226, %v3225
        %v3479 = vpack.c.b16 %v3228, %v3227
        %v3480 = vpack.c.b16 %v3230, %v3229
        %v3481 = vpack.c.b16 %v3232, %v3231
        %v3482 = vpack.c.b16 %v3234, %v3233
        %v3483 = vpack.c.b16 %v3236, %v3235
        %v3484 = vpack.c.b16 %v3238, %v3237
        %v3485 = vpack.c.b16 %v3240, %v3239
        %v3486 = vpack.c.b16 %v3242, %v3241
        %v3487 = vpack.c.b16 %v3244, %v3243
        %v3488 = vpack.c.b16 %v3246, %v3245
        %v3489 = vpack.c.b16 %v3248, %v3247
        %v3490 = vpack.c.b16 %v3250, %v3249
        %v3491 = vpack.c.b16 %v3252, %v3251
        %v3492 = vpack.c.b16 %v3254, %v3253
        %v3493 = vpack.c.b16 %v3256, %v3255
        %v3494 = vpack.c.b16 %v3258, %v3257
        %v3495 = vpack.c.b16 %v3260, %v3259
        %v3496 = vpack.c.b16 %v3262, %v3261
        %v3497 = vpack.c.b16 %v3264, %v3263
        %v3498 = vpack.c.b16 %v3266, %v3265
        %v3499 = vpack.c.b16 %v3268, %v3267
        %v3500 = vpack.c.b16 %v3270, %v3269
        %v3501 = vpack.c.b16 %v3272, %v3271
        %v3502 = vpack.c.b16 %v3274, %v3273
        %v3503 = vpack.c.b16 %v3276, %v3275
        %v3504 = vpack.c.b16 %v3278, %v3277
        %v3505 = vpack.c.b16 %v3280, %v3279
        %v3506 = vpack.c.b16 %v3282, %v3281
        %v3507 = vpack.c.b16 %v3284, %v3283
        %v3508 = vpack.c.b16 %v3286, %v3285
        %v3509 = vpack.c.b16 %v3288, %v3287
        %v3510 = vpack.c.b16 %v3290, %v3289
        %v3511 = vpack.c.b16 %v3292, %v3291
        %v3512 = vpack.c.b16 %v3294, %v3293
        %v3513 = vpack.c.b16 %v3296, %v3295
        %v3514 = vpack.c.b16 %v3298, %v3297
        %v3515 = vpack.c.b16 %v3300, %v3299
        %v3516 = vpack.c.b16 %v3302, %v3301
        %v3517 = vpack.c.b16 %v3304, %v3303
        %v3518 = vpack.c.b16 %v3306, %v3305
        %v3519 = vpack.c.b16 %v3308, %v3307
        %v3520 = vpack.c.b16 %v3310, %v3309
        %v3521 = vpack.c.b16 %v3312, %v3311
        %v3522 = vpack.c.b16 %v3314, %v3313
        %v3523 = vpack.c.b16 %v3316, %v3315
        %v3524 = vpack.c.b16 %v3318, %v3317
        %v3525 = vpack.c.b16 %v3320, %v3319
        %v3526 = vpack.c.b16 %v3322, %v3321
        %v3527 = vpack.c.b16 %v3324, %v3323
        %v3528 = vpack.c.b16 %v3326, %v3325
        %v3529 = vpack.c.b16 %v3328, %v3327
        %v3530 = vpack.c.b16 %v3330, %v3329
        %v3531 = vpack.c.b16 %v3332, %v3331
        %v3532 = vpack.c.b16 %v3334, %v3333
        %v3533 = vpack.c.b16 %v3336, %v3335
        %v3534 = vpack.c.b16 %v3338, %v3337
        %v3535 = vpack.c.b16 %v3340, %v3339
        %v3536 = vpack.c.b16 %v3342, %v3341
        %v3537 = vpack.c.b16 %v3344, %v3343
        %v3538 = vpack.c.b16 %v3346, %v3345
        %v3539 = vpack.c.b16 %v3348, %v3347
        %v3540 = vpack.c.b16 %v3350, %v3349
        %v3541 = vpack.c.b16 %v3352, %v3351
        %v3542 = vpack.c.b16 %v3354, %v3353
        %v3543 = vpack.c.b16 %v3356, %v3355
        %v3544 = vpack.c.b16 %v3358, %v3357
        %v3545 = vpack.c.b16 %v3360, %v3359
        %v3546 = vpack.c.b16 %v3362, %v3361
        %v3547 = vpack.c.b16 %v3364, %v3363
        %v3548 = vpack.c.b16 %v3366, %v3365
        %v3549 = vpack.c.b16 %v3368, %v3367
        %v3550 = vpack.c.b16 %v3370, %v3369
        %v3551 = vpack.c.b16 %v3372, %v3371
        %v3552 = vpack.c.b16 %v3374, %v3373
        %v3553 = vpack.c.b16 %v3376, %v3375
        %v3554 = vpack.c.b16 %v3378, %v3377
        %v3555 = vpack.c.b16 %v3380, %v3379
        %v3556 = vpack.c.b16 %v3382, %v3381
        %v3557 = vpack.c.b16 %v3384, %v3383
        %v3558 = vpack.c.b16 %v3386, %v3385
        %v3559 = vpack.c.b16 %v3388, %v3387
        %v3560 = vpack.c.b16 %v3390, %v3389
        %v3561 = vpack.c.b16 %v3392, %v3391
        %v3562 = vpack.c.b16 %v3394, %v3393
        %v3563 = vpack.c.b16 %v3396, %v3395
        %v3564 = vpack.c.b16 %v3398, %v3397
        %v3565 = vpack.c.b16 %v3400, %v3399
        %v3566 = vpack.c.b16 %v3402, %v3401
        %v3567 = vpack.c.b16 %v3404, %v3403
        %v3568 = vpack.c.b16 %v3406, %v3405
        %v3569 = vpack.c.b16 %v3408, %v3407
        %v3570 = vpack.c.b16 %v3410, %v3409
        %v3571 = vpack.c.b16 %v3412, %v3411
        %v3572 = vpack.c.b16 %v3414, %v3413
        %v3573 = vpack.c.b16 %v3416, %v3415
        %v3574 = vpack.c.b16 %v3418, %v3417
        %v3575 = vpack.c.b16 %v3420, %v3419
        %v3576 = vpack.c.b16 %v3422, %v3421
        %v3577 = vpack.c.b16 %v3424, %v3423
        %v3578 = vpack.c.b16 %v3426, %v3425
        %v3579 = vpack.c.b16 %v3428, %v3427
        %v3580 = vpack.c.b16 %v3430, %v3429
        %v3581 = vpack.c.b16 %v3432, %v3431
        %v3582 = vpack.c.b16 %v3434, %v3433
        %v3583 = vpack.c.b16 %v3436, %v3435
        %v3584 = vpack.c.b16 %v3438, %v3437
        %v3585 = vpack.c.b16 %v3440, %v3439
        %v3586 = vpack.c.b16 %v3442, %v3441
        %v3587 = vpack.c.b16 %v3444, %v3443
        %v3588 = vpack.c.b16 %v3446, %v3445
        %v3589 = vpack.c.b16 %v3448, %v3447
        %v3590 = vpack.c.b16 %v3450, %v3449
        %v3591 = vpack.c.b16 %v3452, %v3451
        %v3592 = vpack.c.b16 %v3454, %v3453
        %v3593 = vpack.c.b16 %v3456, %v3455
        %v3594 = vpack.c.b16 %v3458, %v3457
        %v3595 = vpack.c.b16 %v3460, %v3459
        %v3596 = vpack.c.b16 %v3462, %v3461
        %v3597 = vpack.c.b16 %v3464, %v3463
        %v3598 = vpack.c.b16 %v3466, %v3465
        %v3599 = vpack.c.b16 %v3468, %v3467
        %v3600 = vpack.c.b16 %v3470, %v3469
        %v3601 = vpack.c.b16 %v3472, %v3471
        %v3602 = vpack.c.b16 %v3474, %v3473
        %3731 = vmatprep.subr.bf16.mxu0 0
        %3732 = vmatpush1.bf16.msra.mxu0 %v3482
        %3733 = vmatprep.subr.bf16.mxu0 0
        %3734 = vmatpush1.bf16.msra.mxu0 %v3481
        %3735 = vmatprep.subr.bf16.mxu0 0
        %3736 = vmatpush1.bf16.msra.mxu0 %v3480
        %3737 = vmatprep.subr.bf16.mxu0 0
        %3738 = vmatpush1.bf16.msra.mxu0 %v3479
        %3739 = vmatprep.subr.bf16.mxu0 0
        %3740 = vmatpush1.bf16.msra.mxu0 %v3478
        %3741 = vmatprep.subr.bf16.mxu0 0
        %3742 = vmatpush1.bf16.msra.mxu0 %v3477
        %3743 = vmatprep.subr.bf16.mxu0 0
        %3744 = vmatpush1.bf16.msra.mxu0 %v3476
        %3745 = vmatprep.subr.bf16.mxu0 0
        %3746 = vmatpush1.bf16.msra.mxu0 %v3475
        %3747 = vmatprep.subr.bf16.mxu0 0
        %3748 = vmatpush2.bf16.msra.mxu0 %v3490
        %3749 = vmatprep.subr.bf16.mxu0 0
        %3750 = vmatpush2.bf16.msra.mxu0 %v3489
        %3751 = vmatprep.subr.bf16.mxu0 0
        %3752 = vmatpush2.bf16.msra.mxu0 %v3488
        %3753 = vmatprep.subr.bf16.mxu0 0
        %3754 = vmatpush2.bf16.msra.mxu0 %v3487
        %3755 = vmatprep.subr.bf16.mxu0 0
        %3756 = vmatpush2.bf16.msra.mxu0 %v3486
        %3757 = vmatprep.subr.bf16.mxu0 0
        %3758 = vmatpush2.bf16.msra.mxu0 %v3485
        %3759 = vmatprep.subr.bf16.mxu0 0
        %3760 = vmatpush2.bf16.msra.mxu0 %v3484
        %3761 = vmatprep.subr.bf16.mxu0 0
        %3762 = vmatpush2.bf16.msra.mxu0 %v3483
        %3763 = vmatprep.mubr.bf16.mxu0 %v2685
        %3764 = vmatmul.mubr.bf16.gmra.mxu0 %v2684
        %v3765 = vpop.f32.mrf.mxu0
        %v3766 = vadd.f32 %v2961, %v3765
        %v3767 = vpop.f32.mrf.mxu0
        %v3768 = vpop.f32.mrf.mxu0
        %v3769 = vadd.f32 %v2961, %v3768
        %v3770 = vpop.f32.mrf.mxu0
        %3771 = vdwg.mxu0
        %3772 = vmatprep.subr.bf16.mxu0 0
        %3773 = vmatpush1.bf16.msra.mxu0 %v3498
        %3774 = vmatprep.subr.bf16.mxu0 0
        %3775 = vmatpush1.bf16.msra.mxu0 %v3497
        %3776 = vmatprep.subr.bf16.mxu0 0
        %3777 = vmatpush1.bf16.msra.mxu0 %v3496
        %3778 = vmatprep.subr.bf16.mxu0 0
        %3779 = vmatpush1.bf16.msra.mxu0 %v3495
        %3780 = vmatprep.subr.bf16.mxu0 0
        %3781 = vmatpush1.bf16.msra.mxu0 %v3494
        %3782 = vmatprep.subr.bf16.mxu0 0
        %3783 = vmatpush1.bf16.msra.mxu0 %v3493
        %3784 = vmatprep.subr.bf16.mxu0 0
        %3785 = vmatpush1.bf16.msra.mxu0 %v3492
        %3786 = vmatprep.subr.bf16.mxu0 0
        %3787 = vmatpush1.bf16.msra.mxu0 %v3491
        %3788 = vmatprep.subr.bf16.mxu0 0
        %3789 = vmatpush2.bf16.msra.mxu0 %v3506
        %3790 = vmatprep.subr.bf16.mxu0 0
        %3791 = vmatpush2.bf16.msra.mxu0 %v3505
        %3792 = vmatprep.subr.bf16.mxu0 0
        %3793 = vmatpush2.bf16.msra.mxu0 %v3504
        %3794 = vmatprep.subr.bf16.mxu0 0
        %3795 = vmatpush2.bf16.msra.mxu0 %v3503
        %3796 = vmatprep.subr.bf16.mxu0 0
        %3797 = vmatpush2.bf16.msra.mxu0 %v3502
        %3798 = vmatprep.subr.bf16.mxu0 0
        %3799 = vmatpush2.bf16.msra.mxu0 %v3501
        %3800 = vmatprep.subr.bf16.mxu0 0
        %3801 = vmatpush2.bf16.msra.mxu0 %v3500
        %3802 = vmatprep.subr.bf16.mxu0 0
        %3803 = vmatpush2.bf16.msra.mxu0 %v3499
        %3804 = vmatprep.mubr.bf16.mxu0 %v2687
        %3805 = vmatmul.mubr.bf16.gmra.mxu0 %v2686
        %v3806 = vpop.f32.mrf.mxu0
        %v3807 = vadd.f32 %v3766, %v3806
        %v3808 = vpop.f32.mrf.mxu0
        %v3809 = vpop.f32.mrf.mxu0
        %v3810 = vadd.f32 %v3769, %v3809
        %v3811 = vpop.f32.mrf.mxu0
        %3812 = vdwg.mxu0
        %3813 = vmatprep.subr.bf16.mxu0 0
        %3814 = vmatpush1.bf16.msra.mxu0 %v3514
        %3815 = vmatprep.subr.bf16.mxu0 0
        %3816 = vmatpush1.bf16.msra.mxu0 %v3513
        %3817 = vmatprep.subr.bf16.mxu0 0
        %3818 = vmatpush1.bf16.msra.mxu0 %v3512
        %3819 = vmatprep.subr.bf16.mxu0 0
        %3820 = vmatpush1.bf16.msra.mxu0 %v3511
        %3821 = vmatprep.subr.bf16.mxu0 0
        %3822 = vmatpush1.bf16.msra.mxu0 %v3510
        %3823 = vmatprep.subr.bf16.mxu0 0
        %3824 = vmatpush1.bf16.msra.mxu0 %v3509
        %3825 = vmatprep.subr.bf16.mxu0 0
        %3826 = vmatpush1.bf16.msra.mxu0 %v3508
        %3827 = vmatprep.subr.bf16.mxu0 0
        %3828 = vmatpush1.bf16.msra.mxu0 %v3507
        %3829 = vmatprep.subr.bf16.mxu0 0
        %3830 = vmatpush2.bf16.msra.mxu0 %v3522
        %3831 = vmatprep.subr.bf16.mxu0 0
        %3832 = vmatpush2.bf16.msra.mxu0 %v3521
        %3833 = vmatprep.subr.bf16.mxu0 0
        %3834 = vmatpush2.bf16.msra.mxu0 %v3520
        %3835 = vmatprep.subr.bf16.mxu0 0
        %3836 = vmatpush2.bf16.msra.mxu0 %v3519
        %3837 = vmatprep.subr.bf16.mxu0 0
        %3838 = vmatpush2.bf16.msra.mxu0 %v3518
        %3839 = vmatprep.subr.bf16.mxu0 0
        %3840 = vmatpush2.bf16.msra.mxu0 %v3517
        %3841 = vmatprep.subr.bf16.mxu0 0
        %3842 = vmatpush2.bf16.msra.mxu0 %v3516
        %3843 = vmatprep.subr.bf16.mxu0 0
        %3844 = vmatpush2.bf16.msra.mxu0 %v3515
        %3845 = vmatprep.mubr.bf16.mxu0 %v2689
        %3846 = vmatmul.mubr.bf16.gmra.mxu0 %v2688
        %v3847 = vpop.f32.mrf.mxu0
        %v3848 = vadd.f32 %v3807, %v3847
        %v3849 = vpop.f32.mrf.mxu0
        %v3850 = vpop.f32.mrf.mxu0
        %v3851 = vadd.f32 %v3810, %v3850
        %v3852 = vpop.f32.mrf.mxu0
        %3853 = vdwg.mxu0
        %3854 = vmatprep.subr.bf16.mxu0 0
        %3855 = vmatpush1.bf16.msra.mxu0 %v3530
        %3856 = vmatprep.subr.bf16.mxu0 0
        %3857 = vmatpush1.bf16.msra.mxu0 %v3529
        %3858 = vmatprep.subr.bf16.mxu0 0
        %3859 = vmatpush1.bf16.msra.mxu0 %v3528
        %3860 = vmatprep.subr.bf16.mxu0 0
        %3861 = vmatpush1.bf16.msra.mxu0 %v3527
        %3862 = vmatprep.subr.bf16.mxu0 0
        %3863 = vmatpush1.bf16.msra.mxu0 %v3526
        %3864 = vmatprep.subr.bf16.mxu0 0
        %3865 = vmatpush1.bf16.msra.mxu0 %v3525
        %3866 = vmatprep.subr.bf16.mxu0 0
        %3867 = vmatpush1.bf16.msra.mxu0 %v3524
        %3868 = vmatprep.subr.bf16.mxu0 0
        %3869 = vmatpush1.bf16.msra.mxu0 %v3523
        %3870 = vmatprep.subr.bf16.mxu0 0
        %3871 = vmatpush2.bf16.msra.mxu0 %v3538
        %3872 = vmatprep.subr.bf16.mxu0 0
        %3873 = vmatpush2.bf16.msra.mxu0 %v3537
        %3874 = vmatprep.subr.bf16.mxu0 0
        %3875 = vmatpush2.bf16.msra.mxu0 %v3536
        %3876 = vmatprep.subr.bf16.mxu0 0
        %3877 = vmatpush2.bf16.msra.mxu0 %v3535
        %3878 = vmatprep.subr.bf16.mxu0 0
        %3879 = vmatpush2.bf16.msra.mxu0 %v3534
        %3880 = vmatprep.subr.bf16.mxu0 0
        %3881 = vmatpush2.bf16.msra.mxu0 %v3533
        %3882 = vmatprep.subr.bf16.mxu0 0
        %3883 = vmatpush2.bf16.msra.mxu0 %v3532
        %3884 = vmatprep.subr.bf16.mxu0 0
        %3885 = vmatpush2.bf16.msra.mxu0 %v3531
        %3886 = vmatprep.mubr.bf16.mxu0 %v2691
        %3887 = vmatmul.mubr.bf16.gmra.mxu0 %v2690
        %v3888 = vpop.f32.mrf.mxu0
        %v3889 = vadd.f32 %v3848, %v3888
        %v3890 = vpop.f32.mrf.mxu0
        %v3891 = vpop.f32.mrf.mxu0
        %v3892 = vadd.f32 %v3851, %v3891
        %v3893 = vpop.f32.mrf.mxu0
        %3894 = vdwg.mxu0
        %3895 = vmatprep.subr.bf16.mxu0 0
        %3896 = vmatpush1.bf16.msra.mxu0 %v3546
        %3897 = vmatprep.subr.bf16.mxu0 0
        %3898 = vmatpush1.bf16.msra.mxu0 %v3545
        %3899 = vmatprep.subr.bf16.mxu0 0
        %3900 = vmatpush1.bf16.msra.mxu0 %v3544
        %3901 = vmatprep.subr.bf16.mxu0 0
        %3902 = vmatpush1.bf16.msra.mxu0 %v3543
        %3903 = vmatprep.subr.bf16.mxu0 0
        %3904 = vmatpush1.bf16.msra.mxu0 %v3542
        %3905 = vmatprep.subr.bf16.mxu0 0
        %3906 = vmatpush1.bf16.msra.mxu0 %v3541
        %3907 = vmatprep.subr.bf16.mxu0 0
        %3908 = vmatpush1.bf16.msra.mxu0 %v3540
        %3909 = vmatprep.subr.bf16.mxu0 0
        %3910 = vmatpush1.bf16.msra.mxu0 %v3539
        %3911 = vmatprep.subr.bf16.mxu0 0
        %3912 = vmatpush2.bf16.msra.mxu0 %v3554
        %3913 = vmatprep.subr.bf16.mxu0 0
        %3914 = vmatpush2.bf16.msra.mxu0 %v3553
        %3915 = vmatprep.subr.bf16.mxu0 0
        %3916 = vmatpush2.bf16.msra.mxu0 %v3552
        %3917 = vmatprep.subr.bf16.mxu0 0
        %3918 = vmatpush2.bf16.msra.mxu0 %v3551
        %3919 = vmatprep.subr.bf16.mxu0 0
        %3920 = vmatpush2.bf16.msra.mxu0 %v3550
        %3921 = vmatprep.subr.bf16.mxu0 0
        %3922 = vmatpush2.bf16.msra.mxu0 %v3549
        %3923 = vmatprep.subr.bf16.mxu0 0
        %3924 = vmatpush2.bf16.msra.mxu0 %v3548
        %3925 = vmatprep.subr.bf16.mxu0 0
        %3926 = vmatpush2.bf16.msra.mxu0 %v3547
        %3927 = vmatprep.mubr.bf16.mxu0 %v2693
        %3928 = vmatmul.mubr.bf16.gmra.mxu0 %v2692
        %v3929 = vpop.f32.mrf.mxu0
        %v3930 = vadd.f32 %v3889, %v3929
        %v3931 = vpop.f32.mrf.mxu0
        %v3932 = vpop.f32.mrf.mxu0
        %v3933 = vadd.f32 %v3892, %v3932
        %v3934 = vpop.f32.mrf.mxu0
        %3935 = vdwg.mxu0
        %3936 = vmatprep.subr.bf16.mxu0 0
        %3937 = vmatpush1.bf16.msra.mxu0 %v3562
        %3938 = vmatprep.subr.bf16.mxu0 0
        %3939 = vmatpush1.bf16.msra.mxu0 %v3561
        %3940 = vmatprep.subr.bf16.mxu0 0
        %3941 = vmatpush1.bf16.msra.mxu0 %v3560
        %3942 = vmatprep.subr.bf16.mxu0 0
        %3943 = vmatpush1.bf16.msra.mxu0 %v3559
        %3944 = vmatprep.subr.bf16.mxu0 0
        %3945 = vmatpush1.bf16.msra.mxu0 %v3558
        %3946 = vmatprep.subr.bf16.mxu0 0
        %3947 = vmatpush1.bf16.msra.mxu0 %v3557
        %3948 = vmatprep.subr.bf16.mxu0 0
        %3949 = vmatpush1.bf16.msra.mxu0 %v3556
        %3950 = vmatprep.subr.bf16.mxu0 0
        %3951 = vmatpush1.bf16.msra.mxu0 %v3555
        %3952 = vmatprep.subr.bf16.mxu0 0
        %3953 = vmatpush2.bf16.msra.mxu0 %v3570
        %3954 = vmatprep.subr.bf16.mxu0 0
        %3955 = vmatpush2.bf16.msra.mxu0 %v3569
        %3956 = vmatprep.subr.bf16.mxu0 0
        %3957 = vmatpush2.bf16.msra.mxu0 %v3568
        %3958 = vmatprep.subr.bf16.mxu0 0
        %3959 = vmatpush2.bf16.msra.mxu0 %v3567
        %3960 = vmatprep.subr.bf16.mxu0 0
        %3961 = vmatpush2.bf16.msra.mxu0 %v3566
        %3962 = vmatprep.subr.bf16.mxu0 0
        %3963 = vmatpush2.bf16.msra.mxu0 %v3565
        %3964 = vmatprep.subr.bf16.mxu0 0
        %3965 = vmatpush2.bf16.msra.mxu0 %v3564
        %3966 = vmatprep.subr.bf16.mxu0 0
        %3967 = vmatpush2.bf16.msra.mxu0 %v3563
        %3968 = vmatprep.mubr.bf16.mxu0 %v2695
        %3969 = vmatmul.mubr.bf16.gmra.mxu0 %v2694
        %v3970 = vpop.f32.mrf.mxu0
        %v3971 = vadd.f32 %v3930, %v3970
        %v3972 = vpop.f32.mrf.mxu0
        %v3973 = vpop.f32.mrf.mxu0
        %v3974 = vadd.f32 %v3933, %v3973
        %v3975 = vpop.f32.mrf.mxu0
        %3976 = vdwg.mxu0
        %3977 = vmatprep.subr.bf16.mxu0 0
        %3978 = vmatpush1.bf16.msra.mxu0 %v3578
        %3979 = vmatprep.subr.bf16.mxu0 0
        %3980 = vmatpush1.bf16.msra.mxu0 %v3577
        %3981 = vmatprep.subr.bf16.mxu0 0
        %3982 = vmatpush1.bf16.msra.mxu0 %v3576
        %3983 = vmatprep.subr.bf16.mxu0 0
        %3984 = vmatpush1.bf16.msra.mxu0 %v3575
        %3985 = vmatprep.subr.bf16.mxu0 0
        %3986 = vmatpush1.bf16.msra.mxu0 %v3574
        %3987 = vmatprep.subr.bf16.mxu0 0
        %3988 = vmatpush1.bf16.msra.mxu0 %v3573
        %3989 = vmatprep.subr.bf16.mxu0 0
        %3990 = vmatpush1.bf16.msra.mxu0 %v3572
        %3991 = vmatprep.subr.bf16.mxu0 0
        %3992 = vmatpush1.bf16.msra.mxu0 %v3571
        %3993 = vmatprep.subr.bf16.mxu0 0
        %3994 = vmatpush2.bf16.msra.mxu0 %v3586
        %3995 = vmatprep.subr.bf16.mxu0 0
        %3996 = vmatpush2.bf16.msra.mxu0 %v3585
        %3997 = vmatprep.subr.bf16.mxu0 0
        %3998 = vmatpush2.bf16.msra.mxu0 %v3584
        %3999 = vmatprep.subr.bf16.mxu0 0
        %4000 = vmatpush2.bf16.msra.mxu0 %v3583
        %4001 = vmatprep.subr.bf16.mxu0 0
        %4002 = vmatpush2.bf16.msra.mxu0 %v3582
        %4003 = vmatprep.subr.bf16.mxu0 0
        %4004 = vmatpush2.bf16.msra.mxu0 %v3581
        %4005 = vmatprep.subr.bf16.mxu0 0
        %4006 = vmatpush2.bf16.msra.mxu0 %v3580
        %4007 = vmatprep.subr.bf16.mxu0 0
        %4008 = vmatpush2.bf16.msra.mxu0 %v3579
        %4009 = vmatprep.mubr.bf16.mxu0 %v2697
        %4010 = vmatmul.mubr.bf16.gmra.mxu0 %v2696
        %v4011 = vpop.f32.mrf.mxu0
        %v4012 = vadd.f32 %v3971, %v4011
        %v4013 = vpop.f32.mrf.mxu0
        %v4014 = vpop.f32.mrf.mxu0
        %v4015 = vadd.f32 %v3974, %v4014
        %v4016 = vpop.f32.mrf.mxu0
        %4017 = vdwg.mxu0
        %4018 = vmatprep.subr.bf16.mxu0 0
        %4019 = vmatpush1.bf16.msra.mxu0 %v3594
        %4020 = vmatprep.subr.bf16.mxu0 0
        %4021 = vmatpush1.bf16.msra.mxu0 %v3593
        %4022 = vmatprep.subr.bf16.mxu0 0
        %4023 = vmatpush1.bf16.msra.mxu0 %v3592
        %4024 = vmatprep.subr.bf16.mxu0 0
        %4025 = vmatpush1.bf16.msra.mxu0 %v3591
        %4026 = vmatprep.subr.bf16.mxu0 0
        %4027 = vmatpush1.bf16.msra.mxu0 %v3590
        %4028 = vmatprep.subr.bf16.mxu0 0
        %4029 = vmatpush1.bf16.msra.mxu0 %v3589
        %4030 = vmatprep.subr.bf16.mxu0 0
        %4031 = vmatpush1.bf16.msra.mxu0 %v3588
        %4032 = vmatprep.subr.bf16.mxu0 0
        %4033 = vmatpush1.bf16.msra.mxu0 %v3587
        %4034 = vmatprep.subr.bf16.mxu0 0
        %4035 = vmatpush2.bf16.msra.mxu0 %v3602
        %4036 = vmatprep.subr.bf16.mxu0 0
        %4037 = vmatpush2.bf16.msra.mxu0 %v3601
        %4038 = vmatprep.subr.bf16.mxu0 0
        %4039 = vmatpush2.bf16.msra.mxu0 %v3600
        %4040 = vmatprep.subr.bf16.mxu0 0
        %4041 = vmatpush2.bf16.msra.mxu0 %v3599
        %4042 = vmatprep.subr.bf16.mxu0 0
        %4043 = vmatpush2.bf16.msra.mxu0 %v3598
        %4044 = vmatprep.subr.bf16.mxu0 0
        %4045 = vmatpush2.bf16.msra.mxu0 %v3597
        %4046 = vmatprep.subr.bf16.mxu0 0
        %4047 = vmatpush2.bf16.msra.mxu0 %v3596
        %4048 = vmatprep.subr.bf16.mxu0 0
        %4049 = vmatpush2.bf16.msra.mxu0 %v3595
        %4050 = vmatprep.mubr.bf16.mxu0 %v2699
        %4051 = vmatmul.mubr.bf16.gmra.mxu0 %v2698
        %v4052 = vpop.f32.mrf.mxu0
        %v4053 = vadd.f32 %v4012, %v4052
        %v4054 = vpop.f32.mrf.mxu0
        %v4055 = vpop.f32.mrf.mxu0
        %v4056 = vadd.f32 %v4015, %v4055
        %v4057 = vpop.f32.mrf.mxu0
        %4058 = vdwg.mxu0
        %v4059 = vadd.f32 %v2026, %v4053
        %v4060 = vadd.f32 %v2027, %v4056
        %v4061 = vld [vmem:[%s811] sm:$0x1]
        %v4062 = vld [vmem:[%s814] sm:$0x1]
        %v4063 = vsel %vm868, %v4059, 0.0
        %4064 = vadd.xlane.f32.xlu0 %v4063
        %v4065 = vpop.xlane.xlu0 %4064
        %v4066 = vsel %vm868, %v4060, 0.0
        %4067 = vadd.xlane.f32.xlu0 %v4066
        %v4068 = vpop.xlane.xlu0 %4067
        %v4069 = vmul.f32 %v4065, %v1991
        %v4070 = vmul.f32 %v4068, %v1991
        %v4071 = vsub.f32 %v4059, %v4069
        %v4072 = vsub.f32 %v4060, %v4070
        %v4073 = vmul.f32 %v4071, %v4071
        %v4074 = vmul.f32 %v4072, %v4072
        %v4075 = vsel %vm868, %v4073, 0.0
        %4076 = vadd.xlane.f32.xlu0 %v4075
        %v4077 = vpop.xlane.xlu0 %4076
        %v4078 = vsel %vm868, %v4074, 0.0
        %4079 = vadd.xlane.f32.xlu0 %v4078
        %v4080 = vpop.xlane.xlu0 %4079
        %v4081 = vmul.f32 %v4077, %v1991
        %v4082 = vmul.f32 %v4080, %v1991
        %v4083 = vadd.f32 %v4081, 1e-05
        %v4084 = vadd.f32 %v4082, 1e-05
        %v4085 = vrsqrt.pop %v4083
        %v4086 = vrsqrt.pop %v4084
        %v4087 = vmul.f32 %v4071, %v4085
        %v4088 = vmul.f32 %v4072, %v4086
        %v4090 = vlaneseq
        %v4091 = vshrl.u32 %v4090, 7
        %v4092 = vsub.s32 0, %v4091
        %v4093 = vrot.slane %v4061, %v4092
        %v4095 = vmul.f32 %v4087, %v4093
        %v4096 = vmul.f32 %v4088, %v4093
        %v4098 = vlaneseq
        %v4099 = vshrl.u32 %v4098, 7
        %v4100 = vsub.s32 0, %v4099
        %v4101 = vrot.slane %v4062, %v4100
        %v4103 = vadd.f32 %v4095, %v4101
        %v4104 = vadd.f32 %v4096, %v4101
        %4105 = vst.msk [vmem:[#allocation2] sm:$0xff] %vm868, %v4103
        %4106 = vst.msk [vmem:[#allocation2 + $0x8] sm:$0xff] %vm868, %v4104
        %p4107 = scmp.eq.s32.totalorder %s31, 1
        // Predicated region
        $region101: #{transformer_forward.1} parent=95 // pred_check
          %p4108 = pneg %p4107
        $region102: #{transformer_forward.1} parent=95 // pred_check_branch
          %4110 = sbr.rel (%p4108) target = $region104
        $region103: #{transformer_forward.1} parent=95 // pred_region
          %v4111 = vsel %vm868, %v4103, 0.0
          %v4112 = vrot.slane %v4111, 4
          %v4113 = vadd.f32 %v4111, %v4112
          %v4114 = vrot.slane %v4113, 2
          %v4115 = vadd.f32 %v4113, %v4114
          %v4116 = vrot.slane %v4115, 1
          %v4117 = vadd.f32 %v4115, %v4116
          %v4118 = vsel %vm868, %v4104, 0.0
          %v4119 = vrot.slane %v4118, 4
          %v4120 = vadd.f32 %v4118, %v4119
          %v4121 = vrot.slane %v4120, 2
          %v4122 = vadd.f32 %v4120, %v4121
          %v4123 = vrot.slane %v4122, 1
          %v4124 = vadd.f32 %v4122, %v4123
          %v4125 = vrcp.pop 8.0
          %v4126 = vmul.f32 %v4117, %v4125
          %v4127 = vmul.f32 %v4124, %v4125
          %v4128 = vpack.c.bf16 %v4126, %v4126
          %v4129 = vpack.c.bf16 %v4127, %v4127
          %v4130 = vld [vmem:[%s17] sm:$0xf]
          %v4131 = vld [vmem:[%s17 + $0x4] sm:$0xf]
          %v4132 = vld [vmem:[%s17 + $0x8] sm:$0xf]
          %v4133 = vld [vmem:[%s17 + $0xc] sm:$0xf]
          %v4134 = vld [vmem:[%s18] sm:$0x1]
          %v4136 = vlaneseq
          %v4137 = vshrl.u32 %v4136, 7
          %v4138 = vsub.s32 0, %v4137
          %v4139 = vrot.slane %v4134, %v4138
          %v4143 = vunpack.c.l.b16 %v4128
          %v4144 = vunpack.c.l.b16 %v4129
          %vm4145 = vcmask 1041409
          %v4146 = vsel %vm4145, %v4144, %v4143
          %v4147 = vpack.c.b16 %v4146, %v4146
          %v4152 = vunpack.c.l.b16 %v4130
          %v4153 = vunpack.c.l.b16 %v4131
          %v4154 = vunpack.c.l.b16 %v4132
          %v4155 = vunpack.c.l.b16 %v4133
          %v4156 = vpack.c.b16 %v4153, %v4152
          %v4157 = vpack.c.b16 %v4155, %v4154
          %v4161 = vsel %vm868, %v4147, 0
          %4163 = vmatprep.subr.bf16.mxu0 0
          %4164 = vmatpush1.bf16.msra.mxu0 0
          %4165 = vmatprep.subr.bf16.mxu0 0
          %4166 = vmatpush1.bf16.msra.mxu0 0
          %4167 = vmatprep.subr.bf16.mxu0 0
          %4168 = vmatpush1.bf16.msra.mxu0 0
          %4169 = vmatprep.subr.bf16.mxu0 0
          %4170 = vmatpush1.bf16.msra.mxu0 0
          %4171 = vmatprep.subr.bf16.mxu0 0
          %4172 = vmatpush1.bf16.msra.mxu0 0
          %4173 = vmatprep.subr.bf16.mxu0 0
          %4174 = vmatpush1.bf16.msra.mxu0 0
          %4175 = vmatprep.subr.bf16.mxu0 0
          %4176 = vmatpush1.bf16.msra.mxu0 %v4157
          %4177 = vmatprep.subr.bf16.mxu0 0
          %4178 = vmatpush1.bf16.msra.mxu0 %v4156
          %4179 = vmatprep.subr.bf16.mxu0 0
          %4180 = vmatpush2.bf16.msra.mxu0 0
          %4181 = vmatprep.subr.bf16.mxu0 0
          %4182 = vmatpush2.bf16.msra.mxu0 0
          %4183 = vmatprep.subr.bf16.mxu0 0
          %4184 = vmatpush2.bf16.msra.mxu0 0
          %4185 = vmatprep.subr.bf16.mxu0 0
          %4186 = vmatpush2.bf16.msra.mxu0 0
          %4187 = vmatprep.subr.bf16.mxu0 0
          %4188 = vmatpush2.bf16.msra.mxu0 0
          %4189 = vmatprep.subr.bf16.mxu0 0
          %4190 = vmatpush2.bf16.msra.mxu0 0
          %4191 = vmatprep.subr.bf16.mxu0 0
          %4192 = vmatpush2.bf16.msra.mxu0 0
          %4193 = vmatprep.subr.bf16.mxu0 0
          %4194 = vmatpush2.bf16.msra.mxu0 0
          %4195 = vmatprep.mubr.bf16.mxu0 0
          %4196 = vmatmul.mubr.bf16.gmra.mxu0 %v4161
          %v4197 = vpop.f32.mrf.mxu0
          %v4198 = vadd.f32 %v4139, %v4197
          %v4199 = vpop.f32.mrf.mxu0
          %v4200 = vpop.f32.mrf.mxu0
          %v4201 = vpop.f32.mrf.mxu0
          %4202 = vdwg.mxu0
          %vm4203 = vcmask 58368
          %4204 = vst.msk [vmem:[#allocation3] sm:$0x3] %vm4203, %v4198
        $region104: #{transformer_forward.1} parent=95 // pred_fallthru
          _
        // Predicated region
        $region105: #{transformer_forward.1} parent=95 // pred_check
          %p4205 = pneg %p523
        $region106: #{transformer_forward.1} parent=95 // pred_check_branch
          %4207 = sbr.rel (%p4205) target = $region108
        $region107: #{transformer_forward.1} parent=95 // pred_region
          %s4209 = ssub.s32 32, 32
          %4210 = vsyncadd [#allocation4], %s4209
          %s4212 = sshll.u32 [#allocation3], 4
          %s4213 = int_to_ptr.vmem [resolvable:$true] %s4212
          %4215 = dma.vmem_to_hbm [thread:$0]  %s4213, 32, %s19, [#allocation4]
        $region108: #{transformer_forward.1} parent=95 // pred_fallthru
          _
        // Predicated region
        $region109: #{transformer_forward.1} parent=95 // pred_check
          %p4216 = pneg %p523
        $region110: #{transformer_forward.1} parent=95 // pred_check_branch
          %4218 = sbr.rel (%p4216) target = $region112
        $region111: #{transformer_forward.1} parent=95 // pred_region
          %4219 = dma.done [#allocation4], 32
        $region112: #{transformer_forward.1} parent=95 // pred_fallthru
          _
      $region96: #{transformer_forward.1} parent=5 // pred_fallthru
        _
      %p4220 = scmp.le.s32.totalorder 2, %s26
      // Predicated region
      $region113: #{transformer_forward.1} parent=5 // pred_check
        %p4221 = pneg %p4220
      $region114: #{transformer_forward.1} parent=5 // pred_check_branch
        %4223 = sbr.rel (%p4221) target = $region116
      $region115: #{transformer_forward.1} parent=5 // pred_region
        %s4224 = ssub.s32 %s26, 2
      $region116: #{transformer_forward.1} parent=5 // pred_fallthru
        _
    $region6: #{transformer_forward.1} parent=1 // loop_footer
      %s30 = sadd.s32 1, %s26
    $region7: #{transformer_forward.1} parent=1 // loop_footer_branch
      %25 = sbr.rel target = $region3
    $region8: #{transformer_forward.1} parent=1 // loop_exit
      _
    %4225 = vsyncpa [#allocation4], 1
    %s4226 = scalar_lea.sflag [#allocation4], 1
    %4227 = vsyncpa %s4226, 1

</llo_original>
